<compile_context>
chip_gen: v5e
topology: v5e:2x2
jax: 0.10.0
libtpu: 0.0.40
codegen_flags: <defaults>
</compile_context>

<pallas_src>
import functools

import jax
import jax.numpy as jnp
import numpy as np
from jax import lax
from jax.experimental import pallas as pl
from jax.experimental.pallas import tpu as pltpu


def _get_logits_kernel(x_ref, masks_ref, w3_ref, bnb_ref, w1_ref, b1_ref,
                       o_ref, s_ref, *, width, pad):
    """One grid step = TB (padded) batch elements, all channels.

    x_ref    : (C, TB, H*W)            VMEM  channel-major flattened input
    masks_ref: (2, H*W)                VMEM  col-edge masks (row0: dx=-1 valid, row1: dx=+1 valid)
    w3_ref   : (C*C*9,)                SMEM  3x3 weights (BN scale folded),
                                             index = (co*C + ci)*9 + ky*3 + kx
    bnb_ref  : (C,)                    SMEM  folded BN bias
    w1_ref   : (C,)                    SMEM  1x1 conv weights
    b1_ref   : (1,)                    SMEM  1x1 conv bias
    o_ref    : (TB, H*W)               VMEM  logits (lane-dense)
    s_ref    : (C, TB, H*W + 2*pad)    VMEM  zero halo + data, full sublane occupancy
    """
    C, TB, HW = x_ref.shape
    W = width

    # Zero only the two halo slabs; the interior is fully overwritten by the copy below.
    zeros_halo = jnp.zeros((C, TB, pad), jnp.float32)
    s_ref[:, :, :pad] = zeros_halo
    s_ref[:, :, pad + HW:] = zeros_halo
    # Aligned VMEM copy of the input block into the haloed scratch.
    s_ref[:, :, pad:pad + HW] = x_ref[...]

    # Hoisted sublane-broadcast of the column-edge masks (don't rebuild inside the loop).
    mask_m = jnp.broadcast_to(masks_ref[0:1, :], (TB, HW))   # valid where col - 1 >= 0
    mask_p = jnp.broadcast_to(masks_ref[1:2, :], (TB, HW))   # valid where col + 1 <  W

    # 3x3 conv (BN scale folded) as scalar*vector FMAs on fully packed (TB, HW) vregs.
    # Row out-of-range taps read zeros from the halo; column wrap-around is masked.
    acc = [jnp.zeros((TB, HW), jnp.float32) for _ in range(C)]
    for kx in range(3):
        dx = kx - 1
        grp = acc if dx == 0 else [jnp.zeros((TB, HW), jnp.float32) for _ in range(C)]
        for ky in range(3):
            dy = ky - 1
            start = pad + dy * W + dx                  # static, always in-bounds
            for ci in range(C):
                xs = s_ref[ci, :, start:start + HW]    # (TB, HW) lane-window read
                for co in range(C):
                    w = w3_ref[(co * C + ci) * 9 + ky * 3 + kx]   # SMEM scalar
                    grp[co] = grp[co] + w * xs
        if dx == -1:
            acc = [a + mask_m * g for a, g in zip(acc, grp)]
        elif dx == 1:
            acc = [a + mask_p * g for a, g in zip(acc, grp)]
        # dx == 0 was accumulated directly into acc.

    # Folded BN bias + ReLU, then the 1x1 conv as a VPU weighted sum (+ bias).
    logits = jnp.zeros((TB, HW), jnp.float32) + b1_ref[0]
    for co in range(C):
        y = jnp.maximum(acc[co] + bnb_ref[co], 0.0)
        logits = logits + w1_ref[co] * y
    o_ref[...] = logits.astype(o_ref.dtype)


def get_logits_with_conv3(feat_nchw, w3_oihw, gamma, beta, run_mean, run_var,
                          w1_oihw, b1, eps=1e-5):
    """feat_nchw: (B, C, H, W) float32  ->  logits (B, 1, H, W) float32."""
    B, C, H, W = feat_nchw.shape
    HW = H * W
    PAD = ((W + 1 + 127) // 128) * 128    # lane-aligned halo >= W+1 (aligned interior copy)

    TB = 8                                 # full sublane occupancy per grid step
    BP = ((B + TB - 1) // TB) * TB         # zero-pad batch to a multiple of 8
    grid = (BP // TB,)

    # ---- wrapper-side layout plumbing (outside the kernel) ----
    x_cbl = jnp.transpose(feat_nchw.reshape(B, C, HW), (1, 0, 2))     # (C, B, HW)
    if BP != B:
        x_cbl = jnp.pad(x_cbl, ((0, 0), (0, BP - B), (0, 0)))

    # Fold eval-mode BatchNorm into the 3x3 conv weights / bias.
    inv_std = lax.rsqrt(run_var + eps)
    scale = gamma * inv_std                                           # (C,)
    w3f = (w3_oihw * scale[:, None, None, None]).reshape(-1)          # (C*C*9,)
    bnb = beta - run_mean * scale                                     # (C,)
    w1f = w1_oihw.reshape(-1)                                         # (C,)
    b1f = b1.reshape(-1)                                              # (1,)

    # Column-edge masks (compile-time constants).
    col = np.arange(HW) % W
    masks = jnp.asarray(np.stack([(col >= 1), (col <= W - 2)]).astype(np.float32))  # (2, HW)

    kernel = functools.partial(_get_logits_kernel, width=W, pad=PAD)

    # Explicit scoped-VMEM budget from the actual block sizes (double-buffered in/out
    # blocks + halo scratch), clamped below v7x's 64 MiB physical VMEM.
    blk_bytes = 4 * (C * TB * HW + 2 * HW + TB * HW)
    scratch_bytes = 4 * C * TB * (HW + 2 * PAD)
    vmem_limit = int(min(max(2 * (2 * blk_bytes + scratch_bytes), 16 << 20), 56 << 20))

    out_flat = pl.pallas_call(
        kernel,
        out_shape=jax.ShapeDtypeStruct((BP, HW), jnp.float32),
        grid_spec=pltpu.PrefetchScalarGridSpec(
            num_scalar_prefetch=0,
            grid=grid,
            in_specs=[
                pl.BlockSpec((C, TB, HW), lambda b: (0, b, 0)),
                pl.BlockSpec((2, HW), lambda b: (0, 0)),
                pl.BlockSpec(memory_space=pltpu.MemorySpace.SMEM),   # w3 (BN folded)
                pl.BlockSpec(memory_space=pltpu.MemorySpace.SMEM),   # bn bias
                pl.BlockSpec(memory_space=pltpu.MemorySpace.SMEM),   # w1
                pl.BlockSpec(memory_space=pltpu.MemorySpace.SMEM),   # b1
            ],
            out_specs=pl.BlockSpec((TB, HW), lambda b: (b, 0)),
            scratch_shapes=[pltpu.VMEM((C, TB, HW + 2 * PAD), jnp.float32)],
        ),
        compiler_params=pltpu.CompilerParams(
            dimension_semantics=("parallel",),
            vmem_limit_bytes=vmem_limit),
    )(x_cbl, masks, w3f, bnb, w1f, b1f)

    return out_flat[:B].reshape(B, 1, H, W)


def _reference(feat, w3, gamma, beta, mean, var, w1, b1, eps=1e-5):
    """Pure-JAX reference mirroring the PyTorch module (NCHW)."""
    dn = ("NCHW", "OIHW", "NCHW")
    y = lax.conv_general_dilated(feat, w3, (1, 1), ((1, 1), (1, 1)),
                                 dimension_numbers=dn)
    s = gamma / jnp.sqrt(var + eps)
    y = y * s[None, :, None, None] + (beta - mean * s)[None, :, None, None]
    y = jnp.maximum(y, 0.0)
    y = lax.conv_general_dilated(y, w1, (1, 1), ((0, 0), (0, 0)),
                                 dimension_numbers=dn)
    return y + b1[None, :, None, None]


if __name__ == "__main__":
    B, C, H, W = 2, 4, 16, 16
    key = jax.random.PRNGKey(0)
    k = jax.random.split(key, 8)

    feat = jax.random.normal(k[0], (B, C, H, W), jnp.float32)
    # BasicBlock: Conv2d(C, C, 3, bias=False) + BatchNorm2d(C) + ReLU
    w3 = jax.random.normal(k[1], (C, C, 3, 3), jnp.float32) * 0.1     # OIHW
    gamma = 1.0 + 0.1 * jax.random.normal(k[2], (C,), jnp.float32)
    beta = 0.1 * jax.random.normal(k[3], (C,), jnp.float32)
    run_mean = 0.05 * jax.random.normal(k[4], (C,), jnp.float32)
    run_var = 1.0 + 0.1 * jax.nn.softplus(jax.random.normal(k[5], (C,), jnp.float32))
    # Final Conv2d(C, 1, 1) with bias
    w1 = jax.random.normal(k[6], (1, C, 1, 1), jnp.float32) * 0.2     # OIHW
    b1 = 0.1 * jax.random.normal(k[7], (1,), jnp.float32)

    out = get_logits_with_conv3(feat, w3, gamma, beta, run_mean, run_var, w1, b1)
    out = jax.block_until_ready(out)

    ref = _reference(feat, w3, gamma, beta, run_mean, run_var, w1, b1)
    assert out.shape == (B, 1, H, W)
    assert jnp.max(jnp.abs(out - ref)) < 1e-4, "mismatch vs. reference"

    print("KERNEL_OK")
</pallas_src>

<mosaic_0001>
module attributes {stable_mosaic.version = 11 : i64} {
  func.func @_get_logits_kernel(%arg0: i32, %arg1: memref<4x8x256xf32, #tpu.memory_space<vmem>>, %arg2: memref<2x256xf32, #tpu.memory_space<vmem>>, %arg3: memref<144xf32, #tpu.memory_space<smem>>, %arg4: memref<4xf32, #tpu.memory_space<smem>>, %arg5: memref<4xf32, #tpu.memory_space<smem>>, %arg6: memref<1xf32, #tpu.memory_space<smem>>, %arg7: memref<8x256xf32, #tpu.memory_space<vmem>>, %arg8: memref<4x8x512xf32, #tpu.memory_space<vmem>>) attributes {dimension_semantics = [#tpu.dimension_semantics<parallel>], iteration_bounds = array<i64: 1>, scalar_prefetch = 0 : i64, scratch_operands = 1 : i64, tpu.core_type = #tpu.core_type<tc>, window_params = [{transform_indices = @transform_0, window_bounds = array<i64: 4, 8, 256>}, {pipeline_mode = #tpu.pipeline_mode<synchronous>, transform_indices = @transform_1, window_bounds = array<i64: 2, 256>}, {transform_indices = @transform_2, window_bounds = array<i64: 144>}, {transform_indices = @transform_3, window_bounds = array<i64: 4>}, {transform_indices = @transform_4, window_bounds = array<i64: 4>}, {transform_indices = @transform_5, window_bounds = array<i64: 1>}, {transform_indices = @transform_6, window_bounds = array<i64: 8, 256>}]} {
    %cst = arith.constant 0.000000e+00 : f32
    %0 = vector.broadcast %cst : f32 to vector<4x8x128xf32>
    %c0 = arith.constant 0 : index
    %c0_0 = arith.constant 0 : index
    %c0_1 = arith.constant 0 : index
    %1 = vector.load %arg8[%c0, %c0_0, %c0_1] : memref<4x8x512xf32, #tpu.memory_space<vmem>>, vector<4x8x128xf32>
    tpu.vector_store %arg8[%c0, %c0_0, %c0_1], %0 {strides = array<i32>} : memref<4x8x512xf32, #tpu.memory_space<vmem>>, vector<4x8x128xf32>,
    %c0_2 = arith.constant 0 : index
    %c0_3 = arith.constant 0 : index
    %c384 = arith.constant 384 : index
    %2 = vector.load %arg8[%c0_2, %c0_3, %c384] : memref<4x8x512xf32, #tpu.memory_space<vmem>>, vector<4x8x128xf32>
    tpu.vector_store %arg8[%c0_2, %c0_3, %c384], %0 {strides = array<i32>} : memref<4x8x512xf32, #tpu.memory_space<vmem>>, vector<4x8x128xf32>,
    %c0_4 = arith.constant 0 : index
    %c0_5 = arith.constant 0 : index
    %c0_6 = arith.constant 0 : index
    %3 = vector.load %arg1[%c0_4, %c0_5, %c0_6] : memref<4x8x256xf32, #tpu.memory_space<vmem>>, vector<4x8x256xf32>
    %c0_7 = arith.constant 0 : index
    %c0_8 = arith.constant 0 : index
    %c128 = arith.constant 128 : index
    %4 = vector.load %arg8[%c0_7, %c0_8, %c128] : memref<4x8x512xf32, #tpu.memory_space<vmem>>, vector<4x8x256xf32>
    tpu.vector_store %arg8[%c0_7, %c0_8, %c128], %3 {strides = array<i32>} : memref<4x8x512xf32, #tpu.memory_space<vmem>>, vector<4x8x256xf32>,
    %c0_9 = arith.constant 0 : index
    %c0_10 = arith.constant 0 : index
    %5 = vector.load %arg2[%c0_9, %c0_10] : memref<2x256xf32, #tpu.memory_space<vmem>>, vector<1x256xf32>
    %6 = vector.shape_cast %5 : vector<1x256xf32> to vector<1x256xf32>
    %7 = vector.broadcast %6 : vector<1x256xf32> to vector<8x256xf32>
    %c1 = arith.constant 1 : index
    %c0_11 = arith.constant 0 : index
    %8 = vector.load %arg2[%c1, %c0_11] : memref<2x256xf32, #tpu.memory_space<vmem>>, vector<1x256xf32>
    %9 = vector.shape_cast %8 : vector<1x256xf32> to vector<1x256xf32>
    %10 = vector.broadcast %9 : vector<1x256xf32> to vector<8x256xf32>
    %cst_12 = arith.constant 0.000000e+00 : f32
    %11 = vector.broadcast %cst_12 : f32 to vector<8x256xf32>
    %cst_13 = arith.constant 0.000000e+00 : f32
    %12 = vector.broadcast %cst_13 : f32 to vector<8x256xf32>
    %cst_14 = arith.constant 0.000000e+00 : f32
    %13 = vector.broadcast %cst_14 : f32 to vector<8x256xf32>
    %cst_15 = arith.constant 0.000000e+00 : f32
    %14 = vector.broadcast %cst_15 : f32 to vector<8x256xf32>
    %cst_16 = arith.constant 0.000000e+00 : f32
    %15 = vector.broadcast %cst_16 : f32 to vector<8x256xf32>
    %cst_17 = arith.constant 0.000000e+00 : f32
    %16 = vector.broadcast %cst_17 : f32 to vector<8x256xf32>
    %cst_18 = arith.constant 0.000000e+00 : f32
    %17 = vector.broadcast %cst_18 : f32 to vector<8x256xf32>
    %cst_19 = arith.constant 0.000000e+00 : f32
    %18 = vector.broadcast %cst_19 : f32 to vector<8x256xf32>
    %c0_20 = arith.constant 0 : index
    %c0_21 = arith.constant 0 : index
    %c111 = arith.constant 111 : index
    %19 = vector.load %arg8[%c0_20, %c0_21, %c111] : memref<4x8x512xf32, #tpu.memory_space<vmem>>, vector<1x8x256xf32>
    %20 = vector.shape_cast %19 : vector<1x8x256xf32> to vector<8x256xf32>
    %c0_22 = arith.constant 0 : index
    %21 = memref.load %arg3[%c0_22] : memref<144xf32, #tpu.memory_space<smem>>
    %22 = vector.broadcast %21 : f32 to vector<8x256xf32>
    %23 = arith.mulf %22, %20 : vector<8x256xf32>
    %24 = arith.addf %15, %23 : vector<8x256xf32>
    %c36 = arith.constant 36 : index
    %25 = memref.load %arg3[%c36] : memref<144xf32, #tpu.memory_space<smem>>
    %26 = vector.broadcast %25 : f32 to vector<8x256xf32>
    %27 = arith.mulf %26, %20 : vector<8x256xf32>
    %28 = arith.addf %16, %27 : vector<8x256xf32>
    %c72 = arith.constant 72 : index
    %29 = memref.load %arg3[%c72] : memref<144xf32, #tpu.memory_space<smem>>
    %30 = vector.broadcast %29 : f32 to vector<8x256xf32>
    %31 = arith.mulf %30, %20 : vector<8x256xf32>
    %32 = arith.addf %17, %31 : vector<8x256xf32>
    %c108 = arith.constant 108 : index
    %33 = memref.load %arg3[%c108] : memref<144xf32, #tpu.memory_space<smem>>
    %34 = vector.broadcast %33 : f32 to vector<8x256xf32>
    %35 = arith.mulf %34, %20 : vector<8x256xf32>
    %36 = arith.addf %18, %35 : vector<8x256xf32>
    %c1_23 = arith.constant 1 : index
    %c0_24 = arith.constant 0 : index
    %c111_25 = arith.constant 111 : index
    %37 = vector.load %arg8[%c1_23, %c0_24, %c111_25] : memref<4x8x512xf32, #tpu.memory_space<vmem>>, vector<1x8x256xf32>
    %38 = vector.shape_cast %37 : vector<1x8x256xf32> to vector<8x256xf32>
    %c9 = arith.constant 9 : index
    %39 = memref.load %arg3[%c9] : memref<144xf32, #tpu.memory_space<smem>>
    %40 = vector.broadcast %39 : f32 to vector<8x256xf32>
    %41 = arith.mulf %40, %38 : vector<8x256xf32>
    %42 = arith.addf %24, %41 : vector<8x256xf32>
    %c45 = arith.constant 45 : index
    %43 = memref.load %arg3[%c45] : memref<144xf32, #tpu.memory_space<smem>>
    %44 = vector.broadcast %43 : f32 to vector<8x256xf32>
    %45 = arith.mulf %44, %38 : vector<8x256xf32>
    %46 = arith.addf %28, %45 : vector<8x256xf32>
    %c81 = arith.constant 81 : index
    %47 = memref.load %arg3[%c81] : memref<144xf32, #tpu.memory_space<smem>>
    %48 = vector.broadcast %47 : f32 to vector<8x256xf32>
    %49 = arith.mulf %48, %38 : vector<8x256xf32>
    %50 = arith.addf %32, %49 : vector<8x256xf32>
    %c117 = arith.constant 117 : index
    %51 = memref.load %arg3[%c117] : memref<144xf32, #tpu.memory_space<smem>>
    %52 = vector.broadcast %51 : f32 to vector<8x256xf32>
    %53 = arith.mulf %52, %38 : vector<8x256xf32>
    %54 = arith.addf %36, %53 : vector<8x256xf32>
    %c2 = arith.constant 2 : index
    %c0_26 = arith.constant 0 : index
    %c111_27 = arith.constant 111 : index
    %55 = vector.load %arg8[%c2, %c0_26, %c111_27] : memref<4x8x512xf32, #tpu.memory_space<vmem>>, vector<1x8x256xf32>
    %56 = vector.shape_cast %55 : vector<1x8x256xf32> to vector<8x256xf32>
    %c18 = arith.constant 18 : index
    %57 = memref.load %arg3[%c18] : memref<144xf32, #tpu.memory_space<smem>>
    %58 = vector.broadcast %57 : f32 to vector<8x256xf32>
    %59 = arith.mulf %58, %56 : vector<8x256xf32>
    %60 = arith.addf %42, %59 : vector<8x256xf32>
    %c54 = arith.constant 54 : index
    %61 = memref.load %arg3[%c54] : memref<144xf32, #tpu.memory_space<smem>>
    %62 = vector.broadcast %61 : f32 to vector<8x256xf32>
    %63 = arith.mulf %62, %56 : vector<8x256xf32>
    %64 = arith.addf %46, %63 : vector<8x256xf32>
    %c90 = arith.constant 90 : index
    %65 = memref.load %arg3[%c90] : memref<144xf32, #tpu.memory_space<smem>>
    %66 = vector.broadcast %65 : f32 to vector<8x256xf32>
    %67 = arith.mulf %66, %56 : vector<8x256xf32>
    %68 = arith.addf %50, %67 : vector<8x256xf32>
    %c126 = arith.constant 126 : index
    %69 = memref.load %arg3[%c126] : memref<144xf32, #tpu.memory_space<smem>>
    %70 = vector.broadcast %69 : f32 to vector<8x256xf32>
    %71 = arith.mulf %70, %56 : vector<8x256xf32>
    %72 = arith.addf %54, %71 : vector<8x256xf32>
    %c3 = arith.constant 3 : index
    %c0_28 = arith.constant 0 : index
    %c111_29 = arith.constant 111 : index
    %73 = vector.load %arg8[%c3, %c0_28, %c111_29] : memref<4x8x512xf32, #tpu.memory_space<vmem>>, vector<1x8x256xf32>
    %74 = vector.shape_cast %73 : vector<1x8x256xf32> to vector<8x256xf32>
    %c27 = arith.constant 27 : index
    %75 = memref.load %arg3[%c27] : memref<144xf32, #tpu.memory_space<smem>>
    %76 = vector.broadcast %75 : f32 to vector<8x256xf32>
    %77 = arith.mulf %76, %74 : vector<8x256xf32>
    %78 = arith.addf %60, %77 : vector<8x256xf32>
    %c63 = arith.constant 63 : index
    %79 = memref.load %arg3[%c63] : memref<144xf32, #tpu.memory_space<smem>>
    %80 = vector.broadcast %79 : f32 to vector<8x256xf32>
    %81 = arith.mulf %80, %74 : vector<8x256xf32>
    %82 = arith.addf %64, %81 : vector<8x256xf32>
    %c99 = arith.constant 99 : index
    %83 = memref.load %arg3[%c99] : memref<144xf32, #tpu.memory_space<smem>>
    %84 = vector.broadcast %83 : f32 to vector<8x256xf32>
    %85 = arith.mulf %84, %74 : vector<8x256xf32>
    %86 = arith.addf %68, %85 : vector<8x256xf32>
    %c135 = arith.constant 135 : index
    %87 = memref.load %arg3[%c135] : memref<144xf32, #tpu.memory_space<smem>>
    %88 = vector.broadcast %87 : f32 to vector<8x256xf32>
    %89 = arith.mulf %88, %74 : vector<8x256xf32>
    %90 = arith.addf %72, %89 : vector<8x256xf32>
    %c0_30 = arith.constant 0 : index
    %c0_31 = arith.constant 0 : index
    %c127 = arith.constant 127 : index
    %91 = vector.load %arg8[%c0_30, %c0_31, %c127] : memref<4x8x512xf32, #tpu.memory_space<vmem>>, vector<1x8x256xf32>
    %92 = vector.shape_cast %91 : vector<1x8x256xf32> to vector<8x256xf32>
    %c3_32 = arith.constant 3 : index
    %93 = memref.load %arg3[%c3_32] : memref<144xf32, #tpu.memory_space<smem>>
    %94 = vector.broadcast %93 : f32 to vector<8x256xf32>
    %95 = arith.mulf %94, %92 : vector<8x256xf32>
    %96 = arith.addf %78, %95 : vector<8x256xf32>
    %c39 = arith.constant 39 : index
    %97 = memref.load %arg3[%c39] : memref<144xf32, #tpu.memory_space<smem>>
    %98 = vector.broadcast %97 : f32 to vector<8x256xf32>
    %99 = arith.mulf %98, %92 : vector<8x256xf32>
    %100 = arith.addf %82, %99 : vector<8x256xf32>
    %c75 = arith.constant 75 : index
    %101 = memref.load %arg3[%c75] : memref<144xf32, #tpu.memory_space<smem>>
    %102 = vector.broadcast %101 : f32 to vector<8x256xf32>
    %103 = arith.mulf %102, %92 : vector<8x256xf32>
    %104 = arith.addf %86, %103 : vector<8x256xf32>
    %c111_33 = arith.constant 111 : index
    %105 = memref.load %arg3[%c111_33] : memref<144xf32, #tpu.memory_space<smem>>
    %106 = vector.broadcast %105 : f32 to vector<8x256xf32>
    %107 = arith.mulf %106, %92 : vector<8x256xf32>
    %108 = arith.addf %90, %107 : vector<8x256xf32>
    %c1_34 = arith.constant 1 : index
    %c0_35 = arith.constant 0 : index
    %c127_36 = arith.constant 127 : index
    %109 = vector.load %arg8[%c1_34, %c0_35, %c127_36] : memref<4x8x512xf32, #tpu.memory_space<vmem>>, vector<1x8x256xf32>
    %110 = vector.shape_cast %109 : vector<1x8x256xf32> to vector<8x256xf32>
    %c12 = arith.constant 12 : index
    %111 = memref.load %arg3[%c12] : memref<144xf32, #tpu.memory_space<smem>>
    %112 = vector.broadcast %111 : f32 to vector<8x256xf32>
    %113 = arith.mulf %112, %110 : vector<8x256xf32>
    %114 = arith.addf %96, %113 : vector<8x256xf32>
    %c48 = arith.constant 48 : index
    %115 = memref.load %arg3[%c48] : memref<144xf32, #tpu.memory_space<smem>>
    %116 = vector.broadcast %115 : f32 to vector<8x256xf32>
    %117 = arith.mulf %116, %110 : vector<8x256xf32>
    %118 = arith.addf %100, %117 : vector<8x256xf32>
    %c84 = arith.constant 84 : index
    %119 = memref.load %arg3[%c84] : memref<144xf32, #tpu.memory_space<smem>>
    %120 = vector.broadcast %119 : f32 to vector<8x256xf32>
    %121 = arith.mulf %120, %110 : vector<8x256xf32>
    %122 = arith.addf %104, %121 : vector<8x256xf32>
    %c120 = arith.constant 120 : index
    %123 = memref.load %arg3[%c120] : memref<144xf32, #tpu.memory_space<smem>>
    %124 = vector.broadcast %123 : f32 to vector<8x256xf32>
    %125 = arith.mulf %124, %110 : vector<8x256xf32>
    %126 = arith.addf %108, %125 : vector<8x256xf32>
    %c2_37 = arith.constant 2 : index
    %c0_38 = arith.constant 0 : index
    %c127_39 = arith.constant 127 : index
    %127 = vector.load %arg8[%c2_37, %c0_38, %c127_39] : memref<4x8x512xf32, #tpu.memory_space<vmem>>, vector<1x8x256xf32>
    %128 = vector.shape_cast %127 : vector<1x8x256xf32> to vector<8x256xf32>
    %c21 = arith.constant 21 : index
    %129 = memref.load %arg3[%c21] : memref<144xf32, #tpu.memory_space<smem>>
    %130 = vector.broadcast %129 : f32 to vector<8x256xf32>
    %131 = arith.mulf %130, %128 : vector<8x256xf32>
    %132 = arith.addf %114, %131 : vector<8x256xf32>
    %c57 = arith.constant 57 : index
    %133 = memref.load %arg3[%c57] : memref<144xf32, #tpu.memory_space<smem>>
    %134 = vector.broadcast %133 : f32 to vector<8x256xf32>
    %135 = arith.mulf %134, %128 : vector<8x256xf32>
    %136 = arith.addf %118, %135 : vector<8x256xf32>
    %c93 = arith.constant 93 : index
    %137 = memref.load %arg3[%c93] : memref<144xf32, #tpu.memory_space<smem>>
    %138 = vector.broadcast %137 : f32 to vector<8x256xf32>
    %139 = arith.mulf %138, %128 : vector<8x256xf32>
    %140 = arith.addf %122, %139 : vector<8x256xf32>
    %c129 = arith.constant 129 : index
    %141 = memref.load %arg3[%c129] : memref<144xf32, #tpu.memory_space<smem>>
    %142 = vector.broadcast %141 : f32 to vector<8x256xf32>
    %143 = arith.mulf %142, %128 : vector<8x256xf32>
    %144 = arith.addf %126, %143 : vector<8x256xf32>
    %c3_40 = arith.constant 3 : index
    %c0_41 = arith.constant 0 : index
    %c127_42 = arith.constant 127 : index
    %145 = vector.load %arg8[%c3_40, %c0_41, %c127_42] : memref<4x8x512xf32, #tpu.memory_space<vmem>>, vector<1x8x256xf32>
    %146 = vector.shape_cast %145 : vector<1x8x256xf32> to vector<8x256xf32>
    %c30 = arith.constant 30 : index
    %147 = memref.load %arg3[%c30] : memref<144xf32, #tpu.memory_space<smem>>
    %148 = vector.broadcast %147 : f32 to vector<8x256xf32>
    %149 = arith.mulf %148, %146 : vector<8x256xf32>
    %150 = arith.addf %132, %149 : vector<8x256xf32>
    %c66 = arith.constant 66 : index
    %151 = memref.load %arg3[%c66] : memref<144xf32, #tpu.memory_space<smem>>
    %152 = vector.broadcast %151 : f32 to vector<8x256xf32>
    %153 = arith.mulf %152, %146 : vector<8x256xf32>
    %154 = arith.addf %136, %153 : vector<8x256xf32>
    %c102 = arith.constant 102 : index
    %155 = memref.load %arg3[%c102] : memref<144xf32, #tpu.memory_space<smem>>
    %156 = vector.broadcast %155 : f32 to vector<8x256xf32>
    %157 = arith.mulf %156, %146 : vector<8x256xf32>
    %158 = arith.addf %140, %157 : vector<8x256xf32>
    %c138 = arith.constant 138 : index
    %159 = memref.load %arg3[%c138] : memref<144xf32, #tpu.memory_space<smem>>
    %160 = vector.broadcast %159 : f32 to vector<8x256xf32>
    %161 = arith.mulf %160, %146 : vector<8x256xf32>
    %162 = arith.addf %144, %161 : vector<8x256xf32>
    %c0_43 = arith.constant 0 : index
    %c0_44 = arith.constant 0 : index
    %c143 = arith.constant 143 : index
    %163 = vector.load %arg8[%c0_43, %c0_44, %c143] : memref<4x8x512xf32, #tpu.memory_space<vmem>>, vector<1x8x256xf32>
    %164 = vector.shape_cast %163 : vector<1x8x256xf32> to vector<8x256xf32>
    %c6 = arith.constant 6 : index
    %165 = memref.load %arg3[%c6] : memref<144xf32, #tpu.memory_space<smem>>
    %166 = vector.broadcast %165 : f32 to vector<8x256xf32>
    %167 = arith.mulf %166, %164 : vector<8x256xf32>
    %168 = arith.addf %150, %167 : vector<8x256xf32>
    %c42 = arith.constant 42 : index
    %169 = memref.load %arg3[%c42] : memref<144xf32, #tpu.memory_space<smem>>
    %170 = vector.broadcast %169 : f32 to vector<8x256xf32>
    %171 = arith.mulf %170, %164 : vector<8x256xf32>
    %172 = arith.addf %154, %171 : vector<8x256xf32>
    %c78 = arith.constant 78 : index
    %173 = memref.load %arg3[%c78] : memref<144xf32, #tpu.memory_space<smem>>
    %174 = vector.broadcast %173 : f32 to vector<8x256xf32>
    %175 = arith.mulf %174, %164 : vector<8x256xf32>
    %176 = arith.addf %158, %175 : vector<8x256xf32>
    %c114 = arith.constant 114 : index
    %177 = memref.load %arg3[%c114] : memref<144xf32, #tpu.memory_space<smem>>
    %178 = vector.broadcast %177 : f32 to vector<8x256xf32>
    %179 = arith.mulf %178, %164 : vector<8x256xf32>
    %180 = arith.addf %162, %179 : vector<8x256xf32>
    %c1_45 = arith.constant 1 : index
    %c0_46 = arith.constant 0 : index
    %c143_47 = arith.constant 143 : index
    %181 = vector.load %arg8[%c1_45, %c0_46, %c143_47] : memref<4x8x512xf32, #tpu.memory_space<vmem>>, vector<1x8x256xf32>
    %182 = vector.shape_cast %181 : vector<1x8x256xf32> to vector<8x256xf32>
    %c15 = arith.constant 15 : index
    %183 = memref.load %arg3[%c15] : memref<144xf32, #tpu.memory_space<smem>>
    %184 = vector.broadcast %183 : f32 to vector<8x256xf32>
    %185 = arith.mulf %184, %182 : vector<8x256xf32>
    %186 = arith.addf %168, %185 : vector<8x256xf32>
    %c51 = arith.constant 51 : index
    %187 = memref.load %arg3[%c51] : memref<144xf32, #tpu.memory_space<smem>>
    %188 = vector.broadcast %187 : f32 to vector<8x256xf32>
    %189 = arith.mulf %188, %182 : vector<8x256xf32>
    %190 = arith.addf %172, %189 : vector<8x256xf32>
    %c87 = arith.constant 87 : index
    %191 = memref.load %arg3[%c87] : memref<144xf32, #tpu.memory_space<smem>>
    %192 = vector.broadcast %191 : f32 to vector<8x256xf32>
    %193 = arith.mulf %192, %182 : vector<8x256xf32>
    %194 = arith.addf %176, %193 : vector<8x256xf32>
    %c123 = arith.constant 123 : index
    %195 = memref.load %arg3[%c123] : memref<144xf32, #tpu.memory_space<smem>>
    %196 = vector.broadcast %195 : f32 to vector<8x256xf32>
    %197 = arith.mulf %196, %182 : vector<8x256xf32>
    %198 = arith.addf %180, %197 : vector<8x256xf32>
    %c2_48 = arith.constant 2 : index
    %c0_49 = arith.constant 0 : index
    %c143_50 = arith.constant 143 : index
    %199 = vector.load %arg8[%c2_48, %c0_49, %c143_50] : memref<4x8x512xf32, #tpu.memory_space<vmem>>, vector<1x8x256xf32>
    %200 = vector.shape_cast %199 : vector<1x8x256xf32> to vector<8x256xf32>
    %c24 = arith.constant 24 : index
    %201 = memref.load %arg3[%c24] : memref<144xf32, #tpu.memory_space<smem>>
    %202 = vector.broadcast %201 : f32 to vector<8x256xf32>
    %203 = arith.mulf %202, %200 : vector<8x256xf32>
    %204 = arith.addf %186, %203 : vector<8x256xf32>
    %c60 = arith.constant 60 : index
    %205 = memref.load %arg3[%c60] : memref<144xf32, #tpu.memory_space<smem>>
    %206 = vector.broadcast %205 : f32 to vector<8x256xf32>
    %207 = arith.mulf %206, %200 : vector<8x256xf32>
    %208 = arith.addf %190, %207 : vector<8x256xf32>
    %c96 = arith.constant 96 : index
    %209 = memref.load %arg3[%c96] : memref<144xf32, #tpu.memory_space<smem>>
    %210 = vector.broadcast %209 : f32 to vector<8x256xf32>
    %211 = arith.mulf %210, %200 : vector<8x256xf32>
    %212 = arith.addf %194, %211 : vector<8x256xf32>
    %c132 = arith.constant 132 : index
    %213 = memref.load %arg3[%c132] : memref<144xf32, #tpu.memory_space<smem>>
    %214 = vector.broadcast %213 : f32 to vector<8x256xf32>
    %215 = arith.mulf %214, %200 : vector<8x256xf32>
    %216 = arith.addf %198, %215 : vector<8x256xf32>
    %c3_51 = arith.constant 3 : index
    %c0_52 = arith.constant 0 : index
    %c143_53 = arith.constant 143 : index
    %217 = vector.load %arg8[%c3_51, %c0_52, %c143_53] : memref<4x8x512xf32, #tpu.memory_space<vmem>>, vector<1x8x256xf32>
    %218 = vector.shape_cast %217 : vector<1x8x256xf32> to vector<8x256xf32>
    %c33 = arith.constant 33 : index
    %219 = memref.load %arg3[%c33] : memref<144xf32, #tpu.memory_space<smem>>
    %220 = vector.broadcast %219 : f32 to vector<8x256xf32>
    %221 = arith.mulf %220, %218 : vector<8x256xf32>
    %222 = arith.addf %204, %221 : vector<8x256xf32>
    %c69 = arith.constant 69 : index
    %223 = memref.load %arg3[%c69] : memref<144xf32, #tpu.memory_space<smem>>
    %224 = vector.broadcast %223 : f32 to vector<8x256xf32>
    %225 = arith.mulf %224, %218 : vector<8x256xf32>
    %226 = arith.addf %208, %225 : vector<8x256xf32>
    %c105 = arith.constant 105 : index
    %227 = memref.load %arg3[%c105] : memref<144xf32, #tpu.memory_space<smem>>
    %228 = vector.broadcast %227 : f32 to vector<8x256xf32>
    %229 = arith.mulf %228, %218 : vector<8x256xf32>
    %230 = arith.addf %212, %229 : vector<8x256xf32>
    %c141 = arith.constant 141 : index
    %231 = memref.load %arg3[%c141] : memref<144xf32, #tpu.memory_space<smem>>
    %232 = vector.broadcast %231 : f32 to vector<8x256xf32>
    %233 = arith.mulf %232, %218 : vector<8x256xf32>
    %234 = arith.addf %216, %233 : vector<8x256xf32>
    %235 = arith.mulf %7, %222 : vector<8x256xf32>
    %236 = arith.addf %11, %235 : vector<8x256xf32>
    %237 = arith.mulf %7, %226 : vector<8x256xf32>
    %238 = arith.addf %12, %237 : vector<8x256xf32>
    %239 = arith.mulf %7, %230 : vector<8x256xf32>
    %240 = arith.addf %13, %239 : vector<8x256xf32>
    %241 = arith.mulf %7, %234 : vector<8x256xf32>
    %242 = arith.addf %14, %241 : vector<8x256xf32>
    %c0_54 = arith.constant 0 : index
    %c0_55 = arith.constant 0 : index
    %c112 = arith.constant 112 : index
    %243 = vector.load %arg8[%c0_54, %c0_55, %c112] : memref<4x8x512xf32, #tpu.memory_space<vmem>>, vector<1x8x256xf32>
    %244 = vector.shape_cast %243 : vector<1x8x256xf32> to vector<8x256xf32>
    %c1_56 = arith.constant 1 : index
    %245 = memref.load %arg3[%c1_56] : memref<144xf32, #tpu.memory_space<smem>>
    %246 = vector.broadcast %245 : f32 to vector<8x256xf32>
    %247 = arith.mulf %246, %244 : vector<8x256xf32>
    %248 = arith.addf %236, %247 : vector<8x256xf32>
    %c37 = arith.constant 37 : index
    %249 = memref.load %arg3[%c37] : memref<144xf32, #tpu.memory_space<smem>>
    %250 = vector.broadcast %249 : f32 to vector<8x256xf32>
    %251 = arith.mulf %250, %244 : vector<8x256xf32>
    %252 = arith.addf %238, %251 : vector<8x256xf32>
    %c73 = arith.constant 73 : index
    %253 = memref.load %arg3[%c73] : memref<144xf32, #tpu.memory_space<smem>>
    %254 = vector.broadcast %253 : f32 to vector<8x256xf32>
    %255 = arith.mulf %254, %244 : vector<8x256xf32>
    %256 = arith.addf %240, %255 : vector<8x256xf32>
    %c109 = arith.constant 109 : index
    %257 = memref.load %arg3[%c109] : memref<144xf32, #tpu.memory_space<smem>>
    %258 = vector.broadcast %257 : f32 to vector<8x256xf32>
    %259 = arith.mulf %258, %244 : vector<8x256xf32>
    %260 = arith.addf %242, %259 : vector<8x256xf32>
    %c1_57 = arith.constant 1 : index
    %c0_58 = arith.constant 0 : index
    %c112_59 = arith.constant 112 : index
    %261 = vector.load %arg8[%c1_57, %c0_58, %c112_59] : memref<4x8x512xf32, #tpu.memory_space<vmem>>, vector<1x8x256xf32>
    %262 = vector.shape_cast %261 : vector<1x8x256xf32> to vector<8x256xf32>
    %c10 = arith.constant 10 : index
    %263 = memref.load %arg3[%c10] : memref<144xf32, #tpu.memory_space<smem>>
    %264 = vector.broadcast %263 : f32 to vector<8x256xf32>
    %265 = arith.mulf %264, %262 : vector<8x256xf32>
    %266 = arith.addf %248, %265 : vector<8x256xf32>
    %c46 = arith.constant 46 : index
    %267 = memref.load %arg3[%c46] : memref<144xf32, #tpu.memory_space<smem>>
    %268 = vector.broadcast %267 : f32 to vector<8x256xf32>
    %269 = arith.mulf %268, %262 : vector<8x256xf32>
    %270 = arith.addf %252, %269 : vector<8x256xf32>
    %c82 = arith.constant 82 : index
    %271 = memref.load %arg3[%c82] : memref<144xf32, #tpu.memory_space<smem>>
    %272 = vector.broadcast %271 : f32 to vector<8x256xf32>
    %273 = arith.mulf %272, %262 : vector<8x256xf32>
    %274 = arith.addf %256, %273 : vector<8x256xf32>
    %c118 = arith.constant 118 : index
    %275 = memref.load %arg3[%c118] : memref<144xf32, #tpu.memory_space<smem>>
    %276 = vector.broadcast %275 : f32 to vector<8x256xf32>
    %277 = arith.mulf %276, %262 : vector<8x256xf32>
    %278 = arith.addf %260, %277 : vector<8x256xf32>
    %c2_60 = arith.constant 2 : index
    %c0_61 = arith.constant 0 : index
    %c112_62 = arith.constant 112 : index
    %279 = vector.load %arg8[%c2_60, %c0_61, %c112_62] : memref<4x8x512xf32, #tpu.memory_space<vmem>>, vector<1x8x256xf32>
    %280 = vector.shape_cast %279 : vector<1x8x256xf32> to vector<8x256xf32>
    %c19 = arith.constant 19 : index
    %281 = memref.load %arg3[%c19] : memref<144xf32, #tpu.memory_space<smem>>
    %282 = vector.broadcast %281 : f32 to vector<8x256xf32>
    %283 = arith.mulf %282, %280 : vector<8x256xf32>
    %284 = arith.addf %266, %283 : vector<8x256xf32>
    %c55 = arith.constant 55 : index
    %285 = memref.load %arg3[%c55] : memref<144xf32, #tpu.memory_space<smem>>
    %286 = vector.broadcast %285 : f32 to vector<8x256xf32>
    %287 = arith.mulf %286, %280 : vector<8x256xf32>
    %288 = arith.addf %270, %287 : vector<8x256xf32>
    %c91 = arith.constant 91 : index
    %289 = memref.load %arg3[%c91] : memref<144xf32, #tpu.memory_space<smem>>
    %290 = vector.broadcast %289 : f32 to vector<8x256xf32>
    %291 = arith.mulf %290, %280 : vector<8x256xf32>
    %292 = arith.addf %274, %291 : vector<8x256xf32>
    %c127_63 = arith.constant 127 : index
    %293 = memref.load %arg3[%c127_63] : memref<144xf32, #tpu.memory_space<smem>>
    %294 = vector.broadcast %293 : f32 to vector<8x256xf32>
    %295 = arith.mulf %294, %280 : vector<8x256xf32>
    %296 = arith.addf %278, %295 : vector<8x256xf32>
    %c3_64 = arith.constant 3 : index
    %c0_65 = arith.constant 0 : index
    %c112_66 = arith.constant 112 : index
    %297 = vector.load %arg8[%c3_64, %c0_65, %c112_66] : memref<4x8x512xf32, #tpu.memory_space<vmem>>, vector<1x8x256xf32>
    %298 = vector.shape_cast %297 : vector<1x8x256xf32> to vector<8x256xf32>
    %c28 = arith.constant 28 : index
    %299 = memref.load %arg3[%c28] : memref<144xf32, #tpu.memory_space<smem>>
    %300 = vector.broadcast %299 : f32 to vector<8x256xf32>
    %301 = arith.mulf %300, %298 : vector<8x256xf32>
    %302 = arith.addf %284, %301 : vector<8x256xf32>
    %c64 = arith.constant 64 : index
    %303 = memref.load %arg3[%c64] : memref<144xf32, #tpu.memory_space<smem>>
    %304 = vector.broadcast %303 : f32 to vector<8x256xf32>
    %305 = arith.mulf %304, %298 : vector<8x256xf32>
    %306 = arith.addf %288, %305 : vector<8x256xf32>
    %c100 = arith.constant 100 : index
    %307 = memref.load %arg3[%c100] : memref<144xf32, #tpu.memory_space<smem>>
    %308 = vector.broadcast %307 : f32 to vector<8x256xf32>
    %309 = arith.mulf %308, %298 : vector<8x256xf32>
    %310 = arith.addf %292, %309 : vector<8x256xf32>
    %c136 = arith.constant 136 : index
    %311 = memref.load %arg3[%c136] : memref<144xf32, #tpu.memory_space<smem>>
    %312 = vector.broadcast %311 : f32 to vector<8x256xf32>
    %313 = arith.mulf %312, %298 : vector<8x256xf32>
    %314 = arith.addf %296, %313 : vector<8x256xf32>
    %c0_67 = arith.constant 0 : index
    %c0_68 = arith.constant 0 : index
    %c128_69 = arith.constant 128 : index
    %315 = vector.load %arg8[%c0_67, %c0_68, %c128_69] : memref<4x8x512xf32, #tpu.memory_space<vmem>>, vector<1x8x256xf32>
    %316 = vector.shape_cast %315 : vector<1x8x256xf32> to vector<8x256xf32>
    %c4 = arith.constant 4 : index
    %317 = memref.load %arg3[%c4] : memref<144xf32, #tpu.memory_space<smem>>
    %318 = vector.broadcast %317 : f32 to vector<8x256xf32>
    %319 = arith.mulf %318, %316 : vector<8x256xf32>
    %320 = arith.addf %302, %319 : vector<8x256xf32>
    %c40 = arith.constant 40 : index
    %321 = memref.load %arg3[%c40] : memref<144xf32, #tpu.memory_space<smem>>
    %322 = vector.broadcast %321 : f32 to vector<8x256xf32>
    %323 = arith.mulf %322, %316 : vector<8x256xf32>
    %324 = arith.addf %306, %323 : vector<8x256xf32>
    %c76 = arith.constant 76 : index
    %325 = memref.load %arg3[%c76] : memref<144xf32, #tpu.memory_space<smem>>
    %326 = vector.broadcast %325 : f32 to vector<8x256xf32>
    %327 = arith.mulf %326, %316 : vector<8x256xf32>
    %328 = arith.addf %310, %327 : vector<8x256xf32>
    %c112_70 = arith.constant 112 : index
    %329 = memref.load %arg3[%c112_70] : memref<144xf32, #tpu.memory_space<smem>>
    %330 = vector.broadcast %329 : f32 to vector<8x256xf32>
    %331 = arith.mulf %330, %316 : vector<8x256xf32>
    %332 = arith.addf %314, %331 : vector<8x256xf32>
    %c1_71 = arith.constant 1 : index
    %c0_72 = arith.constant 0 : index
    %c128_73 = arith.constant 128 : index
    %333 = vector.load %arg8[%c1_71, %c0_72, %c128_73] : memref<4x8x512xf32, #tpu.memory_space<vmem>>, vector<1x8x256xf32>
    %334 = vector.shape_cast %333 : vector<1x8x256xf32> to vector<8x256xf32>
    %c13 = arith.constant 13 : index
    %335 = memref.load %arg3[%c13] : memref<144xf32, #tpu.memory_space<smem>>
    %336 = vector.broadcast %335 : f32 to vector<8x256xf32>
    %337 = arith.mulf %336, %334 : vector<8x256xf32>
    %338 = arith.addf %320, %337 : vector<8x256xf32>
    %c49 = arith.constant 49 : index
    %339 = memref.load %arg3[%c49] : memref<144xf32, #tpu.memory_space<smem>>
    %340 = vector.broadcast %339 : f32 to vector<8x256xf32>
    %341 = arith.mulf %340, %334 : vector<8x256xf32>
    %342 = arith.addf %324, %341 : vector<8x256xf32>
    %c85 = arith.constant 85 : index
    %343 = memref.load %arg3[%c85] : memref<144xf32, #tpu.memory_space<smem>>
    %344 = vector.broadcast %343 : f32 to vector<8x256xf32>
    %345 = arith.mulf %344, %334 : vector<8x256xf32>
    %346 = arith.addf %328, %345 : vector<8x256xf32>
    %c121 = arith.constant 121 : index
    %347 = memref.load %arg3[%c121] : memref<144xf32, #tpu.memory_space<smem>>
    %348 = vector.broadcast %347 : f32 to vector<8x256xf32>
    %349 = arith.mulf %348, %334 : vector<8x256xf32>
    %350 = arith.addf %332, %349 : vector<8x256xf32>
    %c2_74 = arith.constant 2 : index
    %c0_75 = arith.constant 0 : index
    %c128_76 = arith.constant 128 : index
    %351 = vector.load %arg8[%c2_74, %c0_75, %c128_76] : memref<4x8x512xf32, #tpu.memory_space<vmem>>, vector<1x8x256xf32>
    %352 = vector.shape_cast %351 : vector<1x8x256xf32> to vector<8x256xf32>
    %c22 = arith.constant 22 : index
    %353 = memref.load %arg3[%c22] : memref<144xf32, #tpu.memory_space<smem>>
    %354 = vector.broadcast %353 : f32 to vector<8x256xf32>
    %355 = arith.mulf %354, %352 : vector<8x256xf32>
    %356 = arith.addf %338, %355 : vector<8x256xf32>
    %c58 = arith.constant 58 : index
    %357 = memref.load %arg3[%c58] : memref<144xf32, #tpu.memory_space<smem>>
    %358 = vector.broadcast %357 : f32 to vector<8x256xf32>
    %359 = arith.mulf %358, %352 : vector<8x256xf32>
    %360 = arith.addf %342, %359 : vector<8x256xf32>
    %c94 = arith.constant 94 : index
    %361 = memref.load %arg3[%c94] : memref<144xf32, #tpu.memory_space<smem>>
    %362 = vector.broadcast %361 : f32 to vector<8x256xf32>
    %363 = arith.mulf %362, %352 : vector<8x256xf32>
    %364 = arith.addf %346, %363 : vector<8x256xf32>
    %c130 = arith.constant 130 : index
    %365 = memref.load %arg3[%c130] : memref<144xf32, #tpu.memory_space<smem>>
    %366 = vector.broadcast %365 : f32 to vector<8x256xf32>
    %367 = arith.mulf %366, %352 : vector<8x256xf32>
    %368 = arith.addf %350, %367 : vector<8x256xf32>
    %c3_77 = arith.constant 3 : index
    %c0_78 = arith.constant 0 : index
    %c128_79 = arith.constant 128 : index
    %369 = vector.load %arg8[%c3_77, %c0_78, %c128_79] : memref<4x8x512xf32, #tpu.memory_space<vmem>>, vector<1x8x256xf32>
    %370 = vector.shape_cast %369 : vector<1x8x256xf32> to vector<8x256xf32>
    %c31 = arith.constant 31 : index
    %371 = memref.load %arg3[%c31] : memref<144xf32, #tpu.memory_space<smem>>
    %372 = vector.broadcast %371 : f32 to vector<8x256xf32>
    %373 = arith.mulf %372, %370 : vector<8x256xf32>
    %374 = arith.addf %356, %373 : vector<8x256xf32>
    %c67 = arith.constant 67 : index
    %375 = memref.load %arg3[%c67] : memref<144xf32, #tpu.memory_space<smem>>
    %376 = vector.broadcast %375 : f32 to vector<8x256xf32>
    %377 = arith.mulf %376, %370 : vector<8x256xf32>
    %378 = arith.addf %360, %377 : vector<8x256xf32>
    %c103 = arith.constant 103 : index
    %379 = memref.load %arg3[%c103] : memref<144xf32, #tpu.memory_space<smem>>
    %380 = vector.broadcast %379 : f32 to vector<8x256xf32>
    %381 = arith.mulf %380, %370 : vector<8x256xf32>
    %382 = arith.addf %364, %381 : vector<8x256xf32>
    %c139 = arith.constant 139 : index
    %383 = memref.load %arg3[%c139] : memref<144xf32, #tpu.memory_space<smem>>
    %384 = vector.broadcast %383 : f32 to vector<8x256xf32>
    %385 = arith.mulf %384, %370 : vector<8x256xf32>
    %386 = arith.addf %368, %385 : vector<8x256xf32>
    %c0_80 = arith.constant 0 : index
    %c0_81 = arith.constant 0 : index
    %c144 = arith.constant 144 : index
    %387 = vector.load %arg8[%c0_80, %c0_81, %c144] : memref<4x8x512xf32, #tpu.memory_space<vmem>>, vector<1x8x256xf32>
    %388 = vector.shape_cast %387 : vector<1x8x256xf32> to vector<8x256xf32>
    %c7 = arith.constant 7 : index
    %389 = memref.load %arg3[%c7] : memref<144xf32, #tpu.memory_space<smem>>
    %390 = vector.broadcast %389 : f32 to vector<8x256xf32>
    %391 = arith.mulf %390, %388 : vector<8x256xf32>
    %392 = arith.addf %374, %391 : vector<8x256xf32>
    %c43 = arith.constant 43 : index
    %393 = memref.load %arg3[%c43] : memref<144xf32, #tpu.memory_space<smem>>
    %394 = vector.broadcast %393 : f32 to vector<8x256xf32>
    %395 = arith.mulf %394, %388 : vector<8x256xf32>
    %396 = arith.addf %378, %395 : vector<8x256xf32>
    %c79 = arith.constant 79 : index
    %397 = memref.load %arg3[%c79] : memref<144xf32, #tpu.memory_space<smem>>
    %398 = vector.broadcast %397 : f32 to vector<8x256xf32>
    %399 = arith.mulf %398, %388 : vector<8x256xf32>
    %400 = arith.addf %382, %399 : vector<8x256xf32>
    %c115 = arith.constant 115 : index
    %401 = memref.load %arg3[%c115] : memref<144xf32, #tpu.memory_space<smem>>
    %402 = vector.broadcast %401 : f32 to vector<8x256xf32>
    %403 = arith.mulf %402, %388 : vector<8x256xf32>
    %404 = arith.addf %386, %403 : vector<8x256xf32>
    %c1_82 = arith.constant 1 : index
    %c0_83 = arith.constant 0 : index
    %c144_84 = arith.constant 144 : index
    %405 = vector.load %arg8[%c1_82, %c0_83, %c144_84] : memref<4x8x512xf32, #tpu.memory_space<vmem>>, vector<1x8x256xf32>
    %406 = vector.shape_cast %405 : vector<1x8x256xf32> to vector<8x256xf32>
    %c16 = arith.constant 16 : index
    %407 = memref.load %arg3[%c16] : memref<144xf32, #tpu.memory_space<smem>>
    %408 = vector.broadcast %407 : f32 to vector<8x256xf32>
    %409 = arith.mulf %408, %406 : vector<8x256xf32>
    %410 = arith.addf %392, %409 : vector<8x256xf32>
    %c52 = arith.constant 52 : index
    %411 = memref.load %arg3[%c52] : memref<144xf32, #tpu.memory_space<smem>>
    %412 = vector.broadcast %411 : f32 to vector<8x256xf32>
    %413 = arith.mulf %412, %406 : vector<8x256xf32>
    %414 = arith.addf %396, %413 : vector<8x256xf32>
    %c88 = arith.constant 88 : index
    %415 = memref.load %arg3[%c88] : memref<144xf32, #tpu.memory_space<smem>>
    %416 = vector.broadcast %415 : f32 to vector<8x256xf32>
    %417 = arith.mulf %416, %406 : vector<8x256xf32>
    %418 = arith.addf %400, %417 : vector<8x256xf32>
    %c124 = arith.constant 124 : index
    %419 = memref.load %arg3[%c124] : memref<144xf32, #tpu.memory_space<smem>>
    %420 = vector.broadcast %419 : f32 to vector<8x256xf32>
    %421 = arith.mulf %420, %406 : vector<8x256xf32>
    %422 = arith.addf %404, %421 : vector<8x256xf32>
    %c2_85 = arith.constant 2 : index
    %c0_86 = arith.constant 0 : index
    %c144_87 = arith.constant 144 : index
    %423 = vector.load %arg8[%c2_85, %c0_86, %c144_87] : memref<4x8x512xf32, #tpu.memory_space<vmem>>, vector<1x8x256xf32>
    %424 = vector.shape_cast %423 : vector<1x8x256xf32> to vector<8x256xf32>
    %c25 = arith.constant 25 : index
    %425 = memref.load %arg3[%c25] : memref<144xf32, #tpu.memory_space<smem>>
    %426 = vector.broadcast %425 : f32 to vector<8x256xf32>
    %427 = arith.mulf %426, %424 : vector<8x256xf32>
    %428 = arith.addf %410, %427 : vector<8x256xf32>
    %c61 = arith.constant 61 : index
    %429 = memref.load %arg3[%c61] : memref<144xf32, #tpu.memory_space<smem>>
    %430 = vector.broadcast %429 : f32 to vector<8x256xf32>
    %431 = arith.mulf %430, %424 : vector<8x256xf32>
    %432 = arith.addf %414, %431 : vector<8x256xf32>
    %c97 = arith.constant 97 : index
    %433 = memref.load %arg3[%c97] : memref<144xf32, #tpu.memory_space<smem>>
    %434 = vector.broadcast %433 : f32 to vector<8x256xf32>
    %435 = arith.mulf %434, %424 : vector<8x256xf32>
    %436 = arith.addf %418, %435 : vector<8x256xf32>
    %c133 = arith.constant 133 : index
    %437 = memref.load %arg3[%c133] : memref<144xf32, #tpu.memory_space<smem>>
    %438 = vector.broadcast %437 : f32 to vector<8x256xf32>
    %439 = arith.mulf %438, %424 : vector<8x256xf32>
    %440 = arith.addf %422, %439 : vector<8x256xf32>
    %c3_88 = arith.constant 3 : index
    %c0_89 = arith.constant 0 : index
    %c144_90 = arith.constant 144 : index
    %441 = vector.load %arg8[%c3_88, %c0_89, %c144_90] : memref<4x8x512xf32, #tpu.memory_space<vmem>>, vector<1x8x256xf32>
    %442 = vector.shape_cast %441 : vector<1x8x256xf32> to vector<8x256xf32>
    %c34 = arith.constant 34 : index
    %443 = memref.load %arg3[%c34] : memref<144xf32, #tpu.memory_space<smem>>
    %444 = vector.broadcast %443 : f32 to vector<8x256xf32>
    %445 = arith.mulf %444, %442 : vector<8x256xf32>
    %446 = arith.addf %428, %445 : vector<8x256xf32>
    %c70 = arith.constant 70 : index
    %447 = memref.load %arg3[%c70] : memref<144xf32, #tpu.memory_space<smem>>
    %448 = vector.broadcast %447 : f32 to vector<8x256xf32>
    %449 = arith.mulf %448, %442 : vector<8x256xf32>
    %450 = arith.addf %432, %449 : vector<8x256xf32>
    %c106 = arith.constant 106 : index
    %451 = memref.load %arg3[%c106] : memref<144xf32, #tpu.memory_space<smem>>
    %452 = vector.broadcast %451 : f32 to vector<8x256xf32>
    %453 = arith.mulf %452, %442 : vector<8x256xf32>
    %454 = arith.addf %436, %453 : vector<8x256xf32>
    %c142 = arith.constant 142 : index
    %455 = memref.load %arg3[%c142] : memref<144xf32, #tpu.memory_space<smem>>
    %456 = vector.broadcast %455 : f32 to vector<8x256xf32>
    %457 = arith.mulf %456, %442 : vector<8x256xf32>
    %458 = arith.addf %440, %457 : vector<8x256xf32>
    %cst_91 = arith.constant 0.000000e+00 : f32
    %459 = vector.broadcast %cst_91 : f32 to vector<8x256xf32>
    %cst_92 = arith.constant 0.000000e+00 : f32
    %460 = vector.broadcast %cst_92 : f32 to vector<8x256xf32>
    %cst_93 = arith.constant 0.000000e+00 : f32
    %461 = vector.broadcast %cst_93 : f32 to vector<8x256xf32>
    %cst_94 = arith.constant 0.000000e+00 : f32
    %462 = vector.broadcast %cst_94 : f32 to vector<8x256xf32>
    %c0_95 = arith.constant 0 : index
    %c0_96 = arith.constant 0 : index
    %c113 = arith.constant 113 : index
    %463 = vector.load %arg8[%c0_95, %c0_96, %c113] : memref<4x8x512xf32, #tpu.memory_space<vmem>>, vector<1x8x256xf32>
    %464 = vector.shape_cast %463 : vector<1x8x256xf32> to vector<8x256xf32>
    %c2_97 = arith.constant 2 : index
    %465 = memref.load %arg3[%c2_97] : memref<144xf32, #tpu.memory_space<smem>>
    %466 = vector.broadcast %465 : f32 to vector<8x256xf32>
    %467 = arith.mulf %466, %464 : vector<8x256xf32>
    %468 = arith.addf %459, %467 : vector<8x256xf32>
    %c38 = arith.constant 38 : index
    %469 = memref.load %arg3[%c38] : memref<144xf32, #tpu.memory_space<smem>>
    %470 = vector.broadcast %469 : f32 to vector<8x256xf32>
    %471 = arith.mulf %470, %464 : vector<8x256xf32>
    %472 = arith.addf %460, %471 : vector<8x256xf32>
    %c74 = arith.constant 74 : index
    %473 = memref.load %arg3[%c74] : memref<144xf32, #tpu.memory_space<smem>>
    %474 = vector.broadcast %473 : f32 to vector<8x256xf32>
    %475 = arith.mulf %474, %464 : vector<8x256xf32>
    %476 = arith.addf %461, %475 : vector<8x256xf32>
    %c110 = arith.constant 110 : index
    %477 = memref.load %arg3[%c110] : memref<144xf32, #tpu.memory_space<smem>>
    %478 = vector.broadcast %477 : f32 to vector<8x256xf32>
    %479 = arith.mulf %478, %464 : vector<8x256xf32>
    %480 = arith.addf %462, %479 : vector<8x256xf32>
    %c1_98 = arith.constant 1 : index
    %c0_99 = arith.constant 0 : index
    %c113_100 = arith.constant 113 : index
    %481 = vector.load %arg8[%c1_98, %c0_99, %c113_100] : memref<4x8x512xf32, #tpu.memory_space<vmem>>, vector<1x8x256xf32>
    %482 = vector.shape_cast %481 : vector<1x8x256xf32> to vector<8x256xf32>
    %c11 = arith.constant 11 : index
    %483 = memref.load %arg3[%c11] : memref<144xf32, #tpu.memory_space<smem>>
    %484 = vector.broadcast %483 : f32 to vector<8x256xf32>
    %485 = arith.mulf %484, %482 : vector<8x256xf32>
    %486 = arith.addf %468, %485 : vector<8x256xf32>
    %c47 = arith.constant 47 : index
    %487 = memref.load %arg3[%c47] : memref<144xf32, #tpu.memory_space<smem>>
    %488 = vector.broadcast %487 : f32 to vector<8x256xf32>
    %489 = arith.mulf %488, %482 : vector<8x256xf32>
    %490 = arith.addf %472, %489 : vector<8x256xf32>
    %c83 = arith.constant 83 : index
    %491 = memref.load %arg3[%c83] : memref<144xf32, #tpu.memory_space<smem>>
    %492 = vector.broadcast %491 : f32 to vector<8x256xf32>
    %493 = arith.mulf %492, %482 : vector<8x256xf32>
    %494 = arith.addf %476, %493 : vector<8x256xf32>
    %c119 = arith.constant 119 : index
    %495 = memref.load %arg3[%c119] : memref<144xf32, #tpu.memory_space<smem>>
    %496 = vector.broadcast %495 : f32 to vector<8x256xf32>
    %497 = arith.mulf %496, %482 : vector<8x256xf32>
    %498 = arith.addf %480, %497 : vector<8x256xf32>
    %c2_101 = arith.constant 2 : index
    %c0_102 = arith.constant 0 : index
    %c113_103 = arith.constant 113 : index
    %499 = vector.load %arg8[%c2_101, %c0_102, %c113_103] : memref<4x8x512xf32, #tpu.memory_space<vmem>>, vector<1x8x256xf32>
    %500 = vector.shape_cast %499 : vector<1x8x256xf32> to vector<8x256xf32>
    %c20 = arith.constant 20 : index
    %501 = memref.load %arg3[%c20] : memref<144xf32, #tpu.memory_space<smem>>
    %502 = vector.broadcast %501 : f32 to vector<8x256xf32>
    %503 = arith.mulf %502, %500 : vector<8x256xf32>
    %504 = arith.addf %486, %503 : vector<8x256xf32>
    %c56 = arith.constant 56 : index
    %505 = memref.load %arg3[%c56] : memref<144xf32, #tpu.memory_space<smem>>
    %506 = vector.broadcast %505 : f32 to vector<8x256xf32>
    %507 = arith.mulf %506, %500 : vector<8x256xf32>
    %508 = arith.addf %490, %507 : vector<8x256xf32>
    %c92 = arith.constant 92 : index
    %509 = memref.load %arg3[%c92] : memref<144xf32, #tpu.memory_space<smem>>
    %510 = vector.broadcast %509 : f32 to vector<8x256xf32>
    %511 = arith.mulf %510, %500 : vector<8x256xf32>
    %512 = arith.addf %494, %511 : vector<8x256xf32>
    %c128_104 = arith.constant 128 : index
    %513 = memref.load %arg3[%c128_104] : memref<144xf32, #tpu.memory_space<smem>>
    %514 = vector.broadcast %513 : f32 to vector<8x256xf32>
    %515 = arith.mulf %514, %500 : vector<8x256xf32>
    %516 = arith.addf %498, %515 : vector<8x256xf32>
    %c3_105 = arith.constant 3 : index
    %c0_106 = arith.constant 0 : index
    %c113_107 = arith.constant 113 : index
    %517 = vector.load %arg8[%c3_105, %c0_106, %c113_107] : memref<4x8x512xf32, #tpu.memory_space<vmem>>, vector<1x8x256xf32>
    %518 = vector.shape_cast %517 : vector<1x8x256xf32> to vector<8x256xf32>
    %c29 = arith.constant 29 : index
    %519 = memref.load %arg3[%c29] : memref<144xf32, #tpu.memory_space<smem>>
    %520 = vector.broadcast %519 : f32 to vector<8x256xf32>
    %521 = arith.mulf %520, %518 : vector<8x256xf32>
    %522 = arith.addf %504, %521 : vector<8x256xf32>
    %c65 = arith.constant 65 : index
    %523 = memref.load %arg3[%c65] : memref<144xf32, #tpu.memory_space<smem>>
    %524 = vector.broadcast %523 : f32 to vector<8x256xf32>
    %525 = arith.mulf %524, %518 : vector<8x256xf32>
    %526 = arith.addf %508, %525 : vector<8x256xf32>
    %c101 = arith.constant 101 : index
    %527 = memref.load %arg3[%c101] : memref<144xf32, #tpu.memory_space<smem>>
    %528 = vector.broadcast %527 : f32 to vector<8x256xf32>
    %529 = arith.mulf %528, %518 : vector<8x256xf32>
    %530 = arith.addf %512, %529 : vector<8x256xf32>
    %c137 = arith.constant 137 : index
    %531 = memref.load %arg3[%c137] : memref<144xf32, #tpu.memory_space<smem>>
    %532 = vector.broadcast %531 : f32 to vector<8x256xf32>
    %533 = arith.mulf %532, %518 : vector<8x256xf32>
    %534 = arith.addf %516, %533 : vector<8x256xf32>
    %c0_108 = arith.constant 0 : index
    %c0_109 = arith.constant 0 : index
    %c129_110 = arith.constant 129 : index
    %535 = vector.load %arg8[%c0_108, %c0_109, %c129_110] : memref<4x8x512xf32, #tpu.memory_space<vmem>>, vector<1x8x256xf32>
    %536 = vector.shape_cast %535 : vector<1x8x256xf32> to vector<8x256xf32>
    %c5 = arith.constant 5 : index
    %537 = memref.load %arg3[%c5] : memref<144xf32, #tpu.memory_space<smem>>
    %538 = vector.broadcast %537 : f32 to vector<8x256xf32>
    %539 = arith.mulf %538, %536 : vector<8x256xf32>
    %540 = arith.addf %522, %539 : vector<8x256xf32>
    %c41 = arith.constant 41 : index
    %541 = memref.load %arg3[%c41] : memref<144xf32, #tpu.memory_space<smem>>
    %542 = vector.broadcast %541 : f32 to vector<8x256xf32>
    %543 = arith.mulf %542, %536 : vector<8x256xf32>
    %544 = arith.addf %526, %543 : vector<8x256xf32>
    %c77 = arith.constant 77 : index
    %545 = memref.load %arg3[%c77] : memref<144xf32, #tpu.memory_space<smem>>
    %546 = vector.broadcast %545 : f32 to vector<8x256xf32>
    %547 = arith.mulf %546, %536 : vector<8x256xf32>
    %548 = arith.addf %530, %547 : vector<8x256xf32>
    %c113_111 = arith.constant 113 : index
    %549 = memref.load %arg3[%c113_111] : memref<144xf32, #tpu.memory_space<smem>>
    %550 = vector.broadcast %549 : f32 to vector<8x256xf32>
    %551 = arith.mulf %550, %536 : vector<8x256xf32>
    %552 = arith.addf %534, %551 : vector<8x256xf32>
    %c1_112 = arith.constant 1 : index
    %c0_113 = arith.constant 0 : index
    %c129_114 = arith.constant 129 : index
    %553 = vector.load %arg8[%c1_112, %c0_113, %c129_114] : memref<4x8x512xf32, #tpu.memory_space<vmem>>, vector<1x8x256xf32>
    %554 = vector.shape_cast %553 : vector<1x8x256xf32> to vector<8x256xf32>
    %c14 = arith.constant 14 : index
    %555 = memref.load %arg3[%c14] : memref<144xf32, #tpu.memory_space<smem>>
    %556 = vector.broadcast %555 : f32 to vector<8x256xf32>
    %557 = arith.mulf %556, %554 : vector<8x256xf32>
    %558 = arith.addf %540, %557 : vector<8x256xf32>
    %c50 = arith.constant 50 : index
    %559 = memref.load %arg3[%c50] : memref<144xf32, #tpu.memory_space<smem>>
    %560 = vector.broadcast %559 : f32 to vector<8x256xf32>
    %561 = arith.mulf %560, %554 : vector<8x256xf32>
    %562 = arith.addf %544, %561 : vector<8x256xf32>
    %c86 = arith.constant 86 : index
    %563 = memref.load %arg3[%c86] : memref<144xf32, #tpu.memory_space<smem>>
    %564 = vector.broadcast %563 : f32 to vector<8x256xf32>
    %565 = arith.mulf %564, %554 : vector<8x256xf32>
    %566 = arith.addf %548, %565 : vector<8x256xf32>
    %c122 = arith.constant 122 : index
    %567 = memref.load %arg3[%c122] : memref<144xf32, #tpu.memory_space<smem>>
    %568 = vector.broadcast %567 : f32 to vector<8x256xf32>
    %569 = arith.mulf %568, %554 : vector<8x256xf32>
    %570 = arith.addf %552, %569 : vector<8x256xf32>
    %c2_115 = arith.constant 2 : index
    %c0_116 = arith.constant 0 : index
    %c129_117 = arith.constant 129 : index
    %571 = vector.load %arg8[%c2_115, %c0_116, %c129_117] : memref<4x8x512xf32, #tpu.memory_space<vmem>>, vector<1x8x256xf32>
    %572 = vector.shape_cast %571 : vector<1x8x256xf32> to vector<8x256xf32>
    %c23 = arith.constant 23 : index
    %573 = memref.load %arg3[%c23] : memref<144xf32, #tpu.memory_space<smem>>
    %574 = vector.broadcast %573 : f32 to vector<8x256xf32>
    %575 = arith.mulf %574, %572 : vector<8x256xf32>
    %576 = arith.addf %558, %575 : vector<8x256xf32>
    %c59 = arith.constant 59 : index
    %577 = memref.load %arg3[%c59] : memref<144xf32, #tpu.memory_space<smem>>
    %578 = vector.broadcast %577 : f32 to vector<8x256xf32>
    %579 = arith.mulf %578, %572 : vector<8x256xf32>
    %580 = arith.addf %562, %579 : vector<8x256xf32>
    %c95 = arith.constant 95 : index
    %581 = memref.load %arg3[%c95] : memref<144xf32, #tpu.memory_space<smem>>
    %582 = vector.broadcast %581 : f32 to vector<8x256xf32>
    %583 = arith.mulf %582, %572 : vector<8x256xf32>
    %584 = arith.addf %566, %583 : vector<8x256xf32>
    %c131 = arith.constant 131 : index
    %585 = memref.load %arg3[%c131] : memref<144xf32, #tpu.memory_space<smem>>
    %586 = vector.broadcast %585 : f32 to vector<8x256xf32>
    %587 = arith.mulf %586, %572 : vector<8x256xf32>
    %588 = arith.addf %570, %587 : vector<8x256xf32>
    %c3_118 = arith.constant 3 : index
    %c0_119 = arith.constant 0 : index
    %c129_120 = arith.constant 129 : index
    %589 = vector.load %arg8[%c3_118, %c0_119, %c129_120] : memref<4x8x512xf32, #tpu.memory_space<vmem>>, vector<1x8x256xf32>
    %590 = vector.shape_cast %589 : vector<1x8x256xf32> to vector<8x256xf32>
    %c32 = arith.constant 32 : index
    %591 = memref.load %arg3[%c32] : memref<144xf32, #tpu.memory_space<smem>>
    %592 = vector.broadcast %591 : f32 to vector<8x256xf32>
    %593 = arith.mulf %592, %590 : vector<8x256xf32>
    %594 = arith.addf %576, %593 : vector<8x256xf32>
    %c68 = arith.constant 68 : index
    %595 = memref.load %arg3[%c68] : memref<144xf32, #tpu.memory_space<smem>>
    %596 = vector.broadcast %595 : f32 to vector<8x256xf32>
    %597 = arith.mulf %596, %590 : vector<8x256xf32>
    %598 = arith.addf %580, %597 : vector<8x256xf32>
    %c104 = arith.constant 104 : index
    %599 = memref.load %arg3[%c104] : memref<144xf32, #tpu.memory_space<smem>>
    %600 = vector.broadcast %599 : f32 to vector<8x256xf32>
    %601 = arith.mulf %600, %590 : vector<8x256xf32>
    %602 = arith.addf %584, %601 : vector<8x256xf32>
    %c140 = arith.constant 140 : index
    %603 = memref.load %arg3[%c140] : memref<144xf32, #tpu.memory_space<smem>>
    %604 = vector.broadcast %603 : f32 to vector<8x256xf32>
    %605 = arith.mulf %604, %590 : vector<8x256xf32>
    %606 = arith.addf %588, %605 : vector<8x256xf32>
    %c0_121 = arith.constant 0 : index
    %c0_122 = arith.constant 0 : index
    %c145 = arith.constant 145 : index
    %607 = vector.load %arg8[%c0_121, %c0_122, %c145] : memref<4x8x512xf32, #tpu.memory_space<vmem>>, vector<1x8x256xf32>
    %608 = vector.shape_cast %607 : vector<1x8x256xf32> to vector<8x256xf32>
    %c8 = arith.constant 8 : index
    %609 = memref.load %arg3[%c8] : memref<144xf32, #tpu.memory_space<smem>>
    %610 = vector.broadcast %609 : f32 to vector<8x256xf32>
    %611 = arith.mulf %610, %608 : vector<8x256xf32>
    %612 = arith.addf %594, %611 : vector<8x256xf32>
    %c44 = arith.constant 44 : index
    %613 = memref.load %arg3[%c44] : memref<144xf32, #tpu.memory_space<smem>>
    %614 = vector.broadcast %613 : f32 to vector<8x256xf32>
    %615 = arith.mulf %614, %608 : vector<8x256xf32>
    %616 = arith.addf %598, %615 : vector<8x256xf32>
    %c80 = arith.constant 80 : index
    %617 = memref.load %arg3[%c80] : memref<144xf32, #tpu.memory_space<smem>>
    %618 = vector.broadcast %617 : f32 to vector<8x256xf32>
    %619 = arith.mulf %618, %608 : vector<8x256xf32>
    %620 = arith.addf %602, %619 : vector<8x256xf32>
    %c116 = arith.constant 116 : index
    %621 = memref.load %arg3[%c116] : memref<144xf32, #tpu.memory_space<smem>>
    %622 = vector.broadcast %621 : f32 to vector<8x256xf32>
    %623 = arith.mulf %622, %608 : vector<8x256xf32>
    %624 = arith.addf %606, %623 : vector<8x256xf32>
    %c1_123 = arith.constant 1 : index
    %c0_124 = arith.constant 0 : index
    %c145_125 = arith.constant 145 : index
    %625 = vector.load %arg8[%c1_123, %c0_124, %c145_125] : memref<4x8x512xf32, #tpu.memory_space<vmem>>, vector<1x8x256xf32>
    %626 = vector.shape_cast %625 : vector<1x8x256xf32> to vector<8x256xf32>
    %c17 = arith.constant 17 : index
    %627 = memref.load %arg3[%c17] : memref<144xf32, #tpu.memory_space<smem>>
    %628 = vector.broadcast %627 : f32 to vector<8x256xf32>
    %629 = arith.mulf %628, %626 : vector<8x256xf32>
    %630 = arith.addf %612, %629 : vector<8x256xf32>
    %c53 = arith.constant 53 : index
    %631 = memref.load %arg3[%c53] : memref<144xf32, #tpu.memory_space<smem>>
    %632 = vector.broadcast %631 : f32 to vector<8x256xf32>
    %633 = arith.mulf %632, %626 : vector<8x256xf32>
    %634 = arith.addf %616, %633 : vector<8x256xf32>
    %c89 = arith.constant 89 : index
    %635 = memref.load %arg3[%c89] : memref<144xf32, #tpu.memory_space<smem>>
    %636 = vector.broadcast %635 : f32 to vector<8x256xf32>
    %637 = arith.mulf %636, %626 : vector<8x256xf32>
    %638 = arith.addf %620, %637 : vector<8x256xf32>
    %c125 = arith.constant 125 : index
    %639 = memref.load %arg3[%c125] : memref<144xf32, #tpu.memory_space<smem>>
    %640 = vector.broadcast %639 : f32 to vector<8x256xf32>
    %641 = arith.mulf %640, %626 : vector<8x256xf32>
    %642 = arith.addf %624, %641 : vector<8x256xf32>
    %c2_126 = arith.constant 2 : index
    %c0_127 = arith.constant 0 : index
    %c145_128 = arith.constant 145 : index
    %643 = vector.load %arg8[%c2_126, %c0_127, %c145_128] : memref<4x8x512xf32, #tpu.memory_space<vmem>>, vector<1x8x256xf32>
    %644 = vector.shape_cast %643 : vector<1x8x256xf32> to vector<8x256xf32>
    %c26 = arith.constant 26 : index
    %645 = memref.load %arg3[%c26] : memref<144xf32, #tpu.memory_space<smem>>
    %646 = vector.broadcast %645 : f32 to vector<8x256xf32>
    %647 = arith.mulf %646, %644 : vector<8x256xf32>
    %648 = arith.addf %630, %647 : vector<8x256xf32>
    %c62 = arith.constant 62 : index
    %649 = memref.load %arg3[%c62] : memref<144xf32, #tpu.memory_space<smem>>
    %650 = vector.broadcast %649 : f32 to vector<8x256xf32>
    %651 = arith.mulf %650, %644 : vector<8x256xf32>
    %652 = arith.addf %634, %651 : vector<8x256xf32>
    %c98 = arith.constant 98 : index
    %653 = memref.load %arg3[%c98] : memref<144xf32, #tpu.memory_space<smem>>
    %654 = vector.broadcast %653 : f32 to vector<8x256xf32>
    %655 = arith.mulf %654, %644 : vector<8x256xf32>
    %656 = arith.addf %638, %655 : vector<8x256xf32>
    %c134 = arith.constant 134 : index
    %657 = memref.load %arg3[%c134] : memref<144xf32, #tpu.memory_space<smem>>
    %658 = vector.broadcast %657 : f32 to vector<8x256xf32>
    %659 = arith.mulf %658, %644 : vector<8x256xf32>
    %660 = arith.addf %642, %659 : vector<8x256xf32>
    %c3_129 = arith.constant 3 : index
    %c0_130 = arith.constant 0 : index
    %c145_131 = arith.constant 145 : index
    %661 = vector.load %arg8[%c3_129, %c0_130, %c145_131] : memref<4x8x512xf32, #tpu.memory_space<vmem>>, vector<1x8x256xf32>
    %662 = vector.shape_cast %661 : vector<1x8x256xf32> to vector<8x256xf32>
    %c35 = arith.constant 35 : index
    %663 = memref.load %arg3[%c35] : memref<144xf32, #tpu.memory_space<smem>>
    %664 = vector.broadcast %663 : f32 to vector<8x256xf32>
    %665 = arith.mulf %664, %662 : vector<8x256xf32>
    %666 = arith.addf %648, %665 : vector<8x256xf32>
    %c71 = arith.constant 71 : index
    %667 = memref.load %arg3[%c71] : memref<144xf32, #tpu.memory_space<smem>>
    %668 = vector.broadcast %667 : f32 to vector<8x256xf32>
    %669 = arith.mulf %668, %662 : vector<8x256xf32>
    %670 = arith.addf %652, %669 : vector<8x256xf32>
    %c107 = arith.constant 107 : index
    %671 = memref.load %arg3[%c107] : memref<144xf32, #tpu.memory_space<smem>>
    %672 = vector.broadcast %671 : f32 to vector<8x256xf32>
    %673 = arith.mulf %672, %662 : vector<8x256xf32>
    %674 = arith.addf %656, %673 : vector<8x256xf32>
    %c143_132 = arith.constant 143 : index
    %675 = memref.load %arg3[%c143_132] : memref<144xf32, #tpu.memory_space<smem>>
    %676 = vector.broadcast %675 : f32 to vector<8x256xf32>
    %677 = arith.mulf %676, %662 : vector<8x256xf32>
    %678 = arith.addf %660, %677 : vector<8x256xf32>
    %679 = arith.mulf %10, %666 : vector<8x256xf32>
    %680 = arith.addf %446, %679 : vector<8x256xf32>
    %681 = arith.mulf %10, %670 : vector<8x256xf32>
    %682 = arith.addf %450, %681 : vector<8x256xf32>
    %683 = arith.mulf %10, %674 : vector<8x256xf32>
    %684 = arith.addf %454, %683 : vector<8x256xf32>
    %685 = arith.mulf %10, %678 : vector<8x256xf32>
    %686 = arith.addf %458, %685 : vector<8x256xf32>
    %cst_133 = arith.constant 0.000000e+00 : f32
    %687 = vector.broadcast %cst_133 : f32 to vector<8x256xf32>
    %c0_134 = arith.constant 0 : index
    %688 = memref.load %arg6[%c0_134] : memref<1xf32, #tpu.memory_space<smem>>
    %689 = vector.broadcast %688 : f32 to vector<8x256xf32>
    %690 = arith.addf %687, %689 : vector<8x256xf32>
    %c0_135 = arith.constant 0 : index
    %691 = memref.load %arg4[%c0_135] : memref<4xf32, #tpu.memory_space<smem>>
    %692 = vector.broadcast %691 : f32 to vector<8x256xf32>
    %693 = arith.addf %680, %692 : vector<8x256xf32>
    %cst_136 = arith.constant 0.000000e+00 : f32
    %694 = vector.broadcast %cst_136 : f32 to vector<8x256xf32>
    %695 = arith.maximumf %693, %694 : vector<8x256xf32>
    %c0_137 = arith.constant 0 : index
    %696 = memref.load %arg5[%c0_137] : memref<4xf32, #tpu.memory_space<smem>>
    %697 = vector.broadcast %696 : f32 to vector<8x256xf32>
    %698 = arith.mulf %697, %695 : vector<8x256xf32>
    %699 = arith.addf %690, %698 : vector<8x256xf32>
    %c1_138 = arith.constant 1 : index
    %700 = memref.load %arg4[%c1_138] : memref<4xf32, #tpu.memory_space<smem>>
    %701 = vector.broadcast %700 : f32 to vector<8x256xf32>
    %702 = arith.addf %682, %701 : vector<8x256xf32>
    %cst_139 = arith.constant 0.000000e+00 : f32
    %703 = vector.broadcast %cst_139 : f32 to vector<8x256xf32>
    %704 = arith.maximumf %702, %703 : vector<8x256xf32>
    %c1_140 = arith.constant 1 : index
    %705 = memref.load %arg5[%c1_140] : memref<4xf32, #tpu.memory_space<smem>>
    %706 = vector.broadcast %705 : f32 to vector<8x256xf32>
    %707 = arith.mulf %706, %704 : vector<8x256xf32>
    %708 = arith.addf %699, %707 : vector<8x256xf32>
    %c2_141 = arith.constant 2 : index
    %709 = memref.load %arg4[%c2_141] : memref<4xf32, #tpu.memory_space<smem>>
    %710 = vector.broadcast %709 : f32 to vector<8x256xf32>
    %711 = arith.addf %684, %710 : vector<8x256xf32>
    %cst_142 = arith.constant 0.000000e+00 : f32
    %712 = vector.broadcast %cst_142 : f32 to vector<8x256xf32>
    %713 = arith.maximumf %711, %712 : vector<8x256xf32>
    %c2_143 = arith.constant 2 : index
    %714 = memref.load %arg5[%c2_143] : memref<4xf32, #tpu.memory_space<smem>>
    %715 = vector.broadcast %714 : f32 to vector<8x256xf32>
    %716 = arith.mulf %715, %713 : vector<8x256xf32>
    %717 = arith.addf %708, %716 : vector<8x256xf32>
    %c3_144 = arith.constant 3 : index
    %718 = memref.load %arg4[%c3_144] : memref<4xf32, #tpu.memory_space<smem>>
    %719 = vector.broadcast %718 : f32 to vector<8x256xf32>
    %720 = arith.addf %686, %719 : vector<8x256xf32>
    %cst_145 = arith.constant 0.000000e+00 : f32
    %721 = vector.broadcast %cst_145 : f32 to vector<8x256xf32>
    %722 = arith.maximumf %720, %721 : vector<8x256xf32>
    %c3_146 = arith.constant 3 : index
    %723 = memref.load %arg5[%c3_146] : memref<4xf32, #tpu.memory_space<smem>>
    %724 = vector.broadcast %723 : f32 to vector<8x256xf32>
    %725 = arith.mulf %724, %722 : vector<8x256xf32>
    %726 = arith.addf %717, %725 : vector<8x256xf32>
    %c0_147 = arith.constant 0 : index
    %c0_148 = arith.constant 0 : index
    %727 = vector.load %arg7[%c0_147, %c0_148] : memref<8x256xf32, #tpu.memory_space<vmem>>, vector<8x256xf32>
    tpu.vector_store %arg7[%c0_147, %c0_148], %726 {strides = array<i32>} : memref<8x256xf32, #tpu.memory_space<vmem>>, vector<8x256xf32>,
    return
  }
  func.func @transform_0(%arg0: i32) -> (i32, i32, i32) {
    %c0_i32 = arith.constant 0 : i32
    %c0_i32_0 = arith.constant 0 : i32
    %c0_i32_1 = arith.constant 0 : i32
    return %c0_i32, %arg0, %c0_i32_0 : i32, i32, i32
  }
  func.func @transform_1(%arg0: i32) -> (i32, i32) {
    %c0_i32 = arith.constant 0 : i32
    %c0_i32_0 = arith.constant 0 : i32
    %c0_i32_1 = arith.constant 0 : i32
    return %c0_i32, %c0_i32_0 : i32, i32
  }
  func.func @transform_2(%arg0: i32) -> i32 {
    %c0_i32 = arith.constant 0 : i32
    %c0_i32_0 = arith.constant 0 : i32
    return %c0_i32 : i32
  }
  func.func @transform_3(%arg0: i32) -> i32 {
    %c0_i32 = arith.constant 0 : i32
    %c0_i32_0 = arith.constant 0 : i32
    return %c0_i32 : i32
  }
  func.func @transform_4(%arg0: i32) -> i32 {
    %c0_i32 = arith.constant 0 : i32
    %c0_i32_0 = arith.constant 0 : i32
    return %c0_i32 : i32
  }
  func.func @transform_5(%arg0: i32) -> i32 {
    %c0_i32 = arith.constant 0 : i32
    %c0_i32_0 = arith.constant 0 : i32
    return %c0_i32 : i32
  }
  func.func @transform_6(%arg0: i32) -> (i32, i32) {
    %c0_i32 = arith.constant 0 : i32
    %c0_i32_0 = arith.constant 0 : i32
    return %arg0, %c0_i32 : i32, i32
  }
}

</mosaic_0001>

<llo_original>
// kernel: tpu_custom_call.1
$region0: #{tpu_custom_call.1}
  #allocation0 [shape = 'u32[]', space=smem, size = 0x4, offset = 0x4, fixed_abs, tag = 'smem constant byte address 0x4 - core index']
  #allocation1 [shape = 'u32[72,128]{1,0:T(1,128)}', space=vmem, size = 0x9000, scoped, tag = 'internal scratch']
  #allocation2 [shape = 'f32[4,8,512]{2,1,0:T(8,128)}', space=vmem, size = 0x10000, scoped, tag = 'scratch operand']
  #allocation3 [shape = 'f32[1]{0:T(128)S(6)}', space=smem, size = 0x200, scoped, tag = 'scoped memory for tpu_custom_call.1']
  %s0 = inlined_call_operand.hbm [shape: f32[4,8,256], index: 0, kind: input, shape index: {}]
  %s1 = inlined_call_operand.hbm [shape: f32[2,256], index: 1, kind: input, shape index: {}]
  %s2 = inlined_call_operand.vmem [shape: f32[144], index: 2, kind: input, shape index: {}]
  %s3 = inlined_call_operand.vmem [shape: f32[4], index: 3, kind: input, shape index: {}]
  %s4 = inlined_call_operand.vmem [shape: f32[4], index: 4, kind: input, shape index: {}]
  %s5 = inlined_call_operand.<no memory space> [shape: f32[1], index: 5, kind: input, shape index: {}]
  %s6 = inlined_call_operand.hbm [shape: f32[8,256], index: 6, kind: output, shape index: {}]
  %s7 = sld [smem:[#allocation0]]
  $region54: #{tpu_custom_call.1} parent=0
    _
  %s9 = ssub.s32 1, %s7
  %s10 = scalar_select 0, %s9, %s7
  %11 = sst [smem:[#allocation3]] %s5
  $region1: #{tpu_custom_call.1} parent=0
    #allocation4 [shape = 'u8[32768]{0}', space=vmem, size = 0x8000, scoped, tag = 'input window, operand 0, single buffered']
    #allocation5 [shape = 's32[1]{0}', space=sflag, size = 0x4, scoped, tag = 'scoped memory for tpu_custom_call.1']
    #allocation6 [shape = 's32[1]{0}', space=sflag, size = 0x4, scoped, tag = 'scoped memory for tpu_custom_call.1']
    #allocation7 [shape = 's32[1]{0}', space=sflag, size = 0x4, scoped, tag = 'scoped memory for tpu_custom_call.1']
    #allocation8 [shape = 'u8[2048]{0}', space=vmem, size = 0x800, scoped, tag = 'input window, operand 1, single buffered']
    #allocation9 [shape = 's32[1]{0}', space=sflag, size = 0x4, scoped, tag = 'scoped memory for tpu_custom_call.1']
    #allocation10 [shape = 'u8[1024]{0}', space=smem, size = 0x400, scoped, tag = 'input window, operand 2, single buffered']
    #allocation11 [shape = 'u8[512]{0}', space=smem, size = 0x200, scoped, tag = 'input window, operand 3, single buffered']
    #allocation12 [shape = 's32[1]{0}', space=sflag, size = 0x4, scoped, tag = 'scoped memory for tpu_custom_call.1']
    #allocation13 [shape = 'u8[512]{0}', space=smem, size = 0x200, scoped, tag = 'input window, operand 4, single buffered']
    #allocation14 [shape = 'u8[8192]{0}', space=vmem, size = 0x2000, scoped, tag = 'output window, operand 0, single buffered']
    %12 = vsyncpa [#allocation5], 0
    %13 = vsyncpa [#allocation9], 0
    %14 = vsyncpa [#allocation7], 0
    %15 = vsyncpa [#allocation12], 0
    %16 = vsyncpa [#allocation6], 0
    // Predicated region
    $region2: #{tpu_custom_call.1} parent=1 // pred_check
      _
    $region3: #{tpu_custom_call.1} parent=1 // pred_check_branch
      %18 = sbr.rel (0) target = $region5
    $region4: #{tpu_custom_call.1} parent=1 // pred_region
      %20 = vsyncadd [#allocation5], 0
      %s21 = sshll.u32 %s0, 4
      %s22 = int_to_ptr.hbm [resolvable:$true] %s21
      %s23 = sshll.u32 [#allocation4], 4
      %s24 = int_to_ptr.vmem [resolvable:$true] %s23
      %29 = dma.hbm_to_vmem [thread:$0]  %s22, 1024, %s24, [#allocation5], 256, 256, 16
    $region5: #{tpu_custom_call.1} parent=1 // pred_fallthru
      _
    // Predicated region
    $region6: #{tpu_custom_call.1} parent=1 // pred_check
      _
    $region7: #{tpu_custom_call.1} parent=1 // pred_check_branch
      %31 = sbr.rel (0) target = $region9
    $region8: #{tpu_custom_call.1} parent=1 // pred_region
      %33 = vsyncadd [#allocation9], 0
      %s35 = sshll.u32 %s1, 4
      %s36 = int_to_ptr.hbm [resolvable:$true] %s35
      %s37 = sshll.u32 [#allocation8], 4
      %s38 = int_to_ptr.vmem [resolvable:$true] %s37
      %40 = dma.hbm_to_vmem [thread:$0]  %s36, 64, %s38, [#allocation9]
    $region9: #{tpu_custom_call.1} parent=1 // pred_fallthru
      _
    // Predicated region
    $region10: #{tpu_custom_call.1} parent=1 // pred_check
      _
    $region11: #{tpu_custom_call.1} parent=1 // pred_check_branch
      %42 = sbr.rel (0) target = $region13
    $region12: #{tpu_custom_call.1} parent=1 // pred_region
      %44 = vsyncadd [#allocation7], 0
      %s46 = sshll.u32 %s2, 4
      %s47 = int_to_ptr.vmem [resolvable:$true] %s46
      %49 = dma.vmem_to_smem %s47, 32, [#allocation10], [#allocation7]
    $region13: #{tpu_custom_call.1} parent=1 // pred_fallthru
      _
    // Predicated region
    $region14: #{tpu_custom_call.1} parent=1 // pred_check
      _
    $region15: #{tpu_custom_call.1} parent=1 // pred_check_branch
      %51 = sbr.rel (0) target = $region17
    $region16: #{tpu_custom_call.1} parent=1 // pred_region
      %53 = vsyncadd [#allocation12], 0
      %s55 = sshll.u32 %s3, 4
      %s56 = int_to_ptr.vmem [resolvable:$true] %s55
      %58 = dma.vmem_to_smem %s56, 16, [#allocation11], [#allocation12]
    $region17: #{tpu_custom_call.1} parent=1 // pred_fallthru
      _
    // Predicated region
    $region18: #{tpu_custom_call.1} parent=1 // pred_check
      _
    $region19: #{tpu_custom_call.1} parent=1 // pred_check_branch
      %60 = sbr.rel (0) target = $region21
    $region20: #{tpu_custom_call.1} parent=1 // pred_region
      %62 = vsyncadd [#allocation12], 0
      %s64 = sshll.u32 %s4, 4
      %s65 = int_to_ptr.vmem [resolvable:$true] %s64
      %67 = dma.vmem_to_smem %s65, 16, [#allocation13], [#allocation12]
    $region21: #{tpu_custom_call.1} parent=1 // pred_fallthru
      _
    // Predicated region
    $region22: #{tpu_custom_call.1} parent=1 // pred_check
      _
    $region23: #{tpu_custom_call.1} parent=1 // pred_check_branch
      %69 = sbr.rel (0) target = $region25
    $region24: #{tpu_custom_call.1} parent=1 // pred_region
      _
    $region25: #{tpu_custom_call.1} parent=1 // pred_fallthru
      _
    // Predicated region
    $region26: #{tpu_custom_call.1} parent=1 // pred_check
      _
    $region27: #{tpu_custom_call.1} parent=1 // pred_check_branch
      %71 = sbr.rel (0) target = $region29
    $region28: #{tpu_custom_call.1} parent=1 // pred_region
      %73 = dma.done [#allocation5], 1024
    $region29: #{tpu_custom_call.1} parent=1 // pred_fallthru
      _
    // Predicated region
    $region30: #{tpu_custom_call.1} parent=1 // pred_check
      _
    $region31: #{tpu_custom_call.1} parent=1 // pred_check_branch
      %75 = sbr.rel (0) target = $region33
    $region32: #{tpu_custom_call.1} parent=1 // pred_region
      %77 = dma.done [#allocation9], 64
    $region33: #{tpu_custom_call.1} parent=1 // pred_fallthru
      _
    // Predicated region
    $region34: #{tpu_custom_call.1} parent=1 // pred_check
      _
    $region35: #{tpu_custom_call.1} parent=1 // pred_check_branch
      %79 = sbr.rel (0) target = $region37
    $region36: #{tpu_custom_call.1} parent=1 // pred_region
      %81 = dma.done [#allocation7], 32
    $region37: #{tpu_custom_call.1} parent=1 // pred_fallthru
      _
    // Predicated region
    $region38: #{tpu_custom_call.1} parent=1 // pred_check
      _
    $region39: #{tpu_custom_call.1} parent=1 // pred_check_branch
      %83 = sbr.rel (0) target = $region41
    $region40: #{tpu_custom_call.1} parent=1 // pred_region
      %85 = dma.done [#allocation12], 16
    $region41: #{tpu_custom_call.1} parent=1 // pred_fallthru
      _
    // Predicated region
    $region42: #{tpu_custom_call.1} parent=1 // pred_check
      _
    $region43: #{tpu_custom_call.1} parent=1 // pred_check_branch
      %87 = sbr.rel (0) target = $region45
    $region44: #{tpu_custom_call.1} parent=1 // pred_region
      %89 = dma.done [#allocation12], 16
    $region45: #{tpu_custom_call.1} parent=1 // pred_fallthru
      _
    %90 = sfence
    %91 = vst [vmem:[#allocation2] sm:$0xff] 0.0
    %92 = vst [vmem:[#allocation2 + $0x20] sm:$0xff] 0.0
    %93 = vst [vmem:[#allocation2 + $0x40] sm:$0xff] 0.0
    %94 = vst [vmem:[#allocation2 + $0x60] sm:$0xff] 0.0
    %95 = vst [vmem:[#allocation2 + $0x18] sm:$0xff] 0.0
    %96 = vst [vmem:[#allocation2 + $0x38] sm:$0xff] 0.0
    %97 = vst [vmem:[#allocation2 + $0x58] sm:$0xff] 0.0
    %98 = vst [vmem:[#allocation2 + $0x78] sm:$0xff] 0.0
    %v99 = vld [vmem:[#allocation4] sm:$0xff]
    %v100 = vld [vmem:[#allocation4 + $0x8] sm:$0xff]
    %v101 = vld [vmem:[#allocation4 + $0x10] sm:$0xff]
    %v102 = vld [vmem:[#allocation4 + $0x18] sm:$0xff]
    %v103 = vld [vmem:[#allocation4 + $0x20] sm:$0xff]
    %v104 = vld [vmem:[#allocation4 + $0x28] sm:$0xff]
    %v105 = vld [vmem:[#allocation4 + $0x30] sm:$0xff]
    %v106 = vld [vmem:[#allocation4 + $0x38] sm:$0xff]
    %107 = vst [vmem:[#allocation2 + $0x8] sm:$0xff] %v99
    %108 = vst [vmem:[#allocation2 + $0x10] sm:$0xff] %v100
    %109 = vst [vmem:[#allocation2 + $0x28] sm:$0xff] %v101
    %110 = vst [vmem:[#allocation2 + $0x30] sm:$0xff] %v102
    %111 = vst [vmem:[#allocation2 + $0x48] sm:$0xff] %v103
    %112 = vst [vmem:[#allocation2 + $0x50] sm:$0xff] %v104
    %113 = vst [vmem:[#allocation2 + $0x68] sm:$0xff] %v105
    %114 = vst [vmem:[#allocation2 + $0x70] sm:$0xff] %v106
    %v115 = vld [vmem:[#allocation8] ss:$2 sm:$0x3]
    %v117 = vperm.slane %v115, 0
    %v118 = vperm.slane %v115, 1
    %s121 = scalar_lea.vmem [#allocation8], 1
    %v122 = vld [vmem:[%s121] ss:$2 sm:$0x3]
    %v124 = vperm.slane %v122, 0
    %v125 = vperm.slane %v122, 1
    %v128 = vld [vmem:[#allocation2] sm:$0xff]
    %v129 = vld [vmem:[#allocation2 + $0x8] sm:$0xff]
    %v130 = vld [vmem:[#allocation2 + $0x10] sm:$0xff]
    %s131 = sld [smem:[#allocation10]]
    %v132 = vstv %s131
    %v133 = vmul.f32 %v132, %v128
    %v134 = vmul.f32 %v132, %v129
    %v135 = vmul.f32 %v132, %v130
    %v136 = vadd.f32 %v133, 0.0
    %v137 = vadd.f32 %v134, 0.0
    %v138 = vadd.f32 %v135, 0.0
    %s139 = sld [smem:[#allocation10 + $0x24]]
    %v140 = vstv %s139
    %v141 = vmul.f32 %v140, %v128
    %v142 = vmul.f32 %v140, %v129
    %v143 = vmul.f32 %v140, %v130
    %v144 = vadd.f32 %v141, 0.0
    %v145 = vadd.f32 %v142, 0.0
    %v146 = vadd.f32 %v143, 0.0
    %s147 = sld [smem:[#allocation10 + $0x48]]
    %v148 = vstv %s147
    %v149 = vmul.f32 %v148, %v128
    %v150 = vmul.f32 %v148, %v129
    %v151 = vmul.f32 %v148, %v130
    %v152 = vadd.f32 %v149, 0.0
    %v153 = vadd.f32 %v150, 0.0
    %v154 = vadd.f32 %v151, 0.0
    %s155 = sld [smem:[#allocation10 + $0x6c]]
    %v156 = vstv %s155
    %v157 = vmul.f32 %v156, %v128
    %v158 = vmul.f32 %v156, %v129
    %v159 = vmul.f32 %v156, %v130
    %v160 = vadd.f32 %v157, 0.0
    %v161 = vadd.f32 %v158, 0.0
    %v162 = vadd.f32 %v159, 0.0
    %s163 = scalar_lea.vmem [#allocation2], 32
    %v164 = vld [vmem:[%s163] sm:$0xff]
    %v165 = vld [vmem:[%s163 + $0x8] sm:$0xff]
    %v166 = vld [vmem:[%s163 + $0x10] sm:$0xff]
    %s167 = sld [smem:[#allocation10 + $0x9]]
    %v168 = vstv %s167
    %v169 = vmul.f32 %v168, %v164
    %v170 = vmul.f32 %v168, %v165
    %v171 = vmul.f32 %v168, %v166
    %v172 = vadd.f32 %v136, %v169
    %v173 = vadd.f32 %v137, %v170
    %v174 = vadd.f32 %v138, %v171
    %s175 = sld [smem:[#allocation10 + $0x2d]]
    %v176 = vstv %s175
    %v177 = vmul.f32 %v176, %v164
    %v178 = vmul.f32 %v176, %v165
    %v179 = vmul.f32 %v176, %v166
    %v180 = vadd.f32 %v144, %v177
    %v181 = vadd.f32 %v145, %v178
    %v182 = vadd.f32 %v146, %v179
    %s183 = sld [smem:[#allocation10 + $0x51]]
    %v184 = vstv %s183
    %v185 = vmul.f32 %v184, %v164
    %v186 = vmul.f32 %v184, %v165
    %v187 = vmul.f32 %v184, %v166
    %v188 = vadd.f32 %v152, %v185
    %v189 = vadd.f32 %v153, %v186
    %v190 = vadd.f32 %v154, %v187
    %s191 = sld [smem:[#allocation10 + $0x75]]
    %v192 = vstv %s191
    %v193 = vmul.f32 %v192, %v164
    %v194 = vmul.f32 %v192, %v165
    %v195 = vmul.f32 %v192, %v166
    %v196 = vadd.f32 %v160, %v193
    %v197 = vadd.f32 %v161, %v194
    %v198 = vadd.f32 %v162, %v195
    %s199 = scalar_lea.vmem [#allocation2], 64
    %v200 = vld [vmem:[%s199] sm:$0xff]
    %v201 = vld [vmem:[%s199 + $0x8] sm:$0xff]
    %v202 = vld [vmem:[%s199 + $0x10] sm:$0xff]
    %s203 = sld [smem:[#allocation10 + $0x12]]
    %v204 = vstv %s203
    %v205 = vmul.f32 %v204, %v200
    %v206 = vmul.f32 %v204, %v201
    %v207 = vmul.f32 %v204, %v202
    %v208 = vadd.f32 %v172, %v205
    %v209 = vadd.f32 %v173, %v206
    %v210 = vadd.f32 %v174, %v207
    %s211 = sld [smem:[#allocation10 + $0x36]]
    %v212 = vstv %s211
    %v213 = vmul.f32 %v212, %v200
    %v214 = vmul.f32 %v212, %v201
    %v215 = vmul.f32 %v212, %v202
    %v216 = vadd.f32 %v180, %v213
    %v217 = vadd.f32 %v181, %v214
    %v218 = vadd.f32 %v182, %v215
    %s219 = sld [smem:[#allocation10 + $0x5a]]
    %v220 = vstv %s219
    %v221 = vmul.f32 %v220, %v200
    %v222 = vmul.f32 %v220, %v201
    %v223 = vmul.f32 %v220, %v202
    %v224 = vadd.f32 %v188, %v221
    %v225 = vadd.f32 %v189, %v222
    %v226 = vadd.f32 %v190, %v223
    %s227 = sld [smem:[#allocation10 + $0x7e]]
    %v228 = vstv %s227
    %v229 = vmul.f32 %v228, %v200
    %v230 = vmul.f32 %v228, %v201
    %v231 = vmul.f32 %v228, %v202
    %v232 = vadd.f32 %v196, %v229
    %v233 = vadd.f32 %v197, %v230
    %v234 = vadd.f32 %v198, %v231
    %s235 = scalar_lea.vmem [#allocation2], 96
    %v236 = vld [vmem:[%s235] sm:$0xff]
    %v237 = vld [vmem:[%s235 + $0x8] sm:$0xff]
    %v238 = vld [vmem:[%s235 + $0x10] sm:$0xff]
    %s239 = sld [smem:[#allocation10 + $0x1b]]
    %v240 = vstv %s239
    %v241 = vmul.f32 %v240, %v236
    %v242 = vmul.f32 %v240, %v237
    %v243 = vmul.f32 %v240, %v238
    %v244 = vadd.f32 %v208, %v241
    %v245 = vadd.f32 %v209, %v242
    %v246 = vadd.f32 %v210, %v243
    %s247 = sld [smem:[#allocation10 + $0x3f]]
    %v248 = vstv %s247
    %v249 = vmul.f32 %v248, %v236
    %v250 = vmul.f32 %v248, %v237
    %v251 = vmul.f32 %v248, %v238
    %v252 = vadd.f32 %v216, %v249
    %v253 = vadd.f32 %v217, %v250
    %v254 = vadd.f32 %v218, %v251
    %s255 = sld [smem:[#allocation10 + $0x63]]
    %v256 = vstv %s255
    %v257 = vmul.f32 %v256, %v236
    %v258 = vmul.f32 %v256, %v237
    %v259 = vmul.f32 %v256, %v238
    %v260 = vadd.f32 %v224, %v257
    %v261 = vadd.f32 %v225, %v258
    %v262 = vadd.f32 %v226, %v259
    %s263 = sld [smem:[#allocation10 + $0x87]]
    %v264 = vstv %s263
    %v265 = vmul.f32 %v264, %v236
    %v266 = vmul.f32 %v264, %v237
    %v267 = vmul.f32 %v264, %v238
    %v268 = vadd.f32 %v232, %v265
    %v269 = vadd.f32 %v233, %v266
    %v270 = vadd.f32 %v234, %v267
    %s271 = sld [smem:[#allocation10 + $0x3]]
    %v272 = vstv %s271
    %v273 = vmul.f32 %v272, %v128
    %v274 = vmul.f32 %v272, %v129
    %v275 = vmul.f32 %v272, %v130
    %279 = vrot.lane.b32.xlu0 %v273, 112
    %v280 = vpop.permute.xlu0 %279
    %281 = vrot.lane.b32.xlu0 %v274, 112
    %v282 = vpop.permute.xlu0 %281
    %283 = vrot.lane.b32.xlu0 %v275, 112
    %v284 = vpop.permute.xlu0 %283
    %vm285 = vcmask 916480
    %v286 = vsel %vm285, %v280, %v282
    %v287 = vsel %vm285, %v282, %v284
    %v291 = vadd.f32 %v244, %v286
    %v292 = vadd.f32 %v245, %v287
    %v293 = vadd.f32 %v246, %v284
    %s294 = sld [smem:[#allocation10 + $0x27]]
    %v295 = vstv %s294
    %v296 = vmul.f32 %v295, %v128
    %v297 = vmul.f32 %v295, %v129
    %v298 = vmul.f32 %v295, %v130
    %302 = vrot.lane.b32.xlu0 %v296, 112
    %v303 = vpop.permute.xlu0 %302
    %304 = vrot.lane.b32.xlu0 %v297, 112
    %v305 = vpop.permute.xlu0 %304
    %306 = vrot.lane.b32.xlu0 %v298, 112
    %v307 = vpop.permute.xlu0 %306
    %v308 = vsel %vm285, %v303, %v305
    %v309 = vsel %vm285, %v305, %v307
    %v313 = vadd.f32 %v252, %v308
    %v314 = vadd.f32 %v253, %v309
    %v315 = vadd.f32 %v254, %v307
    %s316 = sld [smem:[#allocation10 + $0x4b]]
    %v317 = vstv %s316
    %v318 = vmul.f32 %v317, %v128
    %v319 = vmul.f32 %v317, %v129
    %v320 = vmul.f32 %v317, %v130
    %324 = vrot.lane.b32.xlu0 %v318, 112
    %v325 = vpop.permute.xlu0 %324
    %326 = vrot.lane.b32.xlu0 %v319, 112
    %v327 = vpop.permute.xlu0 %326
    %328 = vrot.lane.b32.xlu0 %v320, 112
    %v329 = vpop.permute.xlu0 %328
    %v330 = vsel %vm285, %v325, %v327
    %v331 = vsel %vm285, %v327, %v329
    %v335 = vadd.f32 %v260, %v330
    %v336 = vadd.f32 %v261, %v331
    %v337 = vadd.f32 %v262, %v329
    %s338 = sld [smem:[#allocation10 + $0x6f]]
    %v339 = vstv %s338
    %v340 = vmul.f32 %v339, %v128
    %v341 = vmul.f32 %v339, %v129
    %v342 = vmul.f32 %v339, %v130
    %346 = vrot.lane.b32.xlu0 %v340, 112
    %v347 = vpop.permute.xlu0 %346
    %348 = vrot.lane.b32.xlu0 %v341, 112
    %v349 = vpop.permute.xlu0 %348
    %350 = vrot.lane.b32.xlu0 %v342, 112
    %v351 = vpop.permute.xlu0 %350
    %v352 = vsel %vm285, %v347, %v349
    %v353 = vsel %vm285, %v349, %v351
    %v357 = vadd.f32 %v268, %v352
    %v358 = vadd.f32 %v269, %v353
    %v359 = vadd.f32 %v270, %v351
    %s360 = sld [smem:[#allocation10 + $0xc]]
    %v361 = vstv %s360
    %v362 = vmul.f32 %v361, %v164
    %v363 = vmul.f32 %v361, %v165
    %v364 = vmul.f32 %v361, %v166
    %368 = vrot.lane.b32.xlu0 %v362, 112
    %v369 = vpop.permute.xlu0 %368
    %370 = vrot.lane.b32.xlu0 %v363, 112
    %v371 = vpop.permute.xlu0 %370
    %372 = vrot.lane.b32.xlu0 %v364, 112
    %v373 = vpop.permute.xlu0 %372
    %v374 = vsel %vm285, %v369, %v371
    %v375 = vsel %vm285, %v371, %v373
    %v379 = vadd.f32 %v291, %v374
    %v380 = vadd.f32 %v292, %v375
    %v381 = vadd.f32 %v293, %v373
    %s382 = sld [smem:[#allocation10 + $0x30]]
    %v383 = vstv %s382
    %v384 = vmul.f32 %v383, %v164
    %v385 = vmul.f32 %v383, %v165
    %v386 = vmul.f32 %v383, %v166
    %390 = vrot.lane.b32.xlu0 %v384, 112
    %v391 = vpop.permute.xlu0 %390
    %392 = vrot.lane.b32.xlu0 %v385, 112
    %v393 = vpop.permute.xlu0 %392
    %394 = vrot.lane.b32.xlu0 %v386, 112
    %v395 = vpop.permute.xlu0 %394
    %v396 = vsel %vm285, %v391, %v393
    %v397 = vsel %vm285, %v393, %v395
    %v401 = vadd.f32 %v313, %v396
    %v402 = vadd.f32 %v314, %v397
    %v403 = vadd.f32 %v315, %v395
    %s404 = sld [smem:[#allocation10 + $0x54]]
    %v405 = vstv %s404
    %v406 = vmul.f32 %v405, %v164
    %v407 = vmul.f32 %v405, %v165
    %v408 = vmul.f32 %v405, %v166
    %412 = vrot.lane.b32.xlu0 %v406, 112
    %v413 = vpop.permute.xlu0 %412
    %414 = vrot.lane.b32.xlu0 %v407, 112
    %v415 = vpop.permute.xlu0 %414
    %416 = vrot.lane.b32.xlu0 %v408, 112
    %v417 = vpop.permute.xlu0 %416
    %v418 = vsel %vm285, %v413, %v415
    %v419 = vsel %vm285, %v415, %v417
    %v423 = vadd.f32 %v335, %v418
    %v424 = vadd.f32 %v336, %v419
    %v425 = vadd.f32 %v337, %v417
    %s426 = sld [smem:[#allocation10 + $0x78]]
    %v427 = vstv %s426
    %v428 = vmul.f32 %v427, %v164
    %v429 = vmul.f32 %v427, %v165
    %v430 = vmul.f32 %v427, %v166
    %434 = vrot.lane.b32.xlu0 %v428, 112
    %v435 = vpop.permute.xlu0 %434
    %436 = vrot.lane.b32.xlu0 %v429, 112
    %v437 = vpop.permute.xlu0 %436
    %438 = vrot.lane.b32.xlu0 %v430, 112
    %v439 = vpop.permute.xlu0 %438
    %v440 = vsel %vm285, %v435, %v437
    %v441 = vsel %vm285, %v437, %v439
    %v445 = vadd.f32 %v357, %v440
    %v446 = vadd.f32 %v358, %v441
    %v447 = vadd.f32 %v359, %v439
    %s448 = sld [smem:[#allocation10 + $0x15]]
    %v449 = vstv %s448
    %v450 = vmul.f32 %v449, %v200
    %v451 = vmul.f32 %v449, %v201
    %v452 = vmul.f32 %v449, %v202
    %456 = vrot.lane.b32.xlu0 %v450, 112
    %v457 = vpop.permute.xlu0 %456
    %458 = vrot.lane.b32.xlu0 %v451, 112
    %v459 = vpop.permute.xlu0 %458
    %460 = vrot.lane.b32.xlu0 %v452, 112
    %v461 = vpop.permute.xlu0 %460
    %v462 = vsel %vm285, %v457, %v459
    %v463 = vsel %vm285, %v459, %v461
    %v467 = vadd.f32 %v379, %v462
    %v468 = vadd.f32 %v380, %v463
    %v469 = vadd.f32 %v381, %v461
    %s470 = sld [smem:[#allocation10 + $0x39]]
    %v471 = vstv %s470
    %v472 = vmul.f32 %v471, %v200
    %v473 = vmul.f32 %v471, %v201
    %v474 = vmul.f32 %v471, %v202
    %478 = vrot.lane.b32.xlu0 %v472, 112
    %v479 = vpop.permute.xlu0 %478
    %480 = vrot.lane.b32.xlu0 %v473, 112
    %v481 = vpop.permute.xlu0 %480
    %482 = vrot.lane.b32.xlu0 %v474, 112
    %v483 = vpop.permute.xlu0 %482
    %v484 = vsel %vm285, %v479, %v481
    %v485 = vsel %vm285, %v481, %v483
    %v489 = vadd.f32 %v401, %v484
    %v490 = vadd.f32 %v402, %v485
    %v491 = vadd.f32 %v403, %v483
    %s492 = sld [smem:[#allocation10 + $0x5d]]
    %v493 = vstv %s492
    %v494 = vmul.f32 %v493, %v200
    %v495 = vmul.f32 %v493, %v201
    %v496 = vmul.f32 %v493, %v202
    %500 = vrot.lane.b32.xlu0 %v494, 112
    %v501 = vpop.permute.xlu0 %500
    %502 = vrot.lane.b32.xlu0 %v495, 112
    %v503 = vpop.permute.xlu0 %502
    %504 = vrot.lane.b32.xlu0 %v496, 112
    %v505 = vpop.permute.xlu0 %504
    %v506 = vsel %vm285, %v501, %v503
    %v507 = vsel %vm285, %v503, %v505
    %v511 = vadd.f32 %v423, %v506
    %v512 = vadd.f32 %v424, %v507
    %v513 = vadd.f32 %v425, %v505
    %s514 = sld [smem:[#allocation10 + $0x81]]
    %v515 = vstv %s514
    %v516 = vmul.f32 %v515, %v200
    %v517 = vmul.f32 %v515, %v201
    %v518 = vmul.f32 %v515, %v202
    %522 = vrot.lane.b32.xlu0 %v516, 112
    %v523 = vpop.permute.xlu0 %522
    %524 = vrot.lane.b32.xlu0 %v517, 112
    %v525 = vpop.permute.xlu0 %524
    %526 = vrot.lane.b32.xlu0 %v518, 112
    %v527 = vpop.permute.xlu0 %526
    %v528 = vsel %vm285, %v523, %v525
    %v529 = vsel %vm285, %v525, %v527
    %v533 = vadd.f32 %v445, %v528
    %v534 = vadd.f32 %v446, %v529
    %v535 = vadd.f32 %v447, %v527
    %s536 = sld [smem:[#allocation10 + $0x1e]]
    %v537 = vstv %s536
    %v538 = vmul.f32 %v537, %v236
    %v539 = vmul.f32 %v537, %v237
    %v540 = vmul.f32 %v537, %v238
    %544 = vrot.lane.b32.xlu0 %v538, 112
    %v545 = vpop.permute.xlu0 %544
    %546 = vrot.lane.b32.xlu0 %v539, 112
    %v547 = vpop.permute.xlu0 %546
    %548 = vrot.lane.b32.xlu0 %v540, 112
    %v549 = vpop.permute.xlu0 %548
    %v550 = vsel %vm285, %v545, %v547
    %v551 = vsel %vm285, %v547, %v549
    %v555 = vadd.f32 %v467, %v550
    %v556 = vadd.f32 %v468, %v551
    %v557 = vadd.f32 %v469, %v549
    %s558 = sld [smem:[#allocation10 + $0x42]]
    %v559 = vstv %s558
    %v560 = vmul.f32 %v559, %v236
    %v561 = vmul.f32 %v559, %v237
    %v562 = vmul.f32 %v559, %v238
    %566 = vrot.lane.b32.xlu0 %v560, 112
    %v567 = vpop.permute.xlu0 %566
    %568 = vrot.lane.b32.xlu0 %v561, 112
    %v569 = vpop.permute.xlu0 %568
    %570 = vrot.lane.b32.xlu0 %v562, 112
    %v571 = vpop.permute.xlu0 %570
    %v572 = vsel %vm285, %v567, %v569
    %v573 = vsel %vm285, %v569, %v571
    %v577 = vadd.f32 %v489, %v572
    %v578 = vadd.f32 %v490, %v573
    %v579 = vadd.f32 %v491, %v571
    %s580 = sld [smem:[#allocation10 + $0x66]]
    %v581 = vstv %s580
    %v582 = vmul.f32 %v581, %v236
    %v583 = vmul.f32 %v581, %v237
    %v584 = vmul.f32 %v581, %v238
    %588 = vrot.lane.b32.xlu0 %v582, 112
    %v589 = vpop.permute.xlu0 %588
    %590 = vrot.lane.b32.xlu0 %v583, 112
    %v591 = vpop.permute.xlu0 %590
    %592 = vrot.lane.b32.xlu0 %v584, 112
    %v593 = vpop.permute.xlu0 %592
    %v594 = vsel %vm285, %v589, %v591
    %v595 = vsel %vm285, %v591, %v593
    %v599 = vadd.f32 %v511, %v594
    %v600 = vadd.f32 %v512, %v595
    %v601 = vadd.f32 %v513, %v593
    %s602 = sld [smem:[#allocation10 + $0x8a]]
    %v603 = vstv %s602
    %v604 = vmul.f32 %v603, %v236
    %v605 = vmul.f32 %v603, %v237
    %v606 = vmul.f32 %v603, %v238
    %610 = vrot.lane.b32.xlu0 %v604, 112
    %v611 = vpop.permute.xlu0 %610
    %612 = vrot.lane.b32.xlu0 %v605, 112
    %v613 = vpop.permute.xlu0 %612
    %614 = vrot.lane.b32.xlu0 %v606, 112
    %v615 = vpop.permute.xlu0 %614
    %v616 = vsel %vm285, %v611, %v613
    %v617 = vsel %vm285, %v613, %v615
    %v621 = vadd.f32 %v533, %v616
    %v622 = vadd.f32 %v534, %v617
    %v623 = vadd.f32 %v535, %v615
    %v624 = vld [vmem:[#allocation2 + $0x8] sm:$0xff]
    %v625 = vld [vmem:[#allocation2 + $0x10] sm:$0xff]
    %v626 = vld [vmem:[#allocation2 + $0x18] sm:$0xff]
    %s627 = sld [smem:[#allocation10 + $0x6]]
    %v628 = vstv %s627
    %v629 = vmul.f32 %v628, %v624
    %v630 = vmul.f32 %v628, %v625
    %v631 = vmul.f32 %v628, %v626
    %635 = vrot.lane.b32.xlu0 %v629, 96
    %v636 = vpop.permute.xlu0 %635
    %637 = vrot.lane.b32.xlu0 %v630, 96
    %v638 = vpop.permute.xlu0 %637
    %639 = vrot.lane.b32.xlu0 %v631, 96
    %v640 = vpop.permute.xlu0 %639
    %vm641 = vcmask 785408
    %v642 = vsel %vm641, %v636, %v638
    %v643 = vsel %vm641, %v638, %v640
    %v647 = vadd.f32 %v555, %v636
    %v648 = vadd.f32 %v556, %v642
    %v649 = vadd.f32 %v557, %v643
    %s650 = sld [smem:[#allocation10 + $0x2a]]
    %v651 = vstv %s650
    %v652 = vmul.f32 %v651, %v624
    %v653 = vmul.f32 %v651, %v625
    %v654 = vmul.f32 %v651, %v626
    %658 = vrot.lane.b32.xlu0 %v652, 96
    %v659 = vpop.permute.xlu0 %658
    %660 = vrot.lane.b32.xlu0 %v653, 96
    %v661 = vpop.permute.xlu0 %660
    %662 = vrot.lane.b32.xlu0 %v654, 96
    %v663 = vpop.permute.xlu0 %662
    %v664 = vsel %vm641, %v659, %v661
    %v665 = vsel %vm641, %v661, %v663
    %v669 = vadd.f32 %v577, %v659
    %v670 = vadd.f32 %v578, %v664
    %v671 = vadd.f32 %v579, %v665
    %s672 = sld [smem:[#allocation10 + $0x4e]]
    %v673 = vstv %s672
    %v674 = vmul.f32 %v673, %v624
    %v675 = vmul.f32 %v673, %v625
    %v676 = vmul.f32 %v673, %v626
    %680 = vrot.lane.b32.xlu0 %v674, 96
    %v681 = vpop.permute.xlu0 %680
    %682 = vrot.lane.b32.xlu0 %v675, 96
    %v683 = vpop.permute.xlu0 %682
    %684 = vrot.lane.b32.xlu0 %v676, 96
    %v685 = vpop.permute.xlu0 %684
    %v686 = vsel %vm641, %v681, %v683
    %v687 = vsel %vm641, %v683, %v685
    %v691 = vadd.f32 %v599, %v681
    %v692 = vadd.f32 %v600, %v686
    %v693 = vadd.f32 %v601, %v687
    %s694 = sld [smem:[#allocation10 + $0x72]]
    %v695 = vstv %s694
    %v696 = vmul.f32 %v695, %v624
    %v697 = vmul.f32 %v695, %v625
    %v698 = vmul.f32 %v695, %v626
    %702 = vrot.lane.b32.xlu0 %v696, 96
    %v703 = vpop.permute.xlu0 %702
    %704 = vrot.lane.b32.xlu0 %v697, 96
    %v705 = vpop.permute.xlu0 %704
    %706 = vrot.lane.b32.xlu0 %v698, 96
    %v707 = vpop.permute.xlu0 %706
    %v708 = vsel %vm641, %v703, %v705
    %v709 = vsel %vm641, %v705, %v707
    %v713 = vadd.f32 %v621, %v703
    %v714 = vadd.f32 %v622, %v708
    %v715 = vadd.f32 %v623, %v709
    %v716 = vld [vmem:[%s163 + $0x8] sm:$0xff]
    %v717 = vld [vmem:[%s163 + $0x10] sm:$0xff]
    %v718 = vld [vmem:[%s163 + $0x18] sm:$0xff]
    %s719 = sld [smem:[#allocation10 + $0xf]]
    %v720 = vstv %s719
    %v721 = vmul.f32 %v720, %v716
    %v722 = vmul.f32 %v720, %v717
    %v723 = vmul.f32 %v720, %v718
    %727 = vrot.lane.b32.xlu0 %v721, 96
    %v728 = vpop.permute.xlu0 %727
    %729 = vrot.lane.b32.xlu0 %v722, 96
    %v730 = vpop.permute.xlu0 %729
    %731 = vrot.lane.b32.xlu0 %v723, 96
    %v732 = vpop.permute.xlu0 %731
    %v733 = vsel %vm641, %v728, %v730
    %v734 = vsel %vm641, %v730, %v732
    %v738 = vadd.f32 %v647, %v728
    %v739 = vadd.f32 %v648, %v733
    %v740 = vadd.f32 %v649, %v734
    %s741 = sld [smem:[#allocation10 + $0x33]]
    %v742 = vstv %s741
    %v743 = vmul.f32 %v742, %v716
    %v744 = vmul.f32 %v742, %v717
    %v745 = vmul.f32 %v742, %v718
    %749 = vrot.lane.b32.xlu0 %v743, 96
    %v750 = vpop.permute.xlu0 %749
    %751 = vrot.lane.b32.xlu0 %v744, 96
    %v752 = vpop.permute.xlu0 %751
    %753 = vrot.lane.b32.xlu0 %v745, 96
    %v754 = vpop.permute.xlu0 %753
    %v755 = vsel %vm641, %v750, %v752
    %v756 = vsel %vm641, %v752, %v754
    %v760 = vadd.f32 %v669, %v750
    %v761 = vadd.f32 %v670, %v755
    %v762 = vadd.f32 %v671, %v756
    %s763 = sld [smem:[#allocation10 + $0x57]]
    %v764 = vstv %s763
    %v765 = vmul.f32 %v764, %v716
    %v766 = vmul.f32 %v764, %v717
    %v767 = vmul.f32 %v764, %v718
    %771 = vrot.lane.b32.xlu0 %v765, 96
    %v772 = vpop.permute.xlu0 %771
    %773 = vrot.lane.b32.xlu0 %v766, 96
    %v774 = vpop.permute.xlu0 %773
    %775 = vrot.lane.b32.xlu0 %v767, 96
    %v776 = vpop.permute.xlu0 %775
    %v777 = vsel %vm641, %v772, %v774
    %v778 = vsel %vm641, %v774, %v776
    %v782 = vadd.f32 %v691, %v772
    %v783 = vadd.f32 %v692, %v777
    %v784 = vadd.f32 %v693, %v778
    %s785 = sld [smem:[#allocation10 + $0x7b]]
    %v786 = vstv %s785
    %v787 = vmul.f32 %v786, %v716
    %v788 = vmul.f32 %v786, %v717
    %v789 = vmul.f32 %v786, %v718
    %793 = vrot.lane.b32.xlu0 %v787, 96
    %v794 = vpop.permute.xlu0 %793
    %795 = vrot.lane.b32.xlu0 %v788, 96
    %v796 = vpop.permute.xlu0 %795
    %797 = vrot.lane.b32.xlu0 %v789, 96
    %v798 = vpop.permute.xlu0 %797
    %v799 = vsel %vm641, %v794, %v796
    %v800 = vsel %vm641, %v796, %v798
    %v804 = vadd.f32 %v713, %v794
    %v805 = vadd.f32 %v714, %v799
    %v806 = vadd.f32 %v715, %v800
    %v807 = vld [vmem:[%s199 + $0x8] sm:$0xff]
    %v808 = vld [vmem:[%s199 + $0x10] sm:$0xff]
    %v809 = vld [vmem:[%s199 + $0x18] sm:$0xff]
    %s810 = sld [smem:[#allocation10 + $0x18]]
    %v811 = vstv %s810
    %v812 = vmul.f32 %v811, %v807
    %v813 = vmul.f32 %v811, %v808
    %v814 = vmul.f32 %v811, %v809
    %818 = vrot.lane.b32.xlu0 %v812, 96
    %v819 = vpop.permute.xlu0 %818
    %820 = vrot.lane.b32.xlu0 %v813, 96
    %v821 = vpop.permute.xlu0 %820
    %822 = vrot.lane.b32.xlu0 %v814, 96
    %v823 = vpop.permute.xlu0 %822
    %v824 = vsel %vm641, %v819, %v821
    %v825 = vsel %vm641, %v821, %v823
    %v829 = vadd.f32 %v738, %v819
    %v830 = vadd.f32 %v739, %v824
    %v831 = vadd.f32 %v740, %v825
    %s832 = sld [smem:[#allocation10 + $0x3c]]
    %v833 = vstv %s832
    %v834 = vmul.f32 %v833, %v807
    %v835 = vmul.f32 %v833, %v808
    %v836 = vmul.f32 %v833, %v809
    %840 = vrot.lane.b32.xlu0 %v834, 96
    %v841 = vpop.permute.xlu0 %840
    %842 = vrot.lane.b32.xlu0 %v835, 96
    %v843 = vpop.permute.xlu0 %842
    %844 = vrot.lane.b32.xlu0 %v836, 96
    %v845 = vpop.permute.xlu0 %844
    %v846 = vsel %vm641, %v841, %v843
    %v847 = vsel %vm641, %v843, %v845
    %v851 = vadd.f32 %v760, %v841
    %v852 = vadd.f32 %v761, %v846
    %v853 = vadd.f32 %v762, %v847
    %s854 = sld [smem:[#allocation10 + $0x60]]
    %v855 = vstv %s854
    %v856 = vmul.f32 %v855, %v807
    %v857 = vmul.f32 %v855, %v808
    %v858 = vmul.f32 %v855, %v809
    %862 = vrot.lane.b32.xlu0 %v856, 96
    %v863 = vpop.permute.xlu0 %862
    %864 = vrot.lane.b32.xlu0 %v857, 96
    %v865 = vpop.permute.xlu0 %864
    %866 = vrot.lane.b32.xlu0 %v858, 96
    %v867 = vpop.permute.xlu0 %866
    %v868 = vsel %vm641, %v863, %v865
    %v869 = vsel %vm641, %v865, %v867
    %v873 = vadd.f32 %v782, %v863
    %v874 = vadd.f32 %v783, %v868
    %v875 = vadd.f32 %v784, %v869
    %s876 = sld [smem:[#allocation10 + $0x84]]
    %v877 = vstv %s876
    %v878 = vmul.f32 %v877, %v807
    %v879 = vmul.f32 %v877, %v808
    %v880 = vmul.f32 %v877, %v809
    %884 = vrot.lane.b32.xlu0 %v878, 96
    %v885 = vpop.permute.xlu0 %884
    %886 = vrot.lane.b32.xlu0 %v879, 96
    %v887 = vpop.permute.xlu0 %886
    %888 = vrot.lane.b32.xlu0 %v880, 96
    %v889 = vpop.permute.xlu0 %888
    %v890 = vsel %vm641, %v885, %v887
    %v891 = vsel %vm641, %v887, %v889
    %v895 = vadd.f32 %v804, %v885
    %v896 = vadd.f32 %v805, %v890
    %v897 = vadd.f32 %v806, %v891
    %v898 = vld [vmem:[%s235 + $0x8] sm:$0xff]
    %v899 = vld [vmem:[%s235 + $0x10] sm:$0xff]
    %v900 = vld [vmem:[%s235 + $0x18] sm:$0xff]
    %s901 = sld [smem:[#allocation10 + $0x21]]
    %v902 = vstv %s901
    %v903 = vmul.f32 %v902, %v898
    %v904 = vmul.f32 %v902, %v899
    %v905 = vmul.f32 %v902, %v900
    %909 = vrot.lane.b32.xlu0 %v903, 96
    %v910 = vpop.permute.xlu0 %909
    %911 = vrot.lane.b32.xlu0 %v904, 96
    %v912 = vpop.permute.xlu0 %911
    %913 = vrot.lane.b32.xlu0 %v905, 96
    %v914 = vpop.permute.xlu0 %913
    %v915 = vsel %vm641, %v910, %v912
    %v916 = vsel %vm641, %v912, %v914
    %v920 = vadd.f32 %v829, %v910
    %v921 = vadd.f32 %v830, %v915
    %v922 = vadd.f32 %v831, %v916
    %s923 = sld [smem:[#allocation10 + $0x45]]
    %v924 = vstv %s923
    %v925 = vmul.f32 %v924, %v898
    %v926 = vmul.f32 %v924, %v899
    %v927 = vmul.f32 %v924, %v900
    %931 = vrot.lane.b32.xlu0 %v925, 96
    %v932 = vpop.permute.xlu0 %931
    %933 = vrot.lane.b32.xlu0 %v926, 96
    %v934 = vpop.permute.xlu0 %933
    %935 = vrot.lane.b32.xlu0 %v927, 96
    %v936 = vpop.permute.xlu0 %935
    %v937 = vsel %vm641, %v932, %v934
    %v938 = vsel %vm641, %v934, %v936
    %v942 = vadd.f32 %v851, %v932
    %v943 = vadd.f32 %v852, %v937
    %v944 = vadd.f32 %v853, %v938
    %s945 = sld [smem:[#allocation10 + $0x69]]
    %v946 = vstv %s945
    %v947 = vmul.f32 %v946, %v898
    %v948 = vmul.f32 %v946, %v899
    %v949 = vmul.f32 %v946, %v900
    %953 = vrot.lane.b32.xlu0 %v947, 96
    %v954 = vpop.permute.xlu0 %953
    %955 = vrot.lane.b32.xlu0 %v948, 96
    %v956 = vpop.permute.xlu0 %955
    %957 = vrot.lane.b32.xlu0 %v949, 96
    %v958 = vpop.permute.xlu0 %957
    %v959 = vsel %vm641, %v954, %v956
    %v960 = vsel %vm641, %v956, %v958
    %v964 = vadd.f32 %v873, %v954
    %v965 = vadd.f32 %v874, %v959
    %v966 = vadd.f32 %v875, %v960
    %s967 = sld [smem:[#allocation10 + $0x8d]]
    %v968 = vstv %s967
    %v969 = vmul.f32 %v968, %v898
    %v970 = vmul.f32 %v968, %v899
    %v971 = vmul.f32 %v968, %v900
    %975 = vrot.lane.b32.xlu0 %v969, 96
    %v976 = vpop.permute.xlu0 %975
    %977 = vrot.lane.b32.xlu0 %v970, 96
    %v978 = vpop.permute.xlu0 %977
    %979 = vrot.lane.b32.xlu0 %v971, 96
    %v980 = vpop.permute.xlu0 %979
    %v981 = vsel %vm641, %v976, %v978
    %v982 = vsel %vm641, %v978, %v980
    %v986 = vadd.f32 %v895, %v976
    %v987 = vadd.f32 %v896, %v981
    %v988 = vadd.f32 %v897, %v982
    %992 = vrot.lane.b32.xlu0 %v920, 17
    %v993 = vpop.permute.xlu0 %992
    %994 = vrot.lane.b32.xlu0 %v921, 17
    %v995 = vpop.permute.xlu0 %994
    %996 = vrot.lane.b32.xlu0 %v922, 17
    %v997 = vpop.permute.xlu0 %996
    %vm998 = vcmask 138240
    %v999 = vsel %vm998, %v993, %v995
    %v1000 = vsel %vm998, %v995, %v997
    %v1003 = vmul.f32 %v117, %v999
    %v1004 = vmul.f32 %v118, %v1000
    %v1005 = vadd.f32 %v1003, 0.0
    %v1006 = vadd.f32 %v1004, 0.0
    %1010 = vrot.lane.b32.xlu0 %v942, 17
    %v1011 = vpop.permute.xlu0 %1010
    %1012 = vrot.lane.b32.xlu0 %v943, 17
    %v1013 = vpop.permute.xlu0 %1012
    %1014 = vrot.lane.b32.xlu0 %v944, 17
    %v1015 = vpop.permute.xlu0 %1014
    %v1016 = vsel %vm998, %v1011, %v1013
    %v1017 = vsel %vm998, %v1013, %v1015
    %v1020 = vmul.f32 %v117, %v1016
    %v1021 = vmul.f32 %v118, %v1017
    %v1022 = vadd.f32 %v1020, 0.0
    %v1023 = vadd.f32 %v1021, 0.0
    %1027 = vrot.lane.b32.xlu0 %v964, 17
    %v1028 = vpop.permute.xlu0 %1027
    %1029 = vrot.lane.b32.xlu0 %v965, 17
    %v1030 = vpop.permute.xlu0 %1029
    %1031 = vrot.lane.b32.xlu0 %v966, 17
    %v1032 = vpop.permute.xlu0 %1031
    %v1033 = vsel %vm998, %v1028, %v1030
    %v1034 = vsel %vm998, %v1030, %v1032
    %v1037 = vmul.f32 %v117, %v1033
    %v1038 = vmul.f32 %v118, %v1034
    %v1039 = vadd.f32 %v1037, 0.0
    %v1040 = vadd.f32 %v1038, 0.0
    %1044 = vrot.lane.b32.xlu0 %v986, 17
    %v1045 = vpop.permute.xlu0 %1044
    %1046 = vrot.lane.b32.xlu0 %v987, 17
    %v1047 = vpop.permute.xlu0 %1046
    %1048 = vrot.lane.b32.xlu0 %v988, 17
    %v1049 = vpop.permute.xlu0 %1048
    %v1050 = vsel %vm998, %v1045, %v1047
    %v1051 = vsel %vm998, %v1047, %v1049
    %v1054 = vmul.f32 %v117, %v1050
    %v1055 = vmul.f32 %v118, %v1051
    %v1056 = vadd.f32 %v1054, 0.0
    %v1057 = vadd.f32 %v1055, 0.0
    %s1058 = sld [smem:[#allocation10 + $0x1]]
    %v1059 = vstv %s1058
    %v1060 = vmul.f32 %v1059, %v128
    %v1061 = vmul.f32 %v1059, %v129
    %v1062 = vmul.f32 %v1059, %v130
    %1066 = vrot.lane.b32.xlu0 %v1060, 16
    %v1067 = vpop.permute.xlu0 %1066
    %1068 = vrot.lane.b32.xlu0 %v1061, 16
    %v1069 = vpop.permute.xlu0 %1068
    %1070 = vrot.lane.b32.xlu0 %v1062, 16
    %v1071 = vpop.permute.xlu0 %1070
    %vm1072 = vcmask 130048
    %v1073 = vsel %vm1072, %v1067, %v1069
    %v1074 = vsel %vm1072, %v1069, %v1071
    %v1077 = vadd.f32 %v1005, %v1073
    %v1078 = vadd.f32 %v1006, %v1074
    %s1079 = sld [smem:[#allocation10 + $0x25]]
    %v1080 = vstv %s1079
    %v1081 = vmul.f32 %v1080, %v128
    %v1082 = vmul.f32 %v1080, %v129
    %v1083 = vmul.f32 %v1080, %v130
    %1087 = vrot.lane.b32.xlu0 %v1081, 16
    %v1088 = vpop.permute.xlu0 %1087
    %1089 = vrot.lane.b32.xlu0 %v1082, 16
    %v1090 = vpop.permute.xlu0 %1089
    %1091 = vrot.lane.b32.xlu0 %v1083, 16
    %v1092 = vpop.permute.xlu0 %1091
    %v1093 = vsel %vm1072, %v1088, %v1090
    %v1094 = vsel %vm1072, %v1090, %v1092
    %v1097 = vadd.f32 %v1022, %v1093
    %v1098 = vadd.f32 %v1023, %v1094
    %s1099 = sld [smem:[#allocation10 + $0x49]]
    %v1100 = vstv %s1099
    %v1101 = vmul.f32 %v1100, %v128
    %v1102 = vmul.f32 %v1100, %v129
    %v1103 = vmul.f32 %v1100, %v130
    %1107 = vrot.lane.b32.xlu0 %v1101, 16
    %v1108 = vpop.permute.xlu0 %1107
    %1109 = vrot.lane.b32.xlu0 %v1102, 16
    %v1110 = vpop.permute.xlu0 %1109
    %1111 = vrot.lane.b32.xlu0 %v1103, 16
    %v1112 = vpop.permute.xlu0 %1111
    %v1113 = vsel %vm1072, %v1108, %v1110
    %v1114 = vsel %vm1072, %v1110, %v1112
    %v1117 = vadd.f32 %v1039, %v1113
    %v1118 = vadd.f32 %v1040, %v1114
    %s1119 = sld [smem:[#allocation10 + $0x6d]]
    %v1120 = vstv %s1119
    %v1121 = vmul.f32 %v1120, %v128
    %v1122 = vmul.f32 %v1120, %v129
    %v1123 = vmul.f32 %v1120, %v130
    %1127 = vrot.lane.b32.xlu0 %v1121, 16
    %v1128 = vpop.permute.xlu0 %1127
    %1129 = vrot.lane.b32.xlu0 %v1122, 16
    %v1130 = vpop.permute.xlu0 %1129
    %1131 = vrot.lane.b32.xlu0 %v1123, 16
    %v1132 = vpop.permute.xlu0 %1131
    %v1133 = vsel %vm1072, %v1128, %v1130
    %v1134 = vsel %vm1072, %v1130, %v1132
    %v1137 = vadd.f32 %v1056, %v1133
    %v1138 = vadd.f32 %v1057, %v1134
    %s1139 = sld [smem:[#allocation10 + $0xa]]
    %v1140 = vstv %s1139
    %v1141 = vmul.f32 %v1140, %v164
    %v1142 = vmul.f32 %v1140, %v165
    %v1143 = vmul.f32 %v1140, %v166
    %1147 = vrot.lane.b32.xlu0 %v1141, 16
    %v1148 = vpop.permute.xlu0 %1147
    %1149 = vrot.lane.b32.xlu0 %v1142, 16
    %v1150 = vpop.permute.xlu0 %1149
    %1151 = vrot.lane.b32.xlu0 %v1143, 16
    %v1152 = vpop.permute.xlu0 %1151
    %v1153 = vsel %vm1072, %v1148, %v1150
    %v1154 = vsel %vm1072, %v1150, %v1152
    %v1157 = vadd.f32 %v1077, %v1153
    %v1158 = vadd.f32 %v1078, %v1154
    %s1159 = sld [smem:[#allocation10 + $0x2e]]
    %v1160 = vstv %s1159
    %v1161 = vmul.f32 %v1160, %v164
    %v1162 = vmul.f32 %v1160, %v165
    %v1163 = vmul.f32 %v1160, %v166
    %1167 = vrot.lane.b32.xlu0 %v1161, 16
    %v1168 = vpop.permute.xlu0 %1167
    %1169 = vrot.lane.b32.xlu0 %v1162, 16
    %v1170 = vpop.permute.xlu0 %1169
    %1171 = vrot.lane.b32.xlu0 %v1163, 16
    %v1172 = vpop.permute.xlu0 %1171
    %v1173 = vsel %vm1072, %v1168, %v1170
    %v1174 = vsel %vm1072, %v1170, %v1172
    %v1177 = vadd.f32 %v1097, %v1173
    %v1178 = vadd.f32 %v1098, %v1174
    %s1179 = sld [smem:[#allocation10 + $0x52]]
    %v1180 = vstv %s1179
    %v1181 = vmul.f32 %v1180, %v164
    %v1182 = vmul.f32 %v1180, %v165
    %v1183 = vmul.f32 %v1180, %v166
    %1187 = vrot.lane.b32.xlu0 %v1181, 16
    %v1188 = vpop.permute.xlu0 %1187
    %1189 = vrot.lane.b32.xlu0 %v1182, 16
    %v1190 = vpop.permute.xlu0 %1189
    %1191 = vrot.lane.b32.xlu0 %v1183, 16
    %v1192 = vpop.permute.xlu0 %1191
    %v1193 = vsel %vm1072, %v1188, %v1190
    %v1194 = vsel %vm1072, %v1190, %v1192
    %v1197 = vadd.f32 %v1117, %v1193
    %v1198 = vadd.f32 %v1118, %v1194
    %s1199 = sld [smem:[#allocation10 + $0x76]]
    %v1200 = vstv %s1199
    %v1201 = vmul.f32 %v1200, %v164
    %v1202 = vmul.f32 %v1200, %v165
    %v1203 = vmul.f32 %v1200, %v166
    %1207 = vrot.lane.b32.xlu0 %v1201, 16
    %v1208 = vpop.permute.xlu0 %1207
    %1209 = vrot.lane.b32.xlu0 %v1202, 16
    %v1210 = vpop.permute.xlu0 %1209
    %1211 = vrot.lane.b32.xlu0 %v1203, 16
    %v1212 = vpop.permute.xlu0 %1211
    %v1213 = vsel %vm1072, %v1208, %v1210
    %v1214 = vsel %vm1072, %v1210, %v1212
    %v1217 = vadd.f32 %v1137, %v1213
    %v1218 = vadd.f32 %v1138, %v1214
    %s1219 = sld [smem:[#allocation10 + $0x13]]
    %v1220 = vstv %s1219
    %v1221 = vmul.f32 %v1220, %v200
    %v1222 = vmul.f32 %v1220, %v201
    %v1223 = vmul.f32 %v1220, %v202
    %1227 = vrot.lane.b32.xlu0 %v1221, 16
    %v1228 = vpop.permute.xlu0 %1227
    %1229 = vrot.lane.b32.xlu0 %v1222, 16
    %v1230 = vpop.permute.xlu0 %1229
    %1231 = vrot.lane.b32.xlu0 %v1223, 16
    %v1232 = vpop.permute.xlu0 %1231
    %v1233 = vsel %vm1072, %v1228, %v1230
    %v1234 = vsel %vm1072, %v1230, %v1232
    %v1237 = vadd.f32 %v1157, %v1233
    %v1238 = vadd.f32 %v1158, %v1234
    %s1239 = sld [smem:[#allocation10 + $0x37]]
    %v1240 = vstv %s1239
    %v1241 = vmul.f32 %v1240, %v200
    %v1242 = vmul.f32 %v1240, %v201
    %v1243 = vmul.f32 %v1240, %v202
    %1247 = vrot.lane.b32.xlu0 %v1241, 16
    %v1248 = vpop.permute.xlu0 %1247
    %1249 = vrot.lane.b32.xlu0 %v1242, 16
    %v1250 = vpop.permute.xlu0 %1249
    %1251 = vrot.lane.b32.xlu0 %v1243, 16
    %v1252 = vpop.permute.xlu0 %1251
    %v1253 = vsel %vm1072, %v1248, %v1250
    %v1254 = vsel %vm1072, %v1250, %v1252
    %v1257 = vadd.f32 %v1177, %v1253
    %v1258 = vadd.f32 %v1178, %v1254
    %s1259 = sld [smem:[#allocation10 + $0x5b]]
    %v1260 = vstv %s1259
    %v1261 = vmul.f32 %v1260, %v200
    %v1262 = vmul.f32 %v1260, %v201
    %v1263 = vmul.f32 %v1260, %v202
    %1267 = vrot.lane.b32.xlu0 %v1261, 16
    %v1268 = vpop.permute.xlu0 %1267
    %1269 = vrot.lane.b32.xlu0 %v1262, 16
    %v1270 = vpop.permute.xlu0 %1269
    %1271 = vrot.lane.b32.xlu0 %v1263, 16
    %v1272 = vpop.permute.xlu0 %1271
    %v1273 = vsel %vm1072, %v1268, %v1270
    %v1274 = vsel %vm1072, %v1270, %v1272
    %v1277 = vadd.f32 %v1197, %v1273
    %v1278 = vadd.f32 %v1198, %v1274
    %s1279 = sld [smem:[#allocation10 + $0x7f]]
    %v1280 = vstv %s1279
    %v1281 = vmul.f32 %v1280, %v200
    %v1282 = vmul.f32 %v1280, %v201
    %v1283 = vmul.f32 %v1280, %v202
    %1287 = vrot.lane.b32.xlu0 %v1281, 16
    %v1288 = vpop.permute.xlu0 %1287
    %1289 = vrot.lane.b32.xlu0 %v1282, 16
    %v1290 = vpop.permute.xlu0 %1289
    %1291 = vrot.lane.b32.xlu0 %v1283, 16
    %v1292 = vpop.permute.xlu0 %1291
    %v1293 = vsel %vm1072, %v1288, %v1290
    %v1294 = vsel %vm1072, %v1290, %v1292
    %v1297 = vadd.f32 %v1217, %v1293
    %v1298 = vadd.f32 %v1218, %v1294
    %s1299 = sld [smem:[#allocation10 + $0x1c]]
    %v1300 = vstv %s1299
    %v1301 = vmul.f32 %v1300, %v236
    %v1302 = vmul.f32 %v1300, %v237
    %v1303 = vmul.f32 %v1300, %v238
    %1307 = vrot.lane.b32.xlu0 %v1301, 16
    %v1308 = vpop.permute.xlu0 %1307
    %1309 = vrot.lane.b32.xlu0 %v1302, 16
    %v1310 = vpop.permute.xlu0 %1309
    %1311 = vrot.lane.b32.xlu0 %v1303, 16
    %v1312 = vpop.permute.xlu0 %1311
    %v1313 = vsel %vm1072, %v1308, %v1310
    %v1314 = vsel %vm1072, %v1310, %v1312
    %v1317 = vadd.f32 %v1237, %v1313
    %v1318 = vadd.f32 %v1238, %v1314
    %s1319 = sld [smem:[#allocation10 + $0x40]]
    %v1320 = vstv %s1319
    %v1321 = vmul.f32 %v1320, %v236
    %v1322 = vmul.f32 %v1320, %v237
    %v1323 = vmul.f32 %v1320, %v238
    %1327 = vrot.lane.b32.xlu0 %v1321, 16
    %v1328 = vpop.permute.xlu0 %1327
    %1329 = vrot.lane.b32.xlu0 %v1322, 16
    %v1330 = vpop.permute.xlu0 %1329
    %1331 = vrot.lane.b32.xlu0 %v1323, 16
    %v1332 = vpop.permute.xlu0 %1331
    %v1333 = vsel %vm1072, %v1328, %v1330
    %v1334 = vsel %vm1072, %v1330, %v1332
    %v1337 = vadd.f32 %v1257, %v1333
    %v1338 = vadd.f32 %v1258, %v1334
    %s1339 = sld [smem:[#allocation10 + $0x64]]
    %v1340 = vstv %s1339
    %v1341 = vmul.f32 %v1340, %v236
    %v1342 = vmul.f32 %v1340, %v237
    %v1343 = vmul.f32 %v1340, %v238
    %1347 = vrot.lane.b32.xlu0 %v1341, 16
    %v1348 = vpop.permute.xlu0 %1347
    %1349 = vrot.lane.b32.xlu0 %v1342, 16
    %v1350 = vpop.permute.xlu0 %1349
    %1351 = vrot.lane.b32.xlu0 %v1343, 16
    %v1352 = vpop.permute.xlu0 %1351
    %v1353 = vsel %vm1072, %v1348, %v1350
    %v1354 = vsel %vm1072, %v1350, %v1352
    %v1357 = vadd.f32 %v1277, %v1353
    %v1358 = vadd.f32 %v1278, %v1354
    %s1359 = sld [smem:[#allocation10 + $0x88]]
    %v1360 = vstv %s1359
    %v1361 = vmul.f32 %v1360, %v236
    %v1362 = vmul.f32 %v1360, %v237
    %v1363 = vmul.f32 %v1360, %v238
    %1367 = vrot.lane.b32.xlu0 %v1361, 16
    %v1368 = vpop.permute.xlu0 %1367
    %1369 = vrot.lane.b32.xlu0 %v1362, 16
    %v1370 = vpop.permute.xlu0 %1369
    %1371 = vrot.lane.b32.xlu0 %v1363, 16
    %v1372 = vpop.permute.xlu0 %1371
    %v1373 = vsel %vm1072, %v1368, %v1370
    %v1374 = vsel %vm1072, %v1370, %v1372
    %v1377 = vadd.f32 %v1297, %v1373
    %v1378 = vadd.f32 %v1298, %v1374
    %s1379 = sld [smem:[#allocation10 + $0x4]]
    %v1380 = vstv %s1379
    %v1381 = vmul.f32 %v1380, %v129
    %v1382 = vmul.f32 %v1380, %v130
    %v1383 = vadd.f32 %v1317, %v1381
    %v1384 = vadd.f32 %v1318, %v1382
    %s1385 = sld [smem:[#allocation10 + $0x28]]
    %v1386 = vstv %s1385
    %v1387 = vmul.f32 %v1386, %v129
    %v1388 = vmul.f32 %v1386, %v130
    %v1389 = vadd.f32 %v1337, %v1387
    %v1390 = vadd.f32 %v1338, %v1388
    %s1391 = sld [smem:[#allocation10 + $0x4c]]
    %v1392 = vstv %s1391
    %v1393 = vmul.f32 %v1392, %v129
    %v1394 = vmul.f32 %v1392, %v130
    %v1395 = vadd.f32 %v1357, %v1393
    %v1396 = vadd.f32 %v1358, %v1394
    %s1397 = sld [smem:[#allocation10 + $0x70]]
    %v1398 = vstv %s1397
    %v1399 = vmul.f32 %v1398, %v129
    %v1400 = vmul.f32 %v1398, %v130
    %v1401 = vadd.f32 %v1377, %v1399
    %v1402 = vadd.f32 %v1378, %v1400
    %s1403 = sld [smem:[#allocation10 + $0xd]]
    %v1404 = vstv %s1403
    %v1405 = vmul.f32 %v1404, %v165
    %v1406 = vmul.f32 %v1404, %v166
    %v1407 = vadd.f32 %v1383, %v1405
    %v1408 = vadd.f32 %v1384, %v1406
    %s1409 = sld [smem:[#allocation10 + $0x31]]
    %v1410 = vstv %s1409
    %v1411 = vmul.f32 %v1410, %v165
    %v1412 = vmul.f32 %v1410, %v166
    %v1413 = vadd.f32 %v1389, %v1411
    %v1414 = vadd.f32 %v1390, %v1412
    %s1415 = sld [smem:[#allocation10 + $0x55]]
    %v1416 = vstv %s1415
    %v1417 = vmul.f32 %v1416, %v165
    %v1418 = vmul.f32 %v1416, %v166
    %v1419 = vadd.f32 %v1395, %v1417
    %v1420 = vadd.f32 %v1396, %v1418
    %s1421 = sld [smem:[#allocation10 + $0x79]]
    %v1422 = vstv %s1421
    %v1423 = vmul.f32 %v1422, %v165
    %v1424 = vmul.f32 %v1422, %v166
    %v1425 = vadd.f32 %v1401, %v1423
    %v1426 = vadd.f32 %v1402, %v1424
    %s1427 = sld [smem:[#allocation10 + $0x16]]
    %v1428 = vstv %s1427
    %v1429 = vmul.f32 %v1428, %v201
    %v1430 = vmul.f32 %v1428, %v202
    %v1431 = vadd.f32 %v1407, %v1429
    %v1432 = vadd.f32 %v1408, %v1430
    %s1433 = sld [smem:[#allocation10 + $0x3a]]
    %v1434 = vstv %s1433
    %v1435 = vmul.f32 %v1434, %v201
    %v1436 = vmul.f32 %v1434, %v202
    %v1437 = vadd.f32 %v1413, %v1435
    %v1438 = vadd.f32 %v1414, %v1436
    %s1439 = sld [smem:[#allocation10 + $0x5e]]
    %v1440 = vstv %s1439
    %v1441 = vmul.f32 %v1440, %v201
    %v1442 = vmul.f32 %v1440, %v202
    %v1443 = vadd.f32 %v1419, %v1441
    %v1444 = vadd.f32 %v1420, %v1442
    %s1445 = sld [smem:[#allocation10 + $0x82]]
    %v1446 = vstv %s1445
    %v1447 = vmul.f32 %v1446, %v201
    %v1448 = vmul.f32 %v1446, %v202
    %v1449 = vadd.f32 %v1425, %v1447
    %v1450 = vadd.f32 %v1426, %v1448
    %s1451 = sld [smem:[#allocation10 + $0x1f]]
    %v1452 = vstv %s1451
    %v1453 = vmul.f32 %v1452, %v237
    %v1454 = vmul.f32 %v1452, %v238
    %v1455 = vadd.f32 %v1431, %v1453
    %v1456 = vadd.f32 %v1432, %v1454
    %s1457 = sld [smem:[#allocation10 + $0x43]]
    %v1458 = vstv %s1457
    %v1459 = vmul.f32 %v1458, %v237
    %v1460 = vmul.f32 %v1458, %v238
    %v1461 = vadd.f32 %v1437, %v1459
    %v1462 = vadd.f32 %v1438, %v1460
    %s1463 = sld [smem:[#allocation10 + $0x67]]
    %v1464 = vstv %s1463
    %v1465 = vmul.f32 %v1464, %v237
    %v1466 = vmul.f32 %v1464, %v238
    %v1467 = vadd.f32 %v1443, %v1465
    %v1468 = vadd.f32 %v1444, %v1466
    %s1469 = sld [smem:[#allocation10 + $0x8b]]
    %v1470 = vstv %s1469
    %v1471 = vmul.f32 %v1470, %v237
    %v1472 = vmul.f32 %v1470, %v238
    %v1473 = vadd.f32 %v1449, %v1471
    %v1474 = vadd.f32 %v1450, %v1472
    %s1475 = sld [smem:[#allocation10 + $0x7]]
    %v1476 = vstv %s1475
    %v1477 = vmul.f32 %v1476, %v624
    %v1478 = vmul.f32 %v1476, %v625
    %v1479 = vmul.f32 %v1476, %v626
    %1483 = vrot.lane.b32.xlu0 %v1477, 112
    %v1484 = vpop.permute.xlu0 %1483
    %1485 = vrot.lane.b32.xlu0 %v1478, 112
    %v1486 = vpop.permute.xlu0 %1485
    %1487 = vrot.lane.b32.xlu0 %v1479, 112
    %v1488 = vpop.permute.xlu0 %1487
    %v1489 = vsel %vm285, %v1484, %v1486
    %v1490 = vsel %vm285, %v1486, %v1488
    %v1493 = vadd.f32 %v1455, %v1489
    %v1494 = vadd.f32 %v1456, %v1490
    %s1495 = sld [smem:[#allocation10 + $0x2b]]
    %v1496 = vstv %s1495
    %v1497 = vmul.f32 %v1496, %v624
    %v1498 = vmul.f32 %v1496, %v625
    %v1499 = vmul.f32 %v1496, %v626
    %1503 = vrot.lane.b32.xlu0 %v1497, 112
    %v1504 = vpop.permute.xlu0 %1503
    %1505 = vrot.lane.b32.xlu0 %v1498, 112
    %v1506 = vpop.permute.xlu0 %1505
    %1507 = vrot.lane.b32.xlu0 %v1499, 112
    %v1508 = vpop.permute.xlu0 %1507
    %v1509 = vsel %vm285, %v1504, %v1506
    %v1510 = vsel %vm285, %v1506, %v1508
    %v1513 = vadd.f32 %v1461, %v1509
    %v1514 = vadd.f32 %v1462, %v1510
    %s1515 = sld [smem:[#allocation10 + $0x4f]]
    %v1516 = vstv %s1515
    %v1517 = vmul.f32 %v1516, %v624
    %v1518 = vmul.f32 %v1516, %v625
    %v1519 = vmul.f32 %v1516, %v626
    %1523 = vrot.lane.b32.xlu0 %v1517, 112
    %v1524 = vpop.permute.xlu0 %1523
    %1525 = vrot.lane.b32.xlu0 %v1518, 112
    %v1526 = vpop.permute.xlu0 %1525
    %1527 = vrot.lane.b32.xlu0 %v1519, 112
    %v1528 = vpop.permute.xlu0 %1527
    %v1529 = vsel %vm285, %v1524, %v1526
    %v1530 = vsel %vm285, %v1526, %v1528
    %v1533 = vadd.f32 %v1467, %v1529
    %v1534 = vadd.f32 %v1468, %v1530
    %s1535 = sld [smem:[#allocation10 + $0x73]]
    %v1536 = vstv %s1535
    %v1537 = vmul.f32 %v1536, %v624
    %v1538 = vmul.f32 %v1536, %v625
    %v1539 = vmul.f32 %v1536, %v626
    %1543 = vrot.lane.b32.xlu0 %v1537, 112
    %v1544 = vpop.permute.xlu0 %1543
    %1545 = vrot.lane.b32.xlu0 %v1538, 112
    %v1546 = vpop.permute.xlu0 %1545
    %1547 = vrot.lane.b32.xlu0 %v1539, 112
    %v1548 = vpop.permute.xlu0 %1547
    %v1549 = vsel %vm285, %v1544, %v1546
    %v1550 = vsel %vm285, %v1546, %v1548
    %v1553 = vadd.f32 %v1473, %v1549
    %v1554 = vadd.f32 %v1474, %v1550
    %s1555 = sld [smem:[#allocation10 + $0x10]]
    %v1556 = vstv %s1555
    %v1557 = vmul.f32 %v1556, %v716
    %v1558 = vmul.f32 %v1556, %v717
    %v1559 = vmul.f32 %v1556, %v718
    %1563 = vrot.lane.b32.xlu0 %v1557, 112
    %v1564 = vpop.permute.xlu0 %1563
    %1565 = vrot.lane.b32.xlu0 %v1558, 112
    %v1566 = vpop.permute.xlu0 %1565
    %1567 = vrot.lane.b32.xlu0 %v1559, 112
    %v1568 = vpop.permute.xlu0 %1567
    %v1569 = vsel %vm285, %v1564, %v1566
    %v1570 = vsel %vm285, %v1566, %v1568
    %v1573 = vadd.f32 %v1493, %v1569
    %v1574 = vadd.f32 %v1494, %v1570
    %s1575 = sld [smem:[#allocation10 + $0x34]]
    %v1576 = vstv %s1575
    %v1577 = vmul.f32 %v1576, %v716
    %v1578 = vmul.f32 %v1576, %v717
    %v1579 = vmul.f32 %v1576, %v718
    %1583 = vrot.lane.b32.xlu0 %v1577, 112
    %v1584 = vpop.permute.xlu0 %1583
    %1585 = vrot.lane.b32.xlu0 %v1578, 112
    %v1586 = vpop.permute.xlu0 %1585
    %1587 = vrot.lane.b32.xlu0 %v1579, 112
    %v1588 = vpop.permute.xlu0 %1587
    %v1589 = vsel %vm285, %v1584, %v1586
    %v1590 = vsel %vm285, %v1586, %v1588
    %v1593 = vadd.f32 %v1513, %v1589
    %v1594 = vadd.f32 %v1514, %v1590
    %s1595 = sld [smem:[#allocation10 + $0x58]]
    %v1596 = vstv %s1595
    %v1597 = vmul.f32 %v1596, %v716
    %v1598 = vmul.f32 %v1596, %v717
    %v1599 = vmul.f32 %v1596, %v718
    %1603 = vrot.lane.b32.xlu0 %v1597, 112
    %v1604 = vpop.permute.xlu0 %1603
    %1605 = vrot.lane.b32.xlu0 %v1598, 112
    %v1606 = vpop.permute.xlu0 %1605
    %1607 = vrot.lane.b32.xlu0 %v1599, 112
    %v1608 = vpop.permute.xlu0 %1607
    %v1609 = vsel %vm285, %v1604, %v1606
    %v1610 = vsel %vm285, %v1606, %v1608
    %v1613 = vadd.f32 %v1533, %v1609
    %v1614 = vadd.f32 %v1534, %v1610
    %s1615 = sld [smem:[#allocation10 + $0x7c]]
    %v1616 = vstv %s1615
    %v1617 = vmul.f32 %v1616, %v716
    %v1618 = vmul.f32 %v1616, %v717
    %v1619 = vmul.f32 %v1616, %v718
    %1623 = vrot.lane.b32.xlu0 %v1617, 112
    %v1624 = vpop.permute.xlu0 %1623
    %1625 = vrot.lane.b32.xlu0 %v1618, 112
    %v1626 = vpop.permute.xlu0 %1625
    %1627 = vrot.lane.b32.xlu0 %v1619, 112
    %v1628 = vpop.permute.xlu0 %1627
    %v1629 = vsel %vm285, %v1624, %v1626
    %v1630 = vsel %vm285, %v1626, %v1628
    %v1633 = vadd.f32 %v1553, %v1629
    %v1634 = vadd.f32 %v1554, %v1630
    %s1635 = sld [smem:[#allocation10 + $0x19]]
    %v1636 = vstv %s1635
    %v1637 = vmul.f32 %v1636, %v807
    %v1638 = vmul.f32 %v1636, %v808
    %v1639 = vmul.f32 %v1636, %v809
    %1643 = vrot.lane.b32.xlu0 %v1637, 112
    %v1644 = vpop.permute.xlu0 %1643
    %1645 = vrot.lane.b32.xlu0 %v1638, 112
    %v1646 = vpop.permute.xlu0 %1645
    %1647 = vrot.lane.b32.xlu0 %v1639, 112
    %v1648 = vpop.permute.xlu0 %1647
    %v1649 = vsel %vm285, %v1644, %v1646
    %v1650 = vsel %vm285, %v1646, %v1648
    %v1653 = vadd.f32 %v1573, %v1649
    %v1654 = vadd.f32 %v1574, %v1650
    %s1655 = sld [smem:[#allocation10 + $0x3d]]
    %v1656 = vstv %s1655
    %v1657 = vmul.f32 %v1656, %v807
    %v1658 = vmul.f32 %v1656, %v808
    %v1659 = vmul.f32 %v1656, %v809
    %1663 = vrot.lane.b32.xlu0 %v1657, 112
    %v1664 = vpop.permute.xlu0 %1663
    %1665 = vrot.lane.b32.xlu0 %v1658, 112
    %v1666 = vpop.permute.xlu0 %1665
    %1667 = vrot.lane.b32.xlu0 %v1659, 112
    %v1668 = vpop.permute.xlu0 %1667
    %v1669 = vsel %vm285, %v1664, %v1666
    %v1670 = vsel %vm285, %v1666, %v1668
    %v1673 = vadd.f32 %v1593, %v1669
    %v1674 = vadd.f32 %v1594, %v1670
    %s1675 = sld [smem:[#allocation10 + $0x61]]
    %v1676 = vstv %s1675
    %v1677 = vmul.f32 %v1676, %v807
    %v1678 = vmul.f32 %v1676, %v808
    %v1679 = vmul.f32 %v1676, %v809
    %1683 = vrot.lane.b32.xlu0 %v1677, 112
    %v1684 = vpop.permute.xlu0 %1683
    %1685 = vrot.lane.b32.xlu0 %v1678, 112
    %v1686 = vpop.permute.xlu0 %1685
    %1687 = vrot.lane.b32.xlu0 %v1679, 112
    %v1688 = vpop.permute.xlu0 %1687
    %v1689 = vsel %vm285, %v1684, %v1686
    %v1690 = vsel %vm285, %v1686, %v1688
    %v1693 = vadd.f32 %v1613, %v1689
    %v1694 = vadd.f32 %v1614, %v1690
    %s1695 = sld [smem:[#allocation10 + $0x85]]
    %v1696 = vstv %s1695
    %v1697 = vmul.f32 %v1696, %v807
    %v1698 = vmul.f32 %v1696, %v808
    %v1699 = vmul.f32 %v1696, %v809
    %1703 = vrot.lane.b32.xlu0 %v1697, 112
    %v1704 = vpop.permute.xlu0 %1703
    %1705 = vrot.lane.b32.xlu0 %v1698, 112
    %v1706 = vpop.permute.xlu0 %1705
    %1707 = vrot.lane.b32.xlu0 %v1699, 112
    %v1708 = vpop.permute.xlu0 %1707
    %v1709 = vsel %vm285, %v1704, %v1706
    %v1710 = vsel %vm285, %v1706, %v1708
    %v1713 = vadd.f32 %v1633, %v1709
    %v1714 = vadd.f32 %v1634, %v1710
    %s1715 = sld [smem:[#allocation10 + $0x22]]
    %v1716 = vstv %s1715
    %v1717 = vmul.f32 %v1716, %v898
    %v1718 = vmul.f32 %v1716, %v899
    %v1719 = vmul.f32 %v1716, %v900
    %1723 = vrot.lane.b32.xlu0 %v1717, 112
    %v1724 = vpop.permute.xlu0 %1723
    %1725 = vrot.lane.b32.xlu0 %v1718, 112
    %v1726 = vpop.permute.xlu0 %1725
    %1727 = vrot.lane.b32.xlu0 %v1719, 112
    %v1728 = vpop.permute.xlu0 %1727
    %v1729 = vsel %vm285, %v1724, %v1726
    %v1730 = vsel %vm285, %v1726, %v1728
    %v1733 = vadd.f32 %v1653, %v1729
    %v1734 = vadd.f32 %v1654, %v1730
    %s1735 = sld [smem:[#allocation10 + $0x46]]
    %v1736 = vstv %s1735
    %v1737 = vmul.f32 %v1736, %v898
    %v1738 = vmul.f32 %v1736, %v899
    %v1739 = vmul.f32 %v1736, %v900
    %1743 = vrot.lane.b32.xlu0 %v1737, 112
    %v1744 = vpop.permute.xlu0 %1743
    %1745 = vrot.lane.b32.xlu0 %v1738, 112
    %v1746 = vpop.permute.xlu0 %1745
    %1747 = vrot.lane.b32.xlu0 %v1739, 112
    %v1748 = vpop.permute.xlu0 %1747
    %v1749 = vsel %vm285, %v1744, %v1746
    %v1750 = vsel %vm285, %v1746, %v1748
    %v1753 = vadd.f32 %v1673, %v1749
    %v1754 = vadd.f32 %v1674, %v1750
    %s1755 = sld [smem:[#allocation10 + $0x6a]]
    %v1756 = vstv %s1755
    %v1757 = vmul.f32 %v1756, %v898
    %v1758 = vmul.f32 %v1756, %v899
    %v1759 = vmul.f32 %v1756, %v900
    %1763 = vrot.lane.b32.xlu0 %v1757, 112
    %v1764 = vpop.permute.xlu0 %1763
    %1765 = vrot.lane.b32.xlu0 %v1758, 112
    %v1766 = vpop.permute.xlu0 %1765
    %1767 = vrot.lane.b32.xlu0 %v1759, 112
    %v1768 = vpop.permute.xlu0 %1767
    %v1769 = vsel %vm285, %v1764, %v1766
    %v1770 = vsel %vm285, %v1766, %v1768
    %v1773 = vadd.f32 %v1693, %v1769
    %v1774 = vadd.f32 %v1694, %v1770
    %s1775 = sld [smem:[#allocation10 + $0x8e]]
    %v1776 = vstv %s1775
    %v1777 = vmul.f32 %v1776, %v898
    %v1778 = vmul.f32 %v1776, %v899
    %v1779 = vmul.f32 %v1776, %v900
    %1783 = vrot.lane.b32.xlu0 %v1777, 112
    %v1784 = vpop.permute.xlu0 %1783
    %1785 = vrot.lane.b32.xlu0 %v1778, 112
    %v1786 = vpop.permute.xlu0 %1785
    %1787 = vrot.lane.b32.xlu0 %v1779, 112
    %v1788 = vpop.permute.xlu0 %1787
    %v1789 = vsel %vm285, %v1784, %v1786
    %v1790 = vsel %vm285, %v1786, %v1788
    %v1793 = vadd.f32 %v1713, %v1789
    %v1794 = vadd.f32 %v1714, %v1790
    %s1795 = sld [smem:[#allocation10 + $0x2]]
    %v1796 = vstv %s1795
    %v1797 = vmul.f32 %v1796, %v128
    %v1798 = vmul.f32 %v1796, %v129
    %v1799 = vmul.f32 %v1796, %v130
    %v1800 = vadd.f32 %v1797, 0.0
    %v1801 = vadd.f32 %v1798, 0.0
    %v1802 = vadd.f32 %v1799, 0.0
    %s1803 = sld [smem:[#allocation10 + $0x26]]
    %v1804 = vstv %s1803
    %v1805 = vmul.f32 %v1804, %v128
    %v1806 = vmul.f32 %v1804, %v129
    %v1807 = vmul.f32 %v1804, %v130
    %v1808 = vadd.f32 %v1805, 0.0
    %v1809 = vadd.f32 %v1806, 0.0
    %v1810 = vadd.f32 %v1807, 0.0
    %s1811 = sld [smem:[#allocation10 + $0x4a]]
    %v1812 = vstv %s1811
    %v1813 = vmul.f32 %v1812, %v128
    %v1814 = vmul.f32 %v1812, %v129
    %v1815 = vmul.f32 %v1812, %v130
    %v1816 = vadd.f32 %v1813, 0.0
    %v1817 = vadd.f32 %v1814, 0.0
    %v1818 = vadd.f32 %v1815, 0.0
    %s1819 = sld [smem:[#allocation10 + $0x6e]]
    %v1820 = vstv %s1819
    %v1821 = vmul.f32 %v1820, %v128
    %v1822 = vmul.f32 %v1820, %v129
    %v1823 = vmul.f32 %v1820, %v130
    %v1824 = vadd.f32 %v1821, 0.0
    %v1825 = vadd.f32 %v1822, 0.0
    %v1826 = vadd.f32 %v1823, 0.0
    %s1827 = sld [smem:[#allocation10 + $0xb]]
    %v1828 = vstv %s1827
    %v1829 = vmul.f32 %v1828, %v164
    %v1830 = vmul.f32 %v1828, %v165
    %v1831 = vmul.f32 %v1828, %v166
    %v1832 = vadd.f32 %v1800, %v1829
    %v1833 = vadd.f32 %v1801, %v1830
    %v1834 = vadd.f32 %v1802, %v1831
    %s1835 = sld [smem:[#allocation10 + $0x2f]]
    %v1836 = vstv %s1835
    %v1837 = vmul.f32 %v1836, %v164
    %v1838 = vmul.f32 %v1836, %v165
    %v1839 = vmul.f32 %v1836, %v166
    %v1840 = vadd.f32 %v1808, %v1837
    %v1841 = vadd.f32 %v1809, %v1838
    %v1842 = vadd.f32 %v1810, %v1839
    %s1843 = sld [smem:[#allocation10 + $0x53]]
    %v1844 = vstv %s1843
    %v1845 = vmul.f32 %v1844, %v164
    %v1846 = vmul.f32 %v1844, %v165
    %v1847 = vmul.f32 %v1844, %v166
    %v1848 = vadd.f32 %v1816, %v1845
    %v1849 = vadd.f32 %v1817, %v1846
    %v1850 = vadd.f32 %v1818, %v1847
    %s1851 = sld [smem:[#allocation10 + $0x77]]
    %v1852 = vstv %s1851
    %v1853 = vmul.f32 %v1852, %v164
    %v1854 = vmul.f32 %v1852, %v165
    %v1855 = vmul.f32 %v1852, %v166
    %v1856 = vadd.f32 %v1824, %v1853
    %v1857 = vadd.f32 %v1825, %v1854
    %v1858 = vadd.f32 %v1826, %v1855
    %s1859 = sld [smem:[#allocation10 + $0x14]]
    %v1860 = vstv %s1859
    %v1861 = vmul.f32 %v1860, %v200
    %v1862 = vmul.f32 %v1860, %v201
    %v1863 = vmul.f32 %v1860, %v202
    %v1864 = vadd.f32 %v1832, %v1861
    %v1865 = vadd.f32 %v1833, %v1862
    %v1866 = vadd.f32 %v1834, %v1863
    %s1867 = sld [smem:[#allocation10 + $0x38]]
    %v1868 = vstv %s1867
    %v1869 = vmul.f32 %v1868, %v200
    %v1870 = vmul.f32 %v1868, %v201
    %v1871 = vmul.f32 %v1868, %v202
    %v1872 = vadd.f32 %v1840, %v1869
    %v1873 = vadd.f32 %v1841, %v1870
    %v1874 = vadd.f32 %v1842, %v1871
    %s1875 = sld [smem:[#allocation10 + $0x5c]]
    %v1876 = vstv %s1875
    %v1877 = vmul.f32 %v1876, %v200
    %v1878 = vmul.f32 %v1876, %v201
    %v1879 = vmul.f32 %v1876, %v202
    %v1880 = vadd.f32 %v1848, %v1877
    %v1881 = vadd.f32 %v1849, %v1878
    %v1882 = vadd.f32 %v1850, %v1879
    %s1883 = sld [smem:[#allocation10 + $0x80]]
    %v1884 = vstv %s1883
    %v1885 = vmul.f32 %v1884, %v200
    %v1886 = vmul.f32 %v1884, %v201
    %v1887 = vmul.f32 %v1884, %v202
    %v1888 = vadd.f32 %v1856, %v1885
    %v1889 = vadd.f32 %v1857, %v1886
    %v1890 = vadd.f32 %v1858, %v1887
    %s1891 = sld [smem:[#allocation10 + $0x1d]]
    %v1892 = vstv %s1891
    %v1893 = vmul.f32 %v1892, %v236
    %v1894 = vmul.f32 %v1892, %v237
    %v1895 = vmul.f32 %v1892, %v238
    %v1896 = vadd.f32 %v1864, %v1893
    %v1897 = vadd.f32 %v1865, %v1894
    %v1898 = vadd.f32 %v1866, %v1895
    %s1899 = sld [smem:[#allocation10 + $0x41]]
    %v1900 = vstv %s1899
    %v1901 = vmul.f32 %v1900, %v236
    %v1902 = vmul.f32 %v1900, %v237
    %v1903 = vmul.f32 %v1900, %v238
    %v1904 = vadd.f32 %v1872, %v1901
    %v1905 = vadd.f32 %v1873, %v1902
    %v1906 = vadd.f32 %v1874, %v1903
    %s1907 = sld [smem:[#allocation10 + $0x65]]
    %v1908 = vstv %s1907
    %v1909 = vmul.f32 %v1908, %v236
    %v1910 = vmul.f32 %v1908, %v237
    %v1911 = vmul.f32 %v1908, %v238
    %v1912 = vadd.f32 %v1880, %v1909
    %v1913 = vadd.f32 %v1881, %v1910
    %v1914 = vadd.f32 %v1882, %v1911
    %s1915 = sld [smem:[#allocation10 + $0x89]]
    %v1916 = vstv %s1915
    %v1917 = vmul.f32 %v1916, %v236
    %v1918 = vmul.f32 %v1916, %v237
    %v1919 = vmul.f32 %v1916, %v238
    %v1920 = vadd.f32 %v1888, %v1917
    %v1921 = vadd.f32 %v1889, %v1918
    %v1922 = vadd.f32 %v1890, %v1919
    %s1923 = sld [smem:[#allocation10 + $0x5]]
    %v1924 = vstv %s1923
    %v1925 = vmul.f32 %v1924, %v624
    %v1926 = vmul.f32 %v1924, %v625
    %v1927 = vmul.f32 %v1924, %v626
    %1931 = vrot.lane.b32.xlu0 %v1925, 112
    %v1932 = vpop.permute.xlu0 %1931
    %1933 = vrot.lane.b32.xlu0 %v1926, 112
    %v1934 = vpop.permute.xlu0 %1933
    %1935 = vrot.lane.b32.xlu0 %v1927, 112
    %v1936 = vpop.permute.xlu0 %1935
    %v1937 = vsel %vm285, %v1932, %v1934
    %v1938 = vsel %vm285, %v1934, %v1936
    %v1942 = vadd.f32 %v1896, %v1932
    %v1943 = vadd.f32 %v1897, %v1937
    %v1944 = vadd.f32 %v1898, %v1938
    %s1945 = sld [smem:[#allocation10 + $0x29]]
    %v1946 = vstv %s1945
    %v1947 = vmul.f32 %v1946, %v624
    %v1948 = vmul.f32 %v1946, %v625
    %v1949 = vmul.f32 %v1946, %v626
    %1953 = vrot.lane.b32.xlu0 %v1947, 112
    %v1954 = vpop.permute.xlu0 %1953
    %1955 = vrot.lane.b32.xlu0 %v1948, 112
    %v1956 = vpop.permute.xlu0 %1955
    %1957 = vrot.lane.b32.xlu0 %v1949, 112
    %v1958 = vpop.permute.xlu0 %1957
    %v1959 = vsel %vm285, %v1954, %v1956
    %v1960 = vsel %vm285, %v1956, %v1958
    %v1964 = vadd.f32 %v1904, %v1954
    %v1965 = vadd.f32 %v1905, %v1959
    %v1966 = vadd.f32 %v1906, %v1960
    %s1967 = sld [smem:[#allocation10 + $0x4d]]
    %v1968 = vstv %s1967
    %v1969 = vmul.f32 %v1968, %v624
    %v1970 = vmul.f32 %v1968, %v625
    %v1971 = vmul.f32 %v1968, %v626
    %1975 = vrot.lane.b32.xlu0 %v1969, 112
    %v1976 = vpop.permute.xlu0 %1975
    %1977 = vrot.lane.b32.xlu0 %v1970, 112
    %v1978 = vpop.permute.xlu0 %1977
    %1979 = vrot.lane.b32.xlu0 %v1971, 112
    %v1980 = vpop.permute.xlu0 %1979
    %v1981 = vsel %vm285, %v1976, %v1978
    %v1982 = vsel %vm285, %v1978, %v1980
    %v1986 = vadd.f32 %v1912, %v1976
    %v1987 = vadd.f32 %v1913, %v1981
    %v1988 = vadd.f32 %v1914, %v1982
    %s1989 = sld [smem:[#allocation10 + $0x71]]
    %v1990 = vstv %s1989
    %v1991 = vmul.f32 %v1990, %v624
    %v1992 = vmul.f32 %v1990, %v625
    %v1993 = vmul.f32 %v1990, %v626
    %1997 = vrot.lane.b32.xlu0 %v1991, 112
    %v1998 = vpop.permute.xlu0 %1997
    %1999 = vrot.lane.b32.xlu0 %v1992, 112
    %v2000 = vpop.permute.xlu0 %1999
    %2001 = vrot.lane.b32.xlu0 %v1993, 112
    %v2002 = vpop.permute.xlu0 %2001
    %v2003 = vsel %vm285, %v1998, %v2000
    %v2004 = vsel %vm285, %v2000, %v2002
    %v2008 = vadd.f32 %v1920, %v1998
    %v2009 = vadd.f32 %v1921, %v2003
    %v2010 = vadd.f32 %v1922, %v2004
    %s2011 = sld [smem:[#allocation10 + $0xe]]
    %v2012 = vstv %s2011
    %v2013 = vmul.f32 %v2012, %v716
    %v2014 = vmul.f32 %v2012, %v717
    %v2015 = vmul.f32 %v2012, %v718
    %2019 = vrot.lane.b32.xlu0 %v2013, 112
    %v2020 = vpop.permute.xlu0 %2019
    %2021 = vrot.lane.b32.xlu0 %v2014, 112
    %v2022 = vpop.permute.xlu0 %2021
    %2023 = vrot.lane.b32.xlu0 %v2015, 112
    %v2024 = vpop.permute.xlu0 %2023
    %v2025 = vsel %vm285, %v2020, %v2022
    %v2026 = vsel %vm285, %v2022, %v2024
    %v2030 = vadd.f32 %v1942, %v2020
    %v2031 = vadd.f32 %v1943, %v2025
    %v2032 = vadd.f32 %v1944, %v2026
    %s2033 = sld [smem:[#allocation10 + $0x32]]
    %v2034 = vstv %s2033
    %v2035 = vmul.f32 %v2034, %v716
    %v2036 = vmul.f32 %v2034, %v717
    %v2037 = vmul.f32 %v2034, %v718
    %2041 = vrot.lane.b32.xlu0 %v2035, 112
    %v2042 = vpop.permute.xlu0 %2041
    %2043 = vrot.lane.b32.xlu0 %v2036, 112
    %v2044 = vpop.permute.xlu0 %2043
    %2045 = vrot.lane.b32.xlu0 %v2037, 112
    %v2046 = vpop.permute.xlu0 %2045
    %v2047 = vsel %vm285, %v2042, %v2044
    %v2048 = vsel %vm285, %v2044, %v2046
    %v2052 = vadd.f32 %v1964, %v2042
    %v2053 = vadd.f32 %v1965, %v2047
    %v2054 = vadd.f32 %v1966, %v2048
    %s2055 = sld [smem:[#allocation10 + $0x56]]
    %v2056 = vstv %s2055
    %v2057 = vmul.f32 %v2056, %v716
    %v2058 = vmul.f32 %v2056, %v717
    %v2059 = vmul.f32 %v2056, %v718
    %2063 = vrot.lane.b32.xlu0 %v2057, 112
    %v2064 = vpop.permute.xlu0 %2063
    %2065 = vrot.lane.b32.xlu0 %v2058, 112
    %v2066 = vpop.permute.xlu0 %2065
    %2067 = vrot.lane.b32.xlu0 %v2059, 112
    %v2068 = vpop.permute.xlu0 %2067
    %v2069 = vsel %vm285, %v2064, %v2066
    %v2070 = vsel %vm285, %v2066, %v2068
    %v2074 = vadd.f32 %v1986, %v2064
    %v2075 = vadd.f32 %v1987, %v2069
    %v2076 = vadd.f32 %v1988, %v2070
    %s2077 = sld [smem:[#allocation10 + $0x7a]]
    %v2078 = vstv %s2077
    %v2079 = vmul.f32 %v2078, %v716
    %v2080 = vmul.f32 %v2078, %v717
    %v2081 = vmul.f32 %v2078, %v718
    %2085 = vrot.lane.b32.xlu0 %v2079, 112
    %v2086 = vpop.permute.xlu0 %2085
    %2087 = vrot.lane.b32.xlu0 %v2080, 112
    %v2088 = vpop.permute.xlu0 %2087
    %2089 = vrot.lane.b32.xlu0 %v2081, 112
    %v2090 = vpop.permute.xlu0 %2089
    %v2091 = vsel %vm285, %v2086, %v2088
    %v2092 = vsel %vm285, %v2088, %v2090
    %v2096 = vadd.f32 %v2008, %v2086
    %v2097 = vadd.f32 %v2009, %v2091
    %v2098 = vadd.f32 %v2010, %v2092
    %s2099 = sld [smem:[#allocation10 + $0x17]]
    %v2100 = vstv %s2099
    %v2101 = vmul.f32 %v2100, %v807
    %v2102 = vmul.f32 %v2100, %v808
    %v2103 = vmul.f32 %v2100, %v809
    %2107 = vrot.lane.b32.xlu0 %v2101, 112
    %v2108 = vpop.permute.xlu0 %2107
    %2109 = vrot.lane.b32.xlu0 %v2102, 112
    %v2110 = vpop.permute.xlu0 %2109
    %2111 = vrot.lane.b32.xlu0 %v2103, 112
    %v2112 = vpop.permute.xlu0 %2111
    %v2113 = vsel %vm285, %v2108, %v2110
    %v2114 = vsel %vm285, %v2110, %v2112
    %v2118 = vadd.f32 %v2030, %v2108
    %v2119 = vadd.f32 %v2031, %v2113
    %v2120 = vadd.f32 %v2032, %v2114
    %s2121 = sld [smem:[#allocation10 + $0x3b]]
    %v2122 = vstv %s2121
    %v2123 = vmul.f32 %v2122, %v807
    %v2124 = vmul.f32 %v2122, %v808
    %v2125 = vmul.f32 %v2122, %v809
    %2129 = vrot.lane.b32.xlu0 %v2123, 112
    %v2130 = vpop.permute.xlu0 %2129
    %2131 = vrot.lane.b32.xlu0 %v2124, 112
    %v2132 = vpop.permute.xlu0 %2131
    %2133 = vrot.lane.b32.xlu0 %v2125, 112
    %v2134 = vpop.permute.xlu0 %2133
    %v2135 = vsel %vm285, %v2130, %v2132
    %v2136 = vsel %vm285, %v2132, %v2134
    %v2140 = vadd.f32 %v2052, %v2130
    %v2141 = vadd.f32 %v2053, %v2135
    %v2142 = vadd.f32 %v2054, %v2136
    %s2143 = sld [smem:[#allocation10 + $0x5f]]
    %v2144 = vstv %s2143
    %v2145 = vmul.f32 %v2144, %v807
    %v2146 = vmul.f32 %v2144, %v808
    %v2147 = vmul.f32 %v2144, %v809
    %2151 = vrot.lane.b32.xlu0 %v2145, 112
    %v2152 = vpop.permute.xlu0 %2151
    %2153 = vrot.lane.b32.xlu0 %v2146, 112
    %v2154 = vpop.permute.xlu0 %2153
    %2155 = vrot.lane.b32.xlu0 %v2147, 112
    %v2156 = vpop.permute.xlu0 %2155
    %v2157 = vsel %vm285, %v2152, %v2154
    %v2158 = vsel %vm285, %v2154, %v2156
    %v2162 = vadd.f32 %v2074, %v2152
    %v2163 = vadd.f32 %v2075, %v2157
    %v2164 = vadd.f32 %v2076, %v2158
    %s2165 = sld [smem:[#allocation10 + $0x83]]
    %v2166 = vstv %s2165
    %v2167 = vmul.f32 %v2166, %v807
    %v2168 = vmul.f32 %v2166, %v808
    %v2169 = vmul.f32 %v2166, %v809
    %2173 = vrot.lane.b32.xlu0 %v2167, 112
    %v2174 = vpop.permute.xlu0 %2173
    %2175 = vrot.lane.b32.xlu0 %v2168, 112
    %v2176 = vpop.permute.xlu0 %2175
    %2177 = vrot.lane.b32.xlu0 %v2169, 112
    %v2178 = vpop.permute.xlu0 %2177
    %v2179 = vsel %vm285, %v2174, %v2176
    %v2180 = vsel %vm285, %v2176, %v2178
    %v2184 = vadd.f32 %v2096, %v2174
    %v2185 = vadd.f32 %v2097, %v2179
    %v2186 = vadd.f32 %v2098, %v2180
    %s2187 = sld [smem:[#allocation10 + $0x20]]
    %v2188 = vstv %s2187
    %v2189 = vmul.f32 %v2188, %v898
    %v2190 = vmul.f32 %v2188, %v899
    %v2191 = vmul.f32 %v2188, %v900
    %2195 = vrot.lane.b32.xlu0 %v2189, 112
    %v2196 = vpop.permute.xlu0 %2195
    %2197 = vrot.lane.b32.xlu0 %v2190, 112
    %v2198 = vpop.permute.xlu0 %2197
    %2199 = vrot.lane.b32.xlu0 %v2191, 112
    %v2200 = vpop.permute.xlu0 %2199
    %v2201 = vsel %vm285, %v2196, %v2198
    %v2202 = vsel %vm285, %v2198, %v2200
    %v2206 = vadd.f32 %v2118, %v2196
    %v2207 = vadd.f32 %v2119, %v2201
    %v2208 = vadd.f32 %v2120, %v2202
    %s2209 = sld [smem:[#allocation10 + $0x44]]
    %v2210 = vstv %s2209
    %v2211 = vmul.f32 %v2210, %v898
    %v2212 = vmul.f32 %v2210, %v899
    %v2213 = vmul.f32 %v2210, %v900
    %2217 = vrot.lane.b32.xlu0 %v2211, 112
    %v2218 = vpop.permute.xlu0 %2217
    %2219 = vrot.lane.b32.xlu0 %v2212, 112
    %v2220 = vpop.permute.xlu0 %2219
    %2221 = vrot.lane.b32.xlu0 %v2213, 112
    %v2222 = vpop.permute.xlu0 %2221
    %v2223 = vsel %vm285, %v2218, %v2220
    %v2224 = vsel %vm285, %v2220, %v2222
    %v2228 = vadd.f32 %v2140, %v2218
    %v2229 = vadd.f32 %v2141, %v2223
    %v2230 = vadd.f32 %v2142, %v2224
    %s2231 = sld [smem:[#allocation10 + $0x68]]
    %v2232 = vstv %s2231
    %v2233 = vmul.f32 %v2232, %v898
    %v2234 = vmul.f32 %v2232, %v899
    %v2235 = vmul.f32 %v2232, %v900
    %2239 = vrot.lane.b32.xlu0 %v2233, 112
    %v2240 = vpop.permute.xlu0 %2239
    %2241 = vrot.lane.b32.xlu0 %v2234, 112
    %v2242 = vpop.permute.xlu0 %2241
    %2243 = vrot.lane.b32.xlu0 %v2235, 112
    %v2244 = vpop.permute.xlu0 %2243
    %v2245 = vsel %vm285, %v2240, %v2242
    %v2246 = vsel %vm285, %v2242, %v2244
    %v2250 = vadd.f32 %v2162, %v2240
    %v2251 = vadd.f32 %v2163, %v2245
    %v2252 = vadd.f32 %v2164, %v2246
    %s2253 = sld [smem:[#allocation10 + $0x8c]]
    %v2254 = vstv %s2253
    %v2255 = vmul.f32 %v2254, %v898
    %v2256 = vmul.f32 %v2254, %v899
    %v2257 = vmul.f32 %v2254, %v900
    %2261 = vrot.lane.b32.xlu0 %v2255, 112
    %v2262 = vpop.permute.xlu0 %2261
    %2263 = vrot.lane.b32.xlu0 %v2256, 112
    %v2264 = vpop.permute.xlu0 %2263
    %2265 = vrot.lane.b32.xlu0 %v2257, 112
    %v2266 = vpop.permute.xlu0 %2265
    %v2267 = vsel %vm285, %v2262, %v2264
    %v2268 = vsel %vm285, %v2264, %v2266
    %v2272 = vadd.f32 %v2184, %v2262
    %v2273 = vadd.f32 %v2185, %v2267
    %v2274 = vadd.f32 %v2186, %v2268
    %s2275 = sld [smem:[#allocation10 + $0x8]]
    %v2276 = vstv %s2275
    %v2277 = vmul.f32 %v2276, %v624
    %v2278 = vmul.f32 %v2276, %v625
    %v2279 = vmul.f32 %v2276, %v626
    %2283 = vrot.lane.b32.xlu0 %v2277, 96
    %v2284 = vpop.permute.xlu0 %2283
    %2285 = vrot.lane.b32.xlu0 %v2278, 96
    %v2286 = vpop.permute.xlu0 %2285
    %2287 = vrot.lane.b32.xlu0 %v2279, 96
    %v2288 = vpop.permute.xlu0 %2287
    %v2289 = vsel %vm641, %v2284, %v2286
    %v2290 = vsel %vm641, %v2286, %v2288
    %v2294 = vadd.f32 %v2206, %v2284
    %v2295 = vadd.f32 %v2207, %v2289
    %v2296 = vadd.f32 %v2208, %v2290
    %s2297 = sld [smem:[#allocation10 + $0x2c]]
    %v2298 = vstv %s2297
    %v2299 = vmul.f32 %v2298, %v624
    %v2300 = vmul.f32 %v2298, %v625
    %v2301 = vmul.f32 %v2298, %v626
    %2305 = vrot.lane.b32.xlu0 %v2299, 96
    %v2306 = vpop.permute.xlu0 %2305
    %2307 = vrot.lane.b32.xlu0 %v2300, 96
    %v2308 = vpop.permute.xlu0 %2307
    %2309 = vrot.lane.b32.xlu0 %v2301, 96
    %v2310 = vpop.permute.xlu0 %2309
    %v2311 = vsel %vm641, %v2306, %v2308
    %v2312 = vsel %vm641, %v2308, %v2310
    %v2316 = vadd.f32 %v2228, %v2306
    %v2317 = vadd.f32 %v2229, %v2311
    %v2318 = vadd.f32 %v2230, %v2312
    %s2319 = sld [smem:[#allocation10 + $0x50]]
    %v2320 = vstv %s2319
    %v2321 = vmul.f32 %v2320, %v624
    %v2322 = vmul.f32 %v2320, %v625
    %v2323 = vmul.f32 %v2320, %v626
    %2327 = vrot.lane.b32.xlu0 %v2321, 96
    %v2328 = vpop.permute.xlu0 %2327
    %2329 = vrot.lane.b32.xlu0 %v2322, 96
    %v2330 = vpop.permute.xlu0 %2329
    %2331 = vrot.lane.b32.xlu0 %v2323, 96
    %v2332 = vpop.permute.xlu0 %2331
    %v2333 = vsel %vm641, %v2328, %v2330
    %v2334 = vsel %vm641, %v2330, %v2332
    %v2338 = vadd.f32 %v2250, %v2328
    %v2339 = vadd.f32 %v2251, %v2333
    %v2340 = vadd.f32 %v2252, %v2334
    %s2341 = sld [smem:[#allocation10 + $0x74]]
    %v2342 = vstv %s2341
    %v2343 = vmul.f32 %v2342, %v624
    %v2344 = vmul.f32 %v2342, %v625
    %v2345 = vmul.f32 %v2342, %v626
    %2349 = vrot.lane.b32.xlu0 %v2343, 96
    %v2350 = vpop.permute.xlu0 %2349
    %2351 = vrot.lane.b32.xlu0 %v2344, 96
    %v2352 = vpop.permute.xlu0 %2351
    %2353 = vrot.lane.b32.xlu0 %v2345, 96
    %v2354 = vpop.permute.xlu0 %2353
    %v2355 = vsel %vm641, %v2350, %v2352
    %v2356 = vsel %vm641, %v2352, %v2354
    %v2360 = vadd.f32 %v2272, %v2350
    %v2361 = vadd.f32 %v2273, %v2355
    %v2362 = vadd.f32 %v2274, %v2356
    %s2363 = sld [smem:[#allocation10 + $0x11]]
    %v2364 = vstv %s2363
    %v2365 = vmul.f32 %v2364, %v716
    %v2366 = vmul.f32 %v2364, %v717
    %v2367 = vmul.f32 %v2364, %v718
    %2371 = vrot.lane.b32.xlu0 %v2365, 96
    %v2372 = vpop.permute.xlu0 %2371
    %2373 = vrot.lane.b32.xlu0 %v2366, 96
    %v2374 = vpop.permute.xlu0 %2373
    %2375 = vrot.lane.b32.xlu0 %v2367, 96
    %v2376 = vpop.permute.xlu0 %2375
    %v2377 = vsel %vm641, %v2372, %v2374
    %v2378 = vsel %vm641, %v2374, %v2376
    %v2382 = vadd.f32 %v2294, %v2372
    %v2383 = vadd.f32 %v2295, %v2377
    %v2384 = vadd.f32 %v2296, %v2378
    %s2385 = sld [smem:[#allocation10 + $0x35]]
    %v2386 = vstv %s2385
    %v2387 = vmul.f32 %v2386, %v716
    %v2388 = vmul.f32 %v2386, %v717
    %v2389 = vmul.f32 %v2386, %v718
    %2393 = vrot.lane.b32.xlu0 %v2387, 96
    %v2394 = vpop.permute.xlu0 %2393
    %2395 = vrot.lane.b32.xlu0 %v2388, 96
    %v2396 = vpop.permute.xlu0 %2395
    %2397 = vrot.lane.b32.xlu0 %v2389, 96
    %v2398 = vpop.permute.xlu0 %2397
    %v2399 = vsel %vm641, %v2394, %v2396
    %v2400 = vsel %vm641, %v2396, %v2398
    %v2404 = vadd.f32 %v2316, %v2394
    %v2405 = vadd.f32 %v2317, %v2399
    %v2406 = vadd.f32 %v2318, %v2400
    %s2407 = sld [smem:[#allocation10 + $0x59]]
    %v2408 = vstv %s2407
    %v2409 = vmul.f32 %v2408, %v716
    %v2410 = vmul.f32 %v2408, %v717
    %v2411 = vmul.f32 %v2408, %v718
    %2415 = vrot.lane.b32.xlu0 %v2409, 96
    %v2416 = vpop.permute.xlu0 %2415
    %2417 = vrot.lane.b32.xlu0 %v2410, 96
    %v2418 = vpop.permute.xlu0 %2417
    %2419 = vrot.lane.b32.xlu0 %v2411, 96
    %v2420 = vpop.permute.xlu0 %2419
    %v2421 = vsel %vm641, %v2416, %v2418
    %v2422 = vsel %vm641, %v2418, %v2420
    %v2426 = vadd.f32 %v2338, %v2416
    %v2427 = vadd.f32 %v2339, %v2421
    %v2428 = vadd.f32 %v2340, %v2422
    %s2429 = sld [smem:[#allocation10 + $0x7d]]
    %v2430 = vstv %s2429
    %v2431 = vmul.f32 %v2430, %v716
    %v2432 = vmul.f32 %v2430, %v717
    %v2433 = vmul.f32 %v2430, %v718
    %2437 = vrot.lane.b32.xlu0 %v2431, 96
    %v2438 = vpop.permute.xlu0 %2437
    %2439 = vrot.lane.b32.xlu0 %v2432, 96
    %v2440 = vpop.permute.xlu0 %2439
    %2441 = vrot.lane.b32.xlu0 %v2433, 96
    %v2442 = vpop.permute.xlu0 %2441
    %v2443 = vsel %vm641, %v2438, %v2440
    %v2444 = vsel %vm641, %v2440, %v2442
    %v2448 = vadd.f32 %v2360, %v2438
    %v2449 = vadd.f32 %v2361, %v2443
    %v2450 = vadd.f32 %v2362, %v2444
    %s2451 = sld [smem:[#allocation10 + $0x1a]]
    %v2452 = vstv %s2451
    %v2453 = vmul.f32 %v2452, %v807
    %v2454 = vmul.f32 %v2452, %v808
    %v2455 = vmul.f32 %v2452, %v809
    %2459 = vrot.lane.b32.xlu0 %v2453, 96
    %v2460 = vpop.permute.xlu0 %2459
    %2461 = vrot.lane.b32.xlu0 %v2454, 96
    %v2462 = vpop.permute.xlu0 %2461
    %2463 = vrot.lane.b32.xlu0 %v2455, 96
    %v2464 = vpop.permute.xlu0 %2463
    %v2465 = vsel %vm641, %v2460, %v2462
    %v2466 = vsel %vm641, %v2462, %v2464
    %v2470 = vadd.f32 %v2382, %v2460
    %v2471 = vadd.f32 %v2383, %v2465
    %v2472 = vadd.f32 %v2384, %v2466
    %s2473 = sld [smem:[#allocation10 + $0x3e]]
    %v2474 = vstv %s2473
    %v2475 = vmul.f32 %v2474, %v807
    %v2476 = vmul.f32 %v2474, %v808
    %v2477 = vmul.f32 %v2474, %v809
    %2481 = vrot.lane.b32.xlu0 %v2475, 96
    %v2482 = vpop.permute.xlu0 %2481
    %2483 = vrot.lane.b32.xlu0 %v2476, 96
    %v2484 = vpop.permute.xlu0 %2483
    %2485 = vrot.lane.b32.xlu0 %v2477, 96
    %v2486 = vpop.permute.xlu0 %2485
    %v2487 = vsel %vm641, %v2482, %v2484
    %v2488 = vsel %vm641, %v2484, %v2486
    %v2492 = vadd.f32 %v2404, %v2482
    %v2493 = vadd.f32 %v2405, %v2487
    %v2494 = vadd.f32 %v2406, %v2488
    %s2495 = sld [smem:[#allocation10 + $0x62]]
    %v2496 = vstv %s2495
    %v2497 = vmul.f32 %v2496, %v807
    %v2498 = vmul.f32 %v2496, %v808
    %v2499 = vmul.f32 %v2496, %v809
    %2503 = vrot.lane.b32.xlu0 %v2497, 96
    %v2504 = vpop.permute.xlu0 %2503
    %2505 = vrot.lane.b32.xlu0 %v2498, 96
    %v2506 = vpop.permute.xlu0 %2505
    %2507 = vrot.lane.b32.xlu0 %v2499, 96
    %v2508 = vpop.permute.xlu0 %2507
    %v2509 = vsel %vm641, %v2504, %v2506
    %v2510 = vsel %vm641, %v2506, %v2508
    %v2514 = vadd.f32 %v2426, %v2504
    %v2515 = vadd.f32 %v2427, %v2509
    %v2516 = vadd.f32 %v2428, %v2510
    %s2517 = sld [smem:[#allocation10 + $0x86]]
    %v2518 = vstv %s2517
    %v2519 = vmul.f32 %v2518, %v807
    %v2520 = vmul.f32 %v2518, %v808
    %v2521 = vmul.f32 %v2518, %v809
    %2525 = vrot.lane.b32.xlu0 %v2519, 96
    %v2526 = vpop.permute.xlu0 %2525
    %2527 = vrot.lane.b32.xlu0 %v2520, 96
    %v2528 = vpop.permute.xlu0 %2527
    %2529 = vrot.lane.b32.xlu0 %v2521, 96
    %v2530 = vpop.permute.xlu0 %2529
    %v2531 = vsel %vm641, %v2526, %v2528
    %v2532 = vsel %vm641, %v2528, %v2530
    %v2536 = vadd.f32 %v2448, %v2526
    %v2537 = vadd.f32 %v2449, %v2531
    %v2538 = vadd.f32 %v2450, %v2532
    %s2539 = sld [smem:[#allocation10 + $0x23]]
    %v2540 = vstv %s2539
    %v2541 = vmul.f32 %v2540, %v898
    %v2542 = vmul.f32 %v2540, %v899
    %v2543 = vmul.f32 %v2540, %v900
    %2547 = vrot.lane.b32.xlu0 %v2541, 96
    %v2548 = vpop.permute.xlu0 %2547
    %2549 = vrot.lane.b32.xlu0 %v2542, 96
    %v2550 = vpop.permute.xlu0 %2549
    %2551 = vrot.lane.b32.xlu0 %v2543, 96
    %v2552 = vpop.permute.xlu0 %2551
    %v2553 = vsel %vm641, %v2548, %v2550
    %v2554 = vsel %vm641, %v2550, %v2552
    %v2558 = vadd.f32 %v2470, %v2548
    %v2559 = vadd.f32 %v2471, %v2553
    %v2560 = vadd.f32 %v2472, %v2554
    %s2561 = sld [smem:[#allocation10 + $0x47]]
    %v2562 = vstv %s2561
    %v2563 = vmul.f32 %v2562, %v898
    %v2564 = vmul.f32 %v2562, %v899
    %v2565 = vmul.f32 %v2562, %v900
    %2569 = vrot.lane.b32.xlu0 %v2563, 96
    %v2570 = vpop.permute.xlu0 %2569
    %2571 = vrot.lane.b32.xlu0 %v2564, 96
    %v2572 = vpop.permute.xlu0 %2571
    %2573 = vrot.lane.b32.xlu0 %v2565, 96
    %v2574 = vpop.permute.xlu0 %2573
    %v2575 = vsel %vm641, %v2570, %v2572
    %v2576 = vsel %vm641, %v2572, %v2574
    %v2580 = vadd.f32 %v2492, %v2570
    %v2581 = vadd.f32 %v2493, %v2575
    %v2582 = vadd.f32 %v2494, %v2576
    %s2583 = sld [smem:[#allocation10 + $0x6b]]
    %v2584 = vstv %s2583
    %v2585 = vmul.f32 %v2584, %v898
    %v2586 = vmul.f32 %v2584, %v899
    %v2587 = vmul.f32 %v2584, %v900
    %2591 = vrot.lane.b32.xlu0 %v2585, 96
    %v2592 = vpop.permute.xlu0 %2591
    %2593 = vrot.lane.b32.xlu0 %v2586, 96
    %v2594 = vpop.permute.xlu0 %2593
    %2595 = vrot.lane.b32.xlu0 %v2587, 96
    %v2596 = vpop.permute.xlu0 %2595
    %v2597 = vsel %vm641, %v2592, %v2594
    %v2598 = vsel %vm641, %v2594, %v2596
    %v2602 = vadd.f32 %v2514, %v2592
    %v2603 = vadd.f32 %v2515, %v2597
    %v2604 = vadd.f32 %v2516, %v2598
    %s2605 = sld [smem:[#allocation10 + $0x8f]]
    %v2606 = vstv %s2605
    %v2607 = vmul.f32 %v2606, %v898
    %v2608 = vmul.f32 %v2606, %v899
    %v2609 = vmul.f32 %v2606, %v900
    %2613 = vrot.lane.b32.xlu0 %v2607, 96
    %v2614 = vpop.permute.xlu0 %2613
    %2615 = vrot.lane.b32.xlu0 %v2608, 96
    %v2616 = vpop.permute.xlu0 %2615
    %2617 = vrot.lane.b32.xlu0 %v2609, 96
    %v2618 = vpop.permute.xlu0 %2617
    %v2619 = vsel %vm641, %v2614, %v2616
    %v2620 = vsel %vm641, %v2616, %v2618
    %v2624 = vadd.f32 %v2536, %v2614
    %v2625 = vadd.f32 %v2537, %v2619
    %v2626 = vadd.f32 %v2538, %v2620
    %2630 = vrot.lane.b32.xlu0 %v2558, 15
    %v2631 = vpop.permute.xlu0 %2630
    %2632 = vrot.lane.b32.xlu0 %v2559, 15
    %v2633 = vpop.permute.xlu0 %2632
    %2634 = vrot.lane.b32.xlu0 %v2560, 15
    %v2635 = vpop.permute.xlu0 %2634
    %vm2636 = vcmask 121856
    %v2637 = vsel %vm2636, %v2631, %v2633
    %v2638 = vsel %vm2636, %v2633, %v2635
    %v2641 = vmul.f32 %v124, %v2637
    %v2642 = vmul.f32 %v125, %v2638
    %v2643 = vadd.f32 %v1733, %v2641
    %v2644 = vadd.f32 %v1734, %v2642
    %2648 = vrot.lane.b32.xlu0 %v2580, 15
    %v2649 = vpop.permute.xlu0 %2648
    %2650 = vrot.lane.b32.xlu0 %v2581, 15
    %v2651 = vpop.permute.xlu0 %2650
    %2652 = vrot.lane.b32.xlu0 %v2582, 15
    %v2653 = vpop.permute.xlu0 %2652
    %v2654 = vsel %vm2636, %v2649, %v2651
    %v2655 = vsel %vm2636, %v2651, %v2653
    %v2658 = vmul.f32 %v124, %v2654
    %v2659 = vmul.f32 %v125, %v2655
    %v2660 = vadd.f32 %v1753, %v2658
    %v2661 = vadd.f32 %v1754, %v2659
    %2665 = vrot.lane.b32.xlu0 %v2602, 15
    %v2666 = vpop.permute.xlu0 %2665
    %2667 = vrot.lane.b32.xlu0 %v2603, 15
    %v2668 = vpop.permute.xlu0 %2667
    %2669 = vrot.lane.b32.xlu0 %v2604, 15
    %v2670 = vpop.permute.xlu0 %2669
    %v2671 = vsel %vm2636, %v2666, %v2668
    %v2672 = vsel %vm2636, %v2668, %v2670
    %v2675 = vmul.f32 %v124, %v2671
    %v2676 = vmul.f32 %v125, %v2672
    %v2677 = vadd.f32 %v1773, %v2675
    %v2678 = vadd.f32 %v1774, %v2676
    %2682 = vrot.lane.b32.xlu0 %v2624, 15
    %v2683 = vpop.permute.xlu0 %2682
    %2684 = vrot.lane.b32.xlu0 %v2625, 15
    %v2685 = vpop.permute.xlu0 %2684
    %2686 = vrot.lane.b32.xlu0 %v2626, 15
    %v2687 = vpop.permute.xlu0 %2686
    %v2688 = vsel %vm2636, %v2683, %v2685
    %v2689 = vsel %vm2636, %v2685, %v2687
    %v2692 = vmul.f32 %v124, %v2688
    %v2693 = vmul.f32 %v125, %v2689
    %v2694 = vadd.f32 %v1793, %v2692
    %v2695 = vadd.f32 %v1794, %v2693
    %s2696 = sld [smem:[#allocation3]]
    %v2697 = vstv %s2696
    %v2698 = vadd.f32 %v2697, 0.0
    %s2699 = sld [smem:[#allocation11]]
    %v2700 = vstv %s2699
    %v2701 = vadd.f32 %v2643, %v2700
    %v2702 = vadd.f32 %v2644, %v2700
    %v2703 = vmax.f32 %v2701, 0.0
    %v2704 = vmax.f32 %v2702, 0.0
    %s2705 = sld [smem:[#allocation13]]
    %v2706 = vstv %s2705
    %v2707 = vmul.f32 %v2706, %v2703
    %v2708 = vmul.f32 %v2706, %v2704
    %v2709 = vadd.f32 %v2698, %v2707
    %v2710 = vadd.f32 %v2698, %v2708
    %s2711 = sld [smem:[#allocation11 + $0x1]]
    %v2712 = vstv %s2711
    %v2713 = vadd.f32 %v2660, %v2712
    %v2714 = vadd.f32 %v2661, %v2712
    %v2715 = vmax.f32 %v2713, 0.0
    %v2716 = vmax.f32 %v2714, 0.0
    %s2717 = sld [smem:[#allocation13 + $0x1]]
    %v2718 = vstv %s2717
    %v2719 = vmul.f32 %v2718, %v2715
    %v2720 = vmul.f32 %v2718, %v2716
    %v2721 = vadd.f32 %v2709, %v2719
    %v2722 = vadd.f32 %v2710, %v2720
    %s2723 = sld [smem:[#allocation11 + $0x2]]
    %v2724 = vstv %s2723
    %v2725 = vadd.f32 %v2677, %v2724
    %v2726 = vadd.f32 %v2678, %v2724
    %v2727 = vmax.f32 %v2725, 0.0
    %v2728 = vmax.f32 %v2726, 0.0
    %s2729 = sld [smem:[#allocation13 + $0x2]]
    %v2730 = vstv %s2729
    %v2731 = vmul.f32 %v2730, %v2727
    %v2732 = vmul.f32 %v2730, %v2728
    %v2733 = vadd.f32 %v2721, %v2731
    %v2734 = vadd.f32 %v2722, %v2732
    %s2735 = sld [smem:[#allocation11 + $0x3]]
    %v2736 = vstv %s2735
    %v2737 = vadd.f32 %v2694, %v2736
    %v2738 = vadd.f32 %v2695, %v2736
    %v2739 = vmax.f32 %v2737, 0.0
    %v2740 = vmax.f32 %v2738, 0.0
    %s2741 = sld [smem:[#allocation13 + $0x3]]
    %v2742 = vstv %s2741
    %v2743 = vmul.f32 %v2742, %v2739
    %v2744 = vmul.f32 %v2742, %v2740
    %v2745 = vadd.f32 %v2733, %v2743
    %v2746 = vadd.f32 %v2734, %v2744
    %2747 = vst [vmem:[#allocation14] sm:$0xff] %v2745
    %2748 = vst [vmem:[#allocation14 + $0x8] sm:$0xff] %v2746
    // Predicated region
    $region46: #{tpu_custom_call.1} parent=1 // pred_check
      _
    $region47: #{tpu_custom_call.1} parent=1 // pred_check_branch
      %2750 = sbr.rel (0) target = $region49
    $region48: #{tpu_custom_call.1} parent=1 // pred_region
      %2752 = vsyncadd [#allocation6], 0
      %s2754 = sshll.u32 [#allocation14], 4
      %s2755 = int_to_ptr.vmem [resolvable:$true] %s2754
      %s2756 = sshll.u32 %s6, 4
      %s2757 = int_to_ptr.hbm [resolvable:$true] %s2756
      %2759 = dma.vmem_to_hbm [thread:$0]  %s2755, 256, %s2757, [#allocation6]
    $region49: #{tpu_custom_call.1} parent=1 // pred_fallthru
      _
    // Predicated region
    $region50: #{tpu_custom_call.1} parent=1 // pred_check
      _
    $region51: #{tpu_custom_call.1} parent=1 // pred_check_branch
      %2761 = sbr.rel (0) target = $region53
    $region52: #{tpu_custom_call.1} parent=1 // pred_region
      %2763 = dma.done [#allocation6], 256
    $region53: #{tpu_custom_call.1} parent=1 // pred_fallthru
      _
    %2764 = vsyncpa [#allocation5], 1
    %2765 = vsyncpa [#allocation9], 1
    %2766 = vsyncpa [#allocation6], 1
    %2767 = vsyncpa [#allocation7], 1
    %2768 = vsyncpa [#allocation12], 1

</llo_original>
